<compile_context>
chip_gen: v5e
topology: v5e:2x2
jax: 0.10.0
libtpu: 0.0.40
codegen_flags: <defaults>
</compile_context>

<pallas_src>
import functools

import jax
import jax.numpy as jnp
import numpy as np
from jax.experimental import pallas as pl
from jax.experimental.pallas import tpu as pltpu


def _round_up(x, m):
    return ((x + m - 1) // m) * m


def _freq_bands(multires, log_sampling):
    max_freq_log2 = multires - 1
    if log_sampling:
        bands = 2.0 ** np.linspace(0.0, max_freq_log2, num=multires)
    else:
        bands = np.linspace(2.0 ** 0.0, 2.0 ** max_freq_log2, num=multires)
    return tuple(float(f) for f in bands)


def _embedder_kernel(x_ref, o_ref, *, freqs, include_input, use_recurrence,
                     anchor_every):
    # x_ref: (TR, C) tile; o_ref: (P, TR, C) tile, P = include_input + 2*len(freqs).
    # All math in f32 regardless of I/O dtype (precision at high octaves).
    x = x_ref[...].astype(jnp.float32)
    odt = o_ref.dtype

    part = 0
    if include_input:
        o_ref[part] = x.astype(odt)
        part += 1

    if use_recurrence:
        # freqs are exactly [1, 2, 4, ...]: doubling a float angle is exact,
        # so sin/cos of octave k+1 follow from octave k via the double-angle
        # identities; only sin/cos rounding drifts -> re-anchor with a direct
        # sin/cos every `anchor_every` octaves.
        s = c = None
        for k, f in enumerate(freqs):
            if k % anchor_every == 0:
                a = x if f == 1.0 else x * jnp.float32(f)
                s = jnp.sin(a)
                c = jnp.cos(a)
            else:
                s, c = 2.0 * s * c, 1.0 - 2.0 * s * s
            o_ref[part] = s.astype(odt)
            o_ref[part + 1] = c.astype(odt)
            part += 2
    else:
        for f in freqs:
            a = x * jnp.float32(f)
            o_ref[part] = jnp.sin(a).astype(odt)
            o_ref[part + 1] = jnp.cos(a).astype(odt)
            part += 2


def make_embedder(input_dims, include_input, multires, log_sampling, *,
                  lane_width=512, max_block_rows=256, anchor_every=4,
                  vmem_block_budget=22 * 1024 * 1024,
                  vmem_limit_bytes=32 * 1024 * 1024):
    """Returns (embed_fn, out_dim); embed_fn maps (..., input_dims) -> (..., out_dim)."""
    assert multires >= 1
    assert lane_width % 128 == 0 and max_block_rows % 8 == 0
    freqs = _freq_bands(multires, log_sampling)
    num_parts = (1 if include_input else 0) + 2 * len(freqs)
    out_dim = num_parts * input_dims

    # The double-angle path only applies to exact power-of-two octaves.
    use_recurrence = bool(log_sampling)

    kernel = functools.partial(
        _embedder_kernel,
        freqs=freqs,
        include_input=include_input,
        use_recurrence=use_recurrence,
        anchor_every=max(int(anchor_every), 1),
    )

    def embed(x):
        assert x.ndim >= 1 and x.shape[-1] == input_dims, x.shape
        lead_shape = x.shape[:-1]
        n = int(np.prod(lead_shape)) if lead_shape else 1
        total = n * input_dims
        itemsize = jnp.dtype(x.dtype).itemsize

        # Lane-dense 2-D view of the flattened input, padded so the grid
        # tiles it exactly (no divisibility constraint on N).
        c = lane_width
        rows_needed = pl.cdiv(total, c)

        # Largest tile_rows (multiple of 8) whose double-buffered in+out
        # blocks stay under the VMEM budget.
        per_row_bytes = 2 * (num_parts + 1) * c * itemsize
        budget_rows = max((vmem_block_budget // per_row_bytes) // 8 * 8, 8)
        tile_rows = min(max_block_rows, budget_rows, _round_up(rows_needed, 8))
        rows = _round_up(rows_needed, tile_rows)
        padded = rows * c

        flat = x.reshape(total)
        if padded != total:
            flat = jnp.pad(flat, (0, padded - total))
        x2d = flat.reshape(rows, c)

        grid = (rows // tile_rows,)

        out3d = pl.pallas_call(
            kernel,
            out_shape=jax.ShapeDtypeStruct((num_parts, rows, c), x.dtype),
            grid_spec=pltpu.PrefetchScalarGridSpec(
                num_scalar_prefetch=0,
                grid=grid,
                in_specs=[pl.BlockSpec((tile_rows, c), lambda i: (i, 0))],
                out_specs=pl.BlockSpec((num_parts, tile_rows, c),
                                       lambda i: (0, i, 0)),
            ),
            compiler_params=pltpu.CompilerParams(
                dimension_semantics=("parallel",),
                vmem_limit_bytes=vmem_limit_bytes,
            ),
        )(x2d)

        # (P, rows*C) -> drop padding -> (P, N, D) -> PyTorch (N, P*D) order.
        # This transpose is wrapper-side layout plumbing; the kernel output
        # itself is fully lane-dense.
        out = out3d.reshape(num_parts, padded)[:, :total]
        out = out.reshape(num_parts, n, input_dims)
        out = jnp.transpose(out, (1, 0, 2)).reshape(*lead_shape, out_dim)
        return out

    return embed, out_dim


def _reference_embed(x, include_input, multires, log_sampling):
    parts = []
    if include_input:
        parts.append(x)
    for f in _freq_bands(multires, log_sampling):
        parts.append(jnp.sin(x * jnp.float32(f)))
        parts.append(jnp.cos(x * jnp.float32(f)))
    return jnp.concatenate(parts, axis=-1)


if __name__ == "__main__":
    key = jax.random.PRNGKey(0)

    # Config A: canonical NeRF coordinate encoding (D=3, multires=10,
    # log-sampled -> anchored double-angle recurrence path). Coordinates
    # normalized to [-1, 1] as in NeRF.
    a_dims, a_multires = 3, 10
    xa = jax.random.uniform(key, (256, a_dims), dtype=jnp.float32,
                            minval=-1.0, maxval=1.0)
    embed_a, out_dim_a = make_embedder(a_dims, True, a_multires, True)
    out_a = embed_a(xa)
    jax.block_until_ready(out_a)
    ref_a = _reference_embed(xa, True, a_multires, True)
    assert out_a.shape == (256, out_dim_a) and out_dim_a == 63, out_a.shape
    # Generous tolerance: at the top octave the f32 reference itself carries
    # O(|512*x|*eps) argument-rounding uncertainty; the anchored recurrence
    # stays within a few of those.
    np.testing.assert_allclose(np.asarray(out_a), np.asarray(ref_a),
                               rtol=5e-3, atol=5e-3)

    # Config B: direct sin/cos path (linear sampling), no include_input,
    # ragged N=77 (exercises the padding path).
    b_dims, b_multires = 2, 4
    xb = jax.random.normal(jax.random.fold_in(key, 1), (77, b_dims),
                           dtype=jnp.float32)
    embed_b, out_dim_b = make_embedder(b_dims, False, b_multires, False)
    out_b = embed_b(xb)
    jax.block_until_ready(out_b)
    ref_b = _reference_embed(xb, False, b_multires, False)
    assert out_b.shape == (77, out_dim_b) and out_dim_b == 16, out_b.shape
    np.testing.assert_allclose(np.asarray(out_b), np.asarray(ref_b),
                               rtol=1e-5, atol=1e-5)

    print("KERNEL_OK")
</pallas_src>

<mosaic_0001>
module attributes {stable_mosaic.version = 11 : i64} {
  func.func @_embedder_kernel(%arg0: i32, %arg1: memref<8x512xf32, #tpu.memory_space<vmem>>, %arg2: memref<21x8x512xf32, #tpu.memory_space<vmem>>) attributes {dimension_semantics = [#tpu.dimension_semantics<parallel>], iteration_bounds = array<i64: 1>, scalar_prefetch = 0 : i64, scratch_operands = 0 : i64, tpu.core_type = #tpu.core_type<tc>, window_params = [{transform_indices = @transform_0, window_bounds = array<i64: 8, 512>}, {transform_indices = @transform_1, window_bounds = array<i64: 21, 8, 512>}]} {
    %c0 = arith.constant 0 : index
    %c0_0 = arith.constant 0 : index
    %0 = vector.load %arg1[%c0, %c0_0] : memref<8x512xf32, #tpu.memory_space<vmem>>, vector<8x512xf32>
    %c0_1 = arith.constant 0 : index
    %c0_2 = arith.constant 0 : index
    %c0_3 = arith.constant 0 : index
    %1 = vector.load %arg2[%c0_1, %c0_2, %c0_3] : memref<21x8x512xf32, #tpu.memory_space<vmem>>, vector<1x8x512xf32>
    %2 = vector.shape_cast %1 : vector<1x8x512xf32> to vector<8x512xf32>
    %3 = vector.shape_cast %0 : vector<8x512xf32> to vector<1x8x512xf32>
    tpu.vector_store %arg2[%c0_1, %c0_2, %c0_3], %3 {strides = array<i32>} : memref<21x8x512xf32, #tpu.memory_space<vmem>>, vector<1x8x512xf32>,
    %4 = math.sin %0 : vector<8x512xf32>
    %5 = math.cos %0 : vector<8x512xf32>
    %c1 = arith.constant 1 : index
    %c0_4 = arith.constant 0 : index
    %c0_5 = arith.constant 0 : index
    %6 = vector.load %arg2[%c1, %c0_4, %c0_5] : memref<21x8x512xf32, #tpu.memory_space<vmem>>, vector<1x8x512xf32>
    %7 = vector.shape_cast %6 : vector<1x8x512xf32> to vector<8x512xf32>
    %8 = vector.shape_cast %4 : vector<8x512xf32> to vector<1x8x512xf32>
    tpu.vector_store %arg2[%c1, %c0_4, %c0_5], %8 {strides = array<i32>} : memref<21x8x512xf32, #tpu.memory_space<vmem>>, vector<1x8x512xf32>,
    %c2 = arith.constant 2 : index
    %c0_6 = arith.constant 0 : index
    %c0_7 = arith.constant 0 : index
    %9 = vector.load %arg2[%c2, %c0_6, %c0_7] : memref<21x8x512xf32, #tpu.memory_space<vmem>>, vector<1x8x512xf32>
    %10 = vector.shape_cast %9 : vector<1x8x512xf32> to vector<8x512xf32>
    %11 = vector.shape_cast %5 : vector<8x512xf32> to vector<1x8x512xf32>
    tpu.vector_store %arg2[%c2, %c0_6, %c0_7], %11 {strides = array<i32>} : memref<21x8x512xf32, #tpu.memory_space<vmem>>, vector<1x8x512xf32>,
    %cst = arith.constant 2.000000e+00 : f32
    %12 = vector.broadcast %cst : f32 to vector<8x512xf32>
    %13 = arith.mulf %12, %4 : vector<8x512xf32>
    %14 = arith.mulf %13, %5 : vector<8x512xf32>
    %cst_8 = arith.constant 2.000000e+00 : f32
    %15 = vector.broadcast %cst_8 : f32 to vector<8x512xf32>
    %16 = arith.mulf %15, %4 : vector<8x512xf32>
    %17 = arith.mulf %16, %4 : vector<8x512xf32>
    %cst_9 = arith.constant 1.000000e+00 : f32
    %18 = vector.broadcast %cst_9 : f32 to vector<8x512xf32>
    %19 = arith.subf %18, %17 : vector<8x512xf32>
    %c3 = arith.constant 3 : index
    %c0_10 = arith.constant 0 : index
    %c0_11 = arith.constant 0 : index
    %20 = vector.load %arg2[%c3, %c0_10, %c0_11] : memref<21x8x512xf32, #tpu.memory_space<vmem>>, vector<1x8x512xf32>
    %21 = vector.shape_cast %20 : vector<1x8x512xf32> to vector<8x512xf32>
    %22 = vector.shape_cast %14 : vector<8x512xf32> to vector<1x8x512xf32>
    tpu.vector_store %arg2[%c3, %c0_10, %c0_11], %22 {strides = array<i32>} : memref<21x8x512xf32, #tpu.memory_space<vmem>>, vector<1x8x512xf32>,
    %c4 = arith.constant 4 : index
    %c0_12 = arith.constant 0 : index
    %c0_13 = arith.constant 0 : index
    %23 = vector.load %arg2[%c4, %c0_12, %c0_13] : memref<21x8x512xf32, #tpu.memory_space<vmem>>, vector<1x8x512xf32>
    %24 = vector.shape_cast %23 : vector<1x8x512xf32> to vector<8x512xf32>
    %25 = vector.shape_cast %19 : vector<8x512xf32> to vector<1x8x512xf32>
    tpu.vector_store %arg2[%c4, %c0_12, %c0_13], %25 {strides = array<i32>} : memref<21x8x512xf32, #tpu.memory_space<vmem>>, vector<1x8x512xf32>,
    %cst_14 = arith.constant 2.000000e+00 : f32
    %26 = vector.broadcast %cst_14 : f32 to vector<8x512xf32>
    %27 = arith.mulf %26, %14 : vector<8x512xf32>
    %28 = arith.mulf %27, %19 : vector<8x512xf32>
    %cst_15 = arith.constant 2.000000e+00 : f32
    %29 = vector.broadcast %cst_15 : f32 to vector<8x512xf32>
    %30 = arith.mulf %29, %14 : vector<8x512xf32>
    %31 = arith.mulf %30, %14 : vector<8x512xf32>
    %cst_16 = arith.constant 1.000000e+00 : f32
    %32 = vector.broadcast %cst_16 : f32 to vector<8x512xf32>
    %33 = arith.subf %32, %31 : vector<8x512xf32>
    %c5 = arith.constant 5 : index
    %c0_17 = arith.constant 0 : index
    %c0_18 = arith.constant 0 : index
    %34 = vector.load %arg2[%c5, %c0_17, %c0_18] : memref<21x8x512xf32, #tpu.memory_space<vmem>>, vector<1x8x512xf32>
    %35 = vector.shape_cast %34 : vector<1x8x512xf32> to vector<8x512xf32>
    %36 = vector.shape_cast %28 : vector<8x512xf32> to vector<1x8x512xf32>
    tpu.vector_store %arg2[%c5, %c0_17, %c0_18], %36 {strides = array<i32>} : memref<21x8x512xf32, #tpu.memory_space<vmem>>, vector<1x8x512xf32>,
    %c6 = arith.constant 6 : index
    %c0_19 = arith.constant 0 : index
    %c0_20 = arith.constant 0 : index
    %37 = vector.load %arg2[%c6, %c0_19, %c0_20] : memref<21x8x512xf32, #tpu.memory_space<vmem>>, vector<1x8x512xf32>
    %38 = vector.shape_cast %37 : vector<1x8x512xf32> to vector<8x512xf32>
    %39 = vector.shape_cast %33 : vector<8x512xf32> to vector<1x8x512xf32>
    tpu.vector_store %arg2[%c6, %c0_19, %c0_20], %39 {strides = array<i32>} : memref<21x8x512xf32, #tpu.memory_space<vmem>>, vector<1x8x512xf32>,
    %cst_21 = arith.constant 2.000000e+00 : f32
    %40 = vector.broadcast %cst_21 : f32 to vector<8x512xf32>
    %41 = arith.mulf %40, %28 : vector<8x512xf32>
    %42 = arith.mulf %41, %33 : vector<8x512xf32>
    %cst_22 = arith.constant 2.000000e+00 : f32
    %43 = vector.broadcast %cst_22 : f32 to vector<8x512xf32>
    %44 = arith.mulf %43, %28 : vector<8x512xf32>
    %45 = arith.mulf %44, %28 : vector<8x512xf32>
    %cst_23 = arith.constant 1.000000e+00 : f32
    %46 = vector.broadcast %cst_23 : f32 to vector<8x512xf32>
    %47 = arith.subf %46, %45 : vector<8x512xf32>
    %c7 = arith.constant 7 : index
    %c0_24 = arith.constant 0 : index
    %c0_25 = arith.constant 0 : index
    %48 = vector.load %arg2[%c7, %c0_24, %c0_25] : memref<21x8x512xf32, #tpu.memory_space<vmem>>, vector<1x8x512xf32>
    %49 = vector.shape_cast %48 : vector<1x8x512xf32> to vector<8x512xf32>
    %50 = vector.shape_cast %42 : vector<8x512xf32> to vector<1x8x512xf32>
    tpu.vector_store %arg2[%c7, %c0_24, %c0_25], %50 {strides = array<i32>} : memref<21x8x512xf32, #tpu.memory_space<vmem>>, vector<1x8x512xf32>,
    %c8 = arith.constant 8 : index
    %c0_26 = arith.constant 0 : index
    %c0_27 = arith.constant 0 : index
    %51 = vector.load %arg2[%c8, %c0_26, %c0_27] : memref<21x8x512xf32, #tpu.memory_space<vmem>>, vector<1x8x512xf32>
    %52 = vector.shape_cast %51 : vector<1x8x512xf32> to vector<8x512xf32>
    %53 = vector.shape_cast %47 : vector<8x512xf32> to vector<1x8x512xf32>
    tpu.vector_store %arg2[%c8, %c0_26, %c0_27], %53 {strides = array<i32>} : memref<21x8x512xf32, #tpu.memory_space<vmem>>, vector<1x8x512xf32>,
    %cst_28 = arith.constant 1.600000e+01 : f32
    %54 = vector.broadcast %cst_28 : f32 to vector<8x512xf32>
    %55 = arith.mulf %0, %54 : vector<8x512xf32>
    %56 = math.sin %55 : vector<8x512xf32>
    %57 = math.cos %55 : vector<8x512xf32>
    %c9 = arith.constant 9 : index
    %c0_29 = arith.constant 0 : index
    %c0_30 = arith.constant 0 : index
    %58 = vector.load %arg2[%c9, %c0_29, %c0_30] : memref<21x8x512xf32, #tpu.memory_space<vmem>>, vector<1x8x512xf32>
    %59 = vector.shape_cast %58 : vector<1x8x512xf32> to vector<8x512xf32>
    %60 = vector.shape_cast %56 : vector<8x512xf32> to vector<1x8x512xf32>
    tpu.vector_store %arg2[%c9, %c0_29, %c0_30], %60 {strides = array<i32>} : memref<21x8x512xf32, #tpu.memory_space<vmem>>, vector<1x8x512xf32>,
    %c10 = arith.constant 10 : index
    %c0_31 = arith.constant 0 : index
    %c0_32 = arith.constant 0 : index
    %61 = vector.load %arg2[%c10, %c0_31, %c0_32] : memref<21x8x512xf32, #tpu.memory_space<vmem>>, vector<1x8x512xf32>
    %62 = vector.shape_cast %61 : vector<1x8x512xf32> to vector<8x512xf32>
    %63 = vector.shape_cast %57 : vector<8x512xf32> to vector<1x8x512xf32>
    tpu.vector_store %arg2[%c10, %c0_31, %c0_32], %63 {strides = array<i32>} : memref<21x8x512xf32, #tpu.memory_space<vmem>>, vector<1x8x512xf32>,
    %cst_33 = arith.constant 2.000000e+00 : f32
    %64 = vector.broadcast %cst_33 : f32 to vector<8x512xf32>
    %65 = arith.mulf %64, %56 : vector<8x512xf32>
    %66 = arith.mulf %65, %57 : vector<8x512xf32>
    %cst_34 = arith.constant 2.000000e+00 : f32
    %67 = vector.broadcast %cst_34 : f32 to vector<8x512xf32>
    %68 = arith.mulf %67, %56 : vector<8x512xf32>
    %69 = arith.mulf %68, %56 : vector<8x512xf32>
    %cst_35 = arith.constant 1.000000e+00 : f32
    %70 = vector.broadcast %cst_35 : f32 to vector<8x512xf32>
    %71 = arith.subf %70, %69 : vector<8x512xf32>
    %c11 = arith.constant 11 : index
    %c0_36 = arith.constant 0 : index
    %c0_37 = arith.constant 0 : index
    %72 = vector.load %arg2[%c11, %c0_36, %c0_37] : memref<21x8x512xf32, #tpu.memory_space<vmem>>, vector<1x8x512xf32>
    %73 = vector.shape_cast %72 : vector<1x8x512xf32> to vector<8x512xf32>
    %74 = vector.shape_cast %66 : vector<8x512xf32> to vector<1x8x512xf32>
    tpu.vector_store %arg2[%c11, %c0_36, %c0_37], %74 {strides = array<i32>} : memref<21x8x512xf32, #tpu.memory_space<vmem>>, vector<1x8x512xf32>,
    %c12 = arith.constant 12 : index
    %c0_38 = arith.constant 0 : index
    %c0_39 = arith.constant 0 : index
    %75 = vector.load %arg2[%c12, %c0_38, %c0_39] : memref<21x8x512xf32, #tpu.memory_space<vmem>>, vector<1x8x512xf32>
    %76 = vector.shape_cast %75 : vector<1x8x512xf32> to vector<8x512xf32>
    %77 = vector.shape_cast %71 : vector<8x512xf32> to vector<1x8x512xf32>
    tpu.vector_store %arg2[%c12, %c0_38, %c0_39], %77 {strides = array<i32>} : memref<21x8x512xf32, #tpu.memory_space<vmem>>, vector<1x8x512xf32>,
    %cst_40 = arith.constant 2.000000e+00 : f32
    %78 = vector.broadcast %cst_40 : f32 to vector<8x512xf32>
    %79 = arith.mulf %78, %66 : vector<8x512xf32>
    %80 = arith.mulf %79, %71 : vector<8x512xf32>
    %cst_41 = arith.constant 2.000000e+00 : f32
    %81 = vector.broadcast %cst_41 : f32 to vector<8x512xf32>
    %82 = arith.mulf %81, %66 : vector<8x512xf32>
    %83 = arith.mulf %82, %66 : vector<8x512xf32>
    %cst_42 = arith.constant 1.000000e+00 : f32
    %84 = vector.broadcast %cst_42 : f32 to vector<8x512xf32>
    %85 = arith.subf %84, %83 : vector<8x512xf32>
    %c13 = arith.constant 13 : index
    %c0_43 = arith.constant 0 : index
    %c0_44 = arith.constant 0 : index
    %86 = vector.load %arg2[%c13, %c0_43, %c0_44] : memref<21x8x512xf32, #tpu.memory_space<vmem>>, vector<1x8x512xf32>
    %87 = vector.shape_cast %86 : vector<1x8x512xf32> to vector<8x512xf32>
    %88 = vector.shape_cast %80 : vector<8x512xf32> to vector<1x8x512xf32>
    tpu.vector_store %arg2[%c13, %c0_43, %c0_44], %88 {strides = array<i32>} : memref<21x8x512xf32, #tpu.memory_space<vmem>>, vector<1x8x512xf32>,
    %c14 = arith.constant 14 : index
    %c0_45 = arith.constant 0 : index
    %c0_46 = arith.constant 0 : index
    %89 = vector.load %arg2[%c14, %c0_45, %c0_46] : memref<21x8x512xf32, #tpu.memory_space<vmem>>, vector<1x8x512xf32>
    %90 = vector.shape_cast %89 : vector<1x8x512xf32> to vector<8x512xf32>
    %91 = vector.shape_cast %85 : vector<8x512xf32> to vector<1x8x512xf32>
    tpu.vector_store %arg2[%c14, %c0_45, %c0_46], %91 {strides = array<i32>} : memref<21x8x512xf32, #tpu.memory_space<vmem>>, vector<1x8x512xf32>,
    %cst_47 = arith.constant 2.000000e+00 : f32
    %92 = vector.broadcast %cst_47 : f32 to vector<8x512xf32>
    %93 = arith.mulf %92, %80 : vector<8x512xf32>
    %94 = arith.mulf %93, %85 : vector<8x512xf32>
    %cst_48 = arith.constant 2.000000e+00 : f32
    %95 = vector.broadcast %cst_48 : f32 to vector<8x512xf32>
    %96 = arith.mulf %95, %80 : vector<8x512xf32>
    %97 = arith.mulf %96, %80 : vector<8x512xf32>
    %cst_49 = arith.constant 1.000000e+00 : f32
    %98 = vector.broadcast %cst_49 : f32 to vector<8x512xf32>
    %99 = arith.subf %98, %97 : vector<8x512xf32>
    %c15 = arith.constant 15 : index
    %c0_50 = arith.constant 0 : index
    %c0_51 = arith.constant 0 : index
    %100 = vector.load %arg2[%c15, %c0_50, %c0_51] : memref<21x8x512xf32, #tpu.memory_space<vmem>>, vector<1x8x512xf32>
    %101 = vector.shape_cast %100 : vector<1x8x512xf32> to vector<8x512xf32>
    %102 = vector.shape_cast %94 : vector<8x512xf32> to vector<1x8x512xf32>
    tpu.vector_store %arg2[%c15, %c0_50, %c0_51], %102 {strides = array<i32>} : memref<21x8x512xf32, #tpu.memory_space<vmem>>, vector<1x8x512xf32>,
    %c16 = arith.constant 16 : index
    %c0_52 = arith.constant 0 : index
    %c0_53 = arith.constant 0 : index
    %103 = vector.load %arg2[%c16, %c0_52, %c0_53] : memref<21x8x512xf32, #tpu.memory_space<vmem>>, vector<1x8x512xf32>
    %104 = vector.shape_cast %103 : vector<1x8x512xf32> to vector<8x512xf32>
    %105 = vector.shape_cast %99 : vector<8x512xf32> to vector<1x8x512xf32>
    tpu.vector_store %arg2[%c16, %c0_52, %c0_53], %105 {strides = array<i32>} : memref<21x8x512xf32, #tpu.memory_space<vmem>>, vector<1x8x512xf32>,
    %cst_54 = arith.constant 2.560000e+02 : f32
    %106 = vector.broadcast %cst_54 : f32 to vector<8x512xf32>
    %107 = arith.mulf %0, %106 : vector<8x512xf32>
    %108 = math.sin %107 : vector<8x512xf32>
    %109 = math.cos %107 : vector<8x512xf32>
    %c17 = arith.constant 17 : index
    %c0_55 = arith.constant 0 : index
    %c0_56 = arith.constant 0 : index
    %110 = vector.load %arg2[%c17, %c0_55, %c0_56] : memref<21x8x512xf32, #tpu.memory_space<vmem>>, vector<1x8x512xf32>
    %111 = vector.shape_cast %110 : vector<1x8x512xf32> to vector<8x512xf32>
    %112 = vector.shape_cast %108 : vector<8x512xf32> to vector<1x8x512xf32>
    tpu.vector_store %arg2[%c17, %c0_55, %c0_56], %112 {strides = array<i32>} : memref<21x8x512xf32, #tpu.memory_space<vmem>>, vector<1x8x512xf32>,
    %c18 = arith.constant 18 : index
    %c0_57 = arith.constant 0 : index
    %c0_58 = arith.constant 0 : index
    %113 = vector.load %arg2[%c18, %c0_57, %c0_58] : memref<21x8x512xf32, #tpu.memory_space<vmem>>, vector<1x8x512xf32>
    %114 = vector.shape_cast %113 : vector<1x8x512xf32> to vector<8x512xf32>
    %115 = vector.shape_cast %109 : vector<8x512xf32> to vector<1x8x512xf32>
    tpu.vector_store %arg2[%c18, %c0_57, %c0_58], %115 {strides = array<i32>} : memref<21x8x512xf32, #tpu.memory_space<vmem>>, vector<1x8x512xf32>,
    %cst_59 = arith.constant 2.000000e+00 : f32
    %116 = vector.broadcast %cst_59 : f32 to vector<8x512xf32>
    %117 = arith.mulf %116, %108 : vector<8x512xf32>
    %118 = arith.mulf %117, %109 : vector<8x512xf32>
    %cst_60 = arith.constant 2.000000e+00 : f32
    %119 = vector.broadcast %cst_60 : f32 to vector<8x512xf32>
    %120 = arith.mulf %119, %108 : vector<8x512xf32>
    %121 = arith.mulf %120, %108 : vector<8x512xf32>
    %cst_61 = arith.constant 1.000000e+00 : f32
    %122 = vector.broadcast %cst_61 : f32 to vector<8x512xf32>
    %123 = arith.subf %122, %121 : vector<8x512xf32>
    %c19 = arith.constant 19 : index
    %c0_62 = arith.constant 0 : index
    %c0_63 = arith.constant 0 : index
    %124 = vector.load %arg2[%c19, %c0_62, %c0_63] : memref<21x8x512xf32, #tpu.memory_space<vmem>>, vector<1x8x512xf32>
    %125 = vector.shape_cast %124 : vector<1x8x512xf32> to vector<8x512xf32>
    %126 = vector.shape_cast %118 : vector<8x512xf32> to vector<1x8x512xf32>
    tpu.vector_store %arg2[%c19, %c0_62, %c0_63], %126 {strides = array<i32>} : memref<21x8x512xf32, #tpu.memory_space<vmem>>, vector<1x8x512xf32>,
    %c20 = arith.constant 20 : index
    %c0_64 = arith.constant 0 : index
    %c0_65 = arith.constant 0 : index
    %127 = vector.load %arg2[%c20, %c0_64, %c0_65] : memref<21x8x512xf32, #tpu.memory_space<vmem>>, vector<1x8x512xf32>
    %128 = vector.shape_cast %127 : vector<1x8x512xf32> to vector<8x512xf32>
    %129 = vector.shape_cast %123 : vector<8x512xf32> to vector<1x8x512xf32>
    tpu.vector_store %arg2[%c20, %c0_64, %c0_65], %129 {strides = array<i32>} : memref<21x8x512xf32, #tpu.memory_space<vmem>>, vector<1x8x512xf32>,
    return
  }
  func.func @transform_0(%arg0: i32) -> (i32, i32) {
    %c0_i32 = arith.constant 0 : i32
    %c0_i32_0 = arith.constant 0 : i32
    return %arg0, %c0_i32 : i32, i32
  }
  func.func @transform_1(%arg0: i32) -> (i32, i32, i32) {
    %c0_i32 = arith.constant 0 : i32
    %c0_i32_0 = arith.constant 0 : i32
    %c0_i32_1 = arith.constant 0 : i32
    return %c0_i32, %arg0, %c0_i32_0 : i32, i32, i32
  }
}

</mosaic_0001>

<llo_original>
// kernel: tpu_custom_call.1
$region0: #{tpu_custom_call.1}
  #allocation0 [shape = 'u32[]', space=smem, size = 0x4, offset = 0x4, fixed_abs, tag = 'smem constant byte address 0x4 - core index']
  #allocation1 [shape = 'u32[72,128]{1,0:T(1,128)}', space=vmem, size = 0x9000, scoped, tag = 'internal scratch']
  %s0 = inlined_call_operand.hbm [shape: f32[8,512], index: 0, kind: input, shape index: {}]
  %s1 = inlined_call_operand.hbm [shape: f32[21,8,512], index: 1, kind: output, shape index: {}]
  %s2 = sld [smem:[#allocation0]]
  $region18: #{tpu_custom_call.1} parent=0
    _
  %s4 = ssub.s32 1, %s2
  %s5 = scalar_select 0, %s4, %s2
  $region1: #{tpu_custom_call.1} parent=0
    #allocation2 [shape = 'u8[16384]{0}', space=vmem, size = 0x4000, scoped, tag = 'input window, operand 0, single buffered']
    #allocation3 [shape = 's32[1]{0}', space=sflag, size = 0x4, scoped, tag = 'scoped memory for tpu_custom_call.1']
    #allocation4 [shape = 's32[1]{0}', space=sflag, size = 0x4, scoped, tag = 'scoped memory for tpu_custom_call.1']
    #allocation5 [shape = 'u8[344064]{0}', space=vmem, size = 0x54000, scoped, tag = 'output window, operand 0, single buffered']
    %6 = vsyncpa [#allocation3], 0
    %7 = vsyncpa [#allocation4], 0
    // Predicated region
    $region2: #{tpu_custom_call.1} parent=1 // pred_check
      _
    $region3: #{tpu_custom_call.1} parent=1 // pred_check_branch
      %9 = sbr.rel (0) target = $region5
    $region4: #{tpu_custom_call.1} parent=1 // pred_region
      %11 = vsyncadd [#allocation3], 0
      %s13 = sshll.u32 %s0, 4
      %s14 = int_to_ptr.hbm [resolvable:$true] %s13
      %s15 = sshll.u32 [#allocation2], 4
      %s16 = int_to_ptr.vmem [resolvable:$true] %s15
      %18 = dma.hbm_to_vmem [thread:$0]  %s14, 512, %s16, [#allocation3]
    $region5: #{tpu_custom_call.1} parent=1 // pred_fallthru
      _
    // Predicated region
    $region6: #{tpu_custom_call.1} parent=1 // pred_check
      _
    $region7: #{tpu_custom_call.1} parent=1 // pred_check_branch
      %20 = sbr.rel (0) target = $region9
    $region8: #{tpu_custom_call.1} parent=1 // pred_region
      %22 = dma.done [#allocation3], 512
    $region9: #{tpu_custom_call.1} parent=1 // pred_fallthru
      _
    %v23 = vld [vmem:[#allocation2] sm:$0xff]
    %v24 = vld [vmem:[#allocation2 + $0x8] sm:$0xff]
    %v25 = vld [vmem:[#allocation2 + $0x10] sm:$0xff]
    %v26 = vld [vmem:[#allocation2 + $0x18] sm:$0xff]
    %27 = vst [vmem:[#allocation5] sm:$0xff] %v23
    %28 = vst [vmem:[#allocation5 + $0x8] sm:$0xff] %v24
    %29 = vst [vmem:[#allocation5 + $0x10] sm:$0xff] %v25
    %30 = vst [vmem:[#allocation5 + $0x18] sm:$0xff] %v26
    %v31 = vand.u32 2147483647, %v23
    %vm32 = vcmp.le.f32.partialorder %v31, 0.7853982
    %vm33 = vcmp.lt.s32.totalorder %v23, 0
    %v34 = vand.u32 %v23, 2139095040
    %v35 = vshrl.u32 %v34, 23
    %v36 = vsub.s32 %v35, 127
    %v37 = vand.u32 2147483647, %v23
    %v38 = vand.u32 %v37, 8388607
    %v39 = vor.u32 %v38, 8388608
    %v40 = vsub.s32 0, %v39
    %v41 = vadd.s32 %v36, 1
    %vm42 = vcmp.gt.s32.totalorder %v41, 0
    %v43 = vsel %vm42, %v41, 0
    %v44 = vshrl.u32 %v43, 5
    %v45 = vand.u32 %v43, 31
    %v46 = vsub.s32 32, %v45
    %v47 = vshrl.u32 683565275, %v46
    %v48 = vshll.u32 683565275, %v45
    %v49 = vshrl.u32 2475754826, %v46
    %v50 = vor.u32 %v48, %v49
    %v51 = vshll.u32 2475754826, %v45
    %v52 = vshrl.u32 2131351028, %v46
    %v53 = vor.u32 %v51, %v52
    %v54 = vshll.u32 2131351028, %v45
    %v55 = vshrl.u32 2102212464, %v46
    %v56 = vor.u32 %v54, %v55
    %v57 = vshll.u32 2102212464, %v45
    %v58 = vshrl.u32 920167782, %v46
    %v59 = vor.u32 %v57, %v58
    %v60 = vshll.u32 920167782, %v45
    %v61 = vshrl.u32 1326507024, %v46
    %v62 = vor.u32 %v60, %v61
    %vm63 = vcmp.lt.s32.totalorder %v44, 1
    %vm64 = vcmp.lt.s32.totalorder %v44, 2
    %vm65 = vcmp.lt.s32.totalorder %v44, 3
    %vm66 = vcmp.lt.s32.totalorder %v44, 4
    %v67 = vsel %vm63, %v47, %v50
    %v68 = vsel %vm66, %v56, 2102212464
    %v69 = vsel %vm65, %v53, %v68
    %v70 = vsel %vm64, %v67, %v69
    %v71 = vsel %vm63, %v50, %v53
    %v72 = vsel %vm66, %v59, 920167782
    %v73 = vsel %vm65, %v56, %v72
    %v74 = vsel %vm64, %v71, %v73
    %v75 = vsel %vm63, %v53, %v56
    %v76 = vsel %vm66, %v62, 1326507024
    %v77 = vsel %vm65, %v59, %v76
    %v78 = vsel %vm64, %v75, %v77
    %v79 = vshll.u32 %v39, 8
    %v80 = vand.u32 %v79, 65535
    %v81 = vshrl.u32 %v79, 16
    %v82 = vand.u32 %v78, 65535
    %v83 = vshrl.u32 %v78, 16
    %v84 = vmul.u32 %v80, %v82
    %v85 = vmul.u32 %v80, %v83
    %v86 = vmul.u32 %v81, %v82
    %v87 = vmul.u32 %v81, %v83
    %v88 = vshll.u32 %v85, 16
    %v89 = vshrl.u32 %v85, 16
    %v90 = vshll.u32 %v86, 16
    %v91 = vshrl.u32 %v86, 16
    %vm92 = vc.u32 %v84, %v88
    %v93 = vsel %vm92, 1, 0
    %v94 = vadd.s32 %v84, %v88
    %v95 = vadd.s32 %v87, %v93
    %vm96 = vc.u32 %v94, %v90
    %v97 = vsel %vm96, 1, 0
    %v98 = vadd.s32 %v94, %v90
    %v99 = vadd.s32 %v95, %v97
    %v100 = vadd.s32 %v99, %v89
    %v101 = vadd.s32 %v100, %v91
    %v102 = vand.u32 %v79, 65535
    %v103 = vshrl.u32 %v79, 16
    %v104 = vand.u32 %v74, 65535
    %v105 = vshrl.u32 %v74, 16
    %v106 = vmul.u32 %v102, %v104
    %v107 = vmul.u32 %v102, %v105
    %v108 = vmul.u32 %v103, %v104
    %v109 = vmul.u32 %v103, %v105
    %v110 = vshll.u32 %v107, 16
    %v111 = vshrl.u32 %v107, 16
    %v112 = vshll.u32 %v108, 16
    %v113 = vshrl.u32 %v108, 16
    %vm114 = vc.u32 %v106, %v110
    %v115 = vsel %vm114, 1, 0
    %v116 = vadd.s32 %v106, %v110
    %v117 = vadd.s32 %v109, %v115
    %vm118 = vc.u32 %v116, %v112
    %v119 = vsel %vm118, 1, 0
    %v120 = vadd.s32 %v116, %v112
    %v121 = vadd.s32 %v117, %v119
    %v122 = vadd.s32 %v121, %v111
    %v123 = vadd.s32 %v122, %v113
    %v124 = vmul.u32 %v79, %v70
    %v125 = vadd.s32 %v101, %v120
    %vm126 = vc.u32 %v101, %v120
    %v127 = vadd.s32 %v123, 1
    %v128 = vsel %vm126, %v127, %v123
    %v129 = vadd.s32 %v124, %v128
    %v130 = vadd.s32 %v129, 536870912
    %v131 = vshrl.u32 %v130, 30
    %v132 = vshll.u32 %v131, 30
    %v133 = vsub.s32 %v129, %v132
    %vm134 = vcmp.lt.s32.totalorder %v133, 0
    %v135 = vsub.s32 0, %v133
    %v136 = vsel %vm134, %v135, %v133
    %v137 = vclz %v136
    %v138 = vsub.s32 %v137, 2
    %vm139 = vcmp.gt.s32.totalorder 0, %v138
    %v140 = vsel %vm139, 0, %v138
    %v141 = vsub.s32 32, %v140
    %v142 = vshll.u32 %v133, %v140
    %v143 = vshrl.u32 %v125, %v141
    %v144 = vor.u32 %v142, %v143
    %v145 = vsub.s32 4294967266, %v140
    %v146 = vadd.s32 %v145, 127
    %v147 = vshll.u32 %v146, 23
    %v148 = vor.u32 4788187, %v147
    %v149 = vand.u32 2147483647, %v148
    %v151 = vcvt.s32.f32 %v144
    %v152 = vmul.f32 %v151, %v149
    %v153 = vxor.u32 %v152, 2147483648
    %v154 = vsel %vm33, %v153, %v152
    %v155 = vsub.s32 4, %v131
    %v156 = vsel %vm33, %v155, %v131
    %v157 = vsel %vm32, %v23, %v154
    %v158 = vsel %vm32, 0, %v156
    %v159 = vmul.f32 %v157, %v157
    %v160 = vmul.f32 %v159, -0.001358992
    %v161 = vadd.f32 %v160, 0.041655596
    %v162 = vmul.f32 %v159, %v161
    %v163 = vadd.f32 %v162, -0.4999988
    %v164 = vmul.f32 %v159, %v163
    %v165 = vadd.f32 1.0, %v164
    %v166 = vmul.f32 %v157, %v157
    %v167 = vmul.f32 %v166, -0.00019511016
    %v168 = vadd.f32 %v167, 0.008332121
    %v169 = vmul.f32 %v166, %v168
    %v170 = vadd.f32 %v169, -0.16666654
    %v171 = vmul.f32 %v166, %v170
    %v172 = vadd.f32 %v171, 1.0
    %v173 = vmul.f32 %v172, %v157
    %vm174 = vweird.f32 %v23
    %v175 = vadd.s32 %v158, 3
    %v176 = vand.u32 %v175, 3
    %vm177 = vcmp.lt.s32.totalorder %v176, 2
    %vm178 = vcmp.eq.s32.totalorder %v176, 0
    %v179 = vxor.u32 %v173, 2147483648
    %v180 = vsel %vm178, %v165, %v179
    %vm181 = vcmp.eq.s32.totalorder %v176, 2
    %v182 = vxor.u32 %v165, 2147483648
    %v183 = vsel %vm181, %v182, %v173
    %v184 = vsel %vm177, %v180, %v183
    %v185 = vsel %vm174, nan, %v184
    %v186 = vand.u32 2147483647, %v24
    %vm187 = vcmp.le.f32.partialorder %v186, 0.7853982
    %vm188 = vcmp.lt.s32.totalorder %v24, 0
    %v189 = vand.u32 %v24, 2139095040
    %v190 = vshrl.u32 %v189, 23
    %v191 = vsub.s32 %v190, 127
    %v192 = vand.u32 2147483647, %v24
    %v193 = vand.u32 %v192, 8388607
    %v194 = vor.u32 %v193, 8388608
    %v195 = vsub.s32 0, %v194
    %v196 = vadd.s32 %v191, 1
    %vm197 = vcmp.gt.s32.totalorder %v196, 0
    %v198 = vsel %vm197, %v196, 0
    %v199 = vshrl.u32 %v198, 5
    %v200 = vand.u32 %v198, 31
    %v201 = vsub.s32 32, %v200
    %v202 = vshrl.u32 683565275, %v201
    %v203 = vshll.u32 683565275, %v200
    %v204 = vshrl.u32 2475754826, %v201
    %v205 = vor.u32 %v203, %v204
    %v206 = vshll.u32 2475754826, %v200
    %v207 = vshrl.u32 2131351028, %v201
    %v208 = vor.u32 %v206, %v207
    %v209 = vshll.u32 2131351028, %v200
    %v210 = vshrl.u32 2102212464, %v201
    %v211 = vor.u32 %v209, %v210
    %v212 = vshll.u32 2102212464, %v200
    %v213 = vshrl.u32 920167782, %v201
    %v214 = vor.u32 %v212, %v213
    %v215 = vshll.u32 920167782, %v200
    %v216 = vshrl.u32 1326507024, %v201
    %v217 = vor.u32 %v215, %v216
    %vm218 = vcmp.lt.s32.totalorder %v199, 1
    %vm219 = vcmp.lt.s32.totalorder %v199, 2
    %vm220 = vcmp.lt.s32.totalorder %v199, 3
    %vm221 = vcmp.lt.s32.totalorder %v199, 4
    %v222 = vsel %vm218, %v202, %v205
    %v223 = vsel %vm221, %v211, 2102212464
    %v224 = vsel %vm220, %v208, %v223
    %v225 = vsel %vm219, %v222, %v224
    %v226 = vsel %vm218, %v205, %v208
    %v227 = vsel %vm221, %v214, 920167782
    %v228 = vsel %vm220, %v211, %v227
    %v229 = vsel %vm219, %v226, %v228
    %v230 = vsel %vm218, %v208, %v211
    %v231 = vsel %vm221, %v217, 1326507024
    %v232 = vsel %vm220, %v214, %v231
    %v233 = vsel %vm219, %v230, %v232
    %v234 = vshll.u32 %v194, 8
    %v235 = vand.u32 %v234, 65535
    %v236 = vshrl.u32 %v234, 16
    %v237 = vand.u32 %v233, 65535
    %v238 = vshrl.u32 %v233, 16
    %v239 = vmul.u32 %v235, %v237
    %v240 = vmul.u32 %v235, %v238
    %v241 = vmul.u32 %v236, %v237
    %v242 = vmul.u32 %v236, %v238
    %v243 = vshll.u32 %v240, 16
    %v244 = vshrl.u32 %v240, 16
    %v245 = vshll.u32 %v241, 16
    %v246 = vshrl.u32 %v241, 16
    %vm247 = vc.u32 %v239, %v243
    %v248 = vsel %vm247, 1, 0
    %v249 = vadd.s32 %v239, %v243
    %v250 = vadd.s32 %v242, %v248
    %vm251 = vc.u32 %v249, %v245
    %v252 = vsel %vm251, 1, 0
    %v253 = vadd.s32 %v249, %v245
    %v254 = vadd.s32 %v250, %v252
    %v255 = vadd.s32 %v254, %v244
    %v256 = vadd.s32 %v255, %v246
    %v257 = vand.u32 %v234, 65535
    %v258 = vshrl.u32 %v234, 16
    %v259 = vand.u32 %v229, 65535
    %v260 = vshrl.u32 %v229, 16
    %v261 = vmul.u32 %v257, %v259
    %v262 = vmul.u32 %v257, %v260
    %v263 = vmul.u32 %v258, %v259
    %v264 = vmul.u32 %v258, %v260
    %v265 = vshll.u32 %v262, 16
    %v266 = vshrl.u32 %v262, 16
    %v267 = vshll.u32 %v263, 16
    %v268 = vshrl.u32 %v263, 16
    %vm269 = vc.u32 %v261, %v265
    %v270 = vsel %vm269, 1, 0
    %v271 = vadd.s32 %v261, %v265
    %v272 = vadd.s32 %v264, %v270
    %vm273 = vc.u32 %v271, %v267
    %v274 = vsel %vm273, 1, 0
    %v275 = vadd.s32 %v271, %v267
    %v276 = vadd.s32 %v272, %v274
    %v277 = vadd.s32 %v276, %v266
    %v278 = vadd.s32 %v277, %v268
    %v279 = vmul.u32 %v234, %v225
    %v280 = vadd.s32 %v256, %v275
    %vm281 = vc.u32 %v256, %v275
    %v282 = vadd.s32 %v278, 1
    %v283 = vsel %vm281, %v282, %v278
    %v284 = vadd.s32 %v279, %v283
    %v285 = vadd.s32 %v284, 536870912
    %v286 = vshrl.u32 %v285, 30
    %v287 = vshll.u32 %v286, 30
    %v288 = vsub.s32 %v284, %v287
    %vm289 = vcmp.lt.s32.totalorder %v288, 0
    %v290 = vsub.s32 0, %v288
    %v291 = vsel %vm289, %v290, %v288
    %v292 = vclz %v291
    %v293 = vsub.s32 %v292, 2
    %vm294 = vcmp.gt.s32.totalorder 0, %v293
    %v295 = vsel %vm294, 0, %v293
    %v296 = vsub.s32 32, %v295
    %v297 = vshll.u32 %v288, %v295
    %v298 = vshrl.u32 %v280, %v296
    %v299 = vor.u32 %v297, %v298
    %v300 = vsub.s32 4294967266, %v295
    %v301 = vadd.s32 %v300, 127
    %v302 = vshll.u32 %v301, 23
    %v303 = vor.u32 4788187, %v302
    %v304 = vand.u32 2147483647, %v303
    %v306 = vcvt.s32.f32 %v299
    %v307 = vmul.f32 %v306, %v304
    %v308 = vxor.u32 %v307, 2147483648
    %v309 = vsel %vm188, %v308, %v307
    %v310 = vsub.s32 4, %v286
    %v311 = vsel %vm188, %v310, %v286
    %v312 = vsel %vm187, %v24, %v309
    %v313 = vsel %vm187, 0, %v311
    %v314 = vmul.f32 %v312, %v312
    %v315 = vmul.f32 %v314, -0.001358992
    %v316 = vadd.f32 %v315, 0.041655596
    %v317 = vmul.f32 %v314, %v316
    %v318 = vadd.f32 %v317, -0.4999988
    %v319 = vmul.f32 %v314, %v318
    %v320 = vadd.f32 1.0, %v319
    %v321 = vmul.f32 %v312, %v312
    %v322 = vmul.f32 %v321, -0.00019511016
    %v323 = vadd.f32 %v322, 0.008332121
    %v324 = vmul.f32 %v321, %v323
    %v325 = vadd.f32 %v324, -0.16666654
    %v326 = vmul.f32 %v321, %v325
    %v327 = vadd.f32 %v326, 1.0
    %v328 = vmul.f32 %v327, %v312
    %vm329 = vweird.f32 %v24
    %v330 = vadd.s32 %v313, 3
    %v331 = vand.u32 %v330, 3
    %vm332 = vcmp.lt.s32.totalorder %v331, 2
    %vm333 = vcmp.eq.s32.totalorder %v331, 0
    %v334 = vxor.u32 %v328, 2147483648
    %v335 = vsel %vm333, %v320, %v334
    %vm336 = vcmp.eq.s32.totalorder %v331, 2
    %v337 = vxor.u32 %v320, 2147483648
    %v338 = vsel %vm336, %v337, %v328
    %v339 = vsel %vm332, %v335, %v338
    %v340 = vsel %vm329, nan, %v339
    %v341 = vand.u32 2147483647, %v25
    %vm342 = vcmp.le.f32.partialorder %v341, 0.7853982
    %vm343 = vcmp.lt.s32.totalorder %v25, 0
    %v344 = vand.u32 %v25, 2139095040
    %v345 = vshrl.u32 %v344, 23
    %v346 = vsub.s32 %v345, 127
    %v347 = vand.u32 2147483647, %v25
    %v348 = vand.u32 %v347, 8388607
    %v349 = vor.u32 %v348, 8388608
    %v350 = vsub.s32 0, %v349
    %v351 = vadd.s32 %v346, 1
    %vm352 = vcmp.gt.s32.totalorder %v351, 0
    %v353 = vsel %vm352, %v351, 0
    %v354 = vshrl.u32 %v353, 5
    %v355 = vand.u32 %v353, 31
    %v356 = vsub.s32 32, %v355
    %v357 = vshrl.u32 683565275, %v356
    %v358 = vshll.u32 683565275, %v355
    %v359 = vshrl.u32 2475754826, %v356
    %v360 = vor.u32 %v358, %v359
    %v361 = vshll.u32 2475754826, %v355
    %v362 = vshrl.u32 2131351028, %v356
    %v363 = vor.u32 %v361, %v362
    %v364 = vshll.u32 2131351028, %v355
    %v365 = vshrl.u32 2102212464, %v356
    %v366 = vor.u32 %v364, %v365
    %v367 = vshll.u32 2102212464, %v355
    %v368 = vshrl.u32 920167782, %v356
    %v369 = vor.u32 %v367, %v368
    %v370 = vshll.u32 920167782, %v355
    %v371 = vshrl.u32 1326507024, %v356
    %v372 = vor.u32 %v370, %v371
    %vm373 = vcmp.lt.s32.totalorder %v354, 1
    %vm374 = vcmp.lt.s32.totalorder %v354, 2
    %vm375 = vcmp.lt.s32.totalorder %v354, 3
    %vm376 = vcmp.lt.s32.totalorder %v354, 4
    %v377 = vsel %vm373, %v357, %v360
    %v378 = vsel %vm376, %v366, 2102212464
    %v379 = vsel %vm375, %v363, %v378
    %v380 = vsel %vm374, %v377, %v379
    %v381 = vsel %vm373, %v360, %v363
    %v382 = vsel %vm376, %v369, 920167782
    %v383 = vsel %vm375, %v366, %v382
    %v384 = vsel %vm374, %v381, %v383
    %v385 = vsel %vm373, %v363, %v366
    %v386 = vsel %vm376, %v372, 1326507024
    %v387 = vsel %vm375, %v369, %v386
    %v388 = vsel %vm374, %v385, %v387
    %v389 = vshll.u32 %v349, 8
    %v390 = vand.u32 %v389, 65535
    %v391 = vshrl.u32 %v389, 16
    %v392 = vand.u32 %v388, 65535
    %v393 = vshrl.u32 %v388, 16
    %v394 = vmul.u32 %v390, %v392
    %v395 = vmul.u32 %v390, %v393
    %v396 = vmul.u32 %v391, %v392
    %v397 = vmul.u32 %v391, %v393
    %v398 = vshll.u32 %v395, 16
    %v399 = vshrl.u32 %v395, 16
    %v400 = vshll.u32 %v396, 16
    %v401 = vshrl.u32 %v396, 16
    %vm402 = vc.u32 %v394, %v398
    %v403 = vsel %vm402, 1, 0
    %v404 = vadd.s32 %v394, %v398
    %v405 = vadd.s32 %v397, %v403
    %vm406 = vc.u32 %v404, %v400
    %v407 = vsel %vm406, 1, 0
    %v408 = vadd.s32 %v404, %v400
    %v409 = vadd.s32 %v405, %v407
    %v410 = vadd.s32 %v409, %v399
    %v411 = vadd.s32 %v410, %v401
    %v412 = vand.u32 %v389, 65535
    %v413 = vshrl.u32 %v389, 16
    %v414 = vand.u32 %v384, 65535
    %v415 = vshrl.u32 %v384, 16
    %v416 = vmul.u32 %v412, %v414
    %v417 = vmul.u32 %v412, %v415
    %v418 = vmul.u32 %v413, %v414
    %v419 = vmul.u32 %v413, %v415
    %v420 = vshll.u32 %v417, 16
    %v421 = vshrl.u32 %v417, 16
    %v422 = vshll.u32 %v418, 16
    %v423 = vshrl.u32 %v418, 16
    %vm424 = vc.u32 %v416, %v420
    %v425 = vsel %vm424, 1, 0
    %v426 = vadd.s32 %v416, %v420
    %v427 = vadd.s32 %v419, %v425
    %vm428 = vc.u32 %v426, %v422
    %v429 = vsel %vm428, 1, 0
    %v430 = vadd.s32 %v426, %v422
    %v431 = vadd.s32 %v427, %v429
    %v432 = vadd.s32 %v431, %v421
    %v433 = vadd.s32 %v432, %v423
    %v434 = vmul.u32 %v389, %v380
    %v435 = vadd.s32 %v411, %v430
    %vm436 = vc.u32 %v411, %v430
    %v437 = vadd.s32 %v433, 1
    %v438 = vsel %vm436, %v437, %v433
    %v439 = vadd.s32 %v434, %v438
    %v440 = vadd.s32 %v439, 536870912
    %v441 = vshrl.u32 %v440, 30
    %v442 = vshll.u32 %v441, 30
    %v443 = vsub.s32 %v439, %v442
    %vm444 = vcmp.lt.s32.totalorder %v443, 0
    %v445 = vsub.s32 0, %v443
    %v446 = vsel %vm444, %v445, %v443
    %v447 = vclz %v446
    %v448 = vsub.s32 %v447, 2
    %vm449 = vcmp.gt.s32.totalorder 0, %v448
    %v450 = vsel %vm449, 0, %v448
    %v451 = vsub.s32 32, %v450
    %v452 = vshll.u32 %v443, %v450
    %v453 = vshrl.u32 %v435, %v451
    %v454 = vor.u32 %v452, %v453
    %v455 = vsub.s32 4294967266, %v450
    %v456 = vadd.s32 %v455, 127
    %v457 = vshll.u32 %v456, 23
    %v458 = vor.u32 4788187, %v457
    %v459 = vand.u32 2147483647, %v458
    %v461 = vcvt.s32.f32 %v454
    %v462 = vmul.f32 %v461, %v459
    %v463 = vxor.u32 %v462, 2147483648
    %v464 = vsel %vm343, %v463, %v462
    %v465 = vsub.s32 4, %v441
    %v466 = vsel %vm343, %v465, %v441
    %v467 = vsel %vm342, %v25, %v464
    %v468 = vsel %vm342, 0, %v466
    %v469 = vmul.f32 %v467, %v467
    %v470 = vmul.f32 %v469, -0.001358992
    %v471 = vadd.f32 %v470, 0.041655596
    %v472 = vmul.f32 %v469, %v471
    %v473 = vadd.f32 %v472, -0.4999988
    %v474 = vmul.f32 %v469, %v473
    %v475 = vadd.f32 1.0, %v474
    %v476 = vmul.f32 %v467, %v467
    %v477 = vmul.f32 %v476, -0.00019511016
    %v478 = vadd.f32 %v477, 0.008332121
    %v479 = vmul.f32 %v476, %v478
    %v480 = vadd.f32 %v479, -0.16666654
    %v481 = vmul.f32 %v476, %v480
    %v482 = vadd.f32 %v481, 1.0
    %v483 = vmul.f32 %v482, %v467
    %vm484 = vweird.f32 %v25
    %v485 = vadd.s32 %v468, 3
    %v486 = vand.u32 %v485, 3
    %vm487 = vcmp.lt.s32.totalorder %v486, 2
    %vm488 = vcmp.eq.s32.totalorder %v486, 0
    %v489 = vxor.u32 %v483, 2147483648
    %v490 = vsel %vm488, %v475, %v489
    %vm491 = vcmp.eq.s32.totalorder %v486, 2
    %v492 = vxor.u32 %v475, 2147483648
    %v493 = vsel %vm491, %v492, %v483
    %v494 = vsel %vm487, %v490, %v493
    %v495 = vsel %vm484, nan, %v494
    %v496 = vand.u32 2147483647, %v26
    %vm497 = vcmp.le.f32.partialorder %v496, 0.7853982
    %vm498 = vcmp.lt.s32.totalorder %v26, 0
    %v499 = vand.u32 %v26, 2139095040
    %v500 = vshrl.u32 %v499, 23
    %v501 = vsub.s32 %v500, 127
    %v502 = vand.u32 2147483647, %v26
    %v503 = vand.u32 %v502, 8388607
    %v504 = vor.u32 %v503, 8388608
    %v505 = vsub.s32 0, %v504
    %v506 = vadd.s32 %v501, 1
    %vm507 = vcmp.gt.s32.totalorder %v506, 0
    %v508 = vsel %vm507, %v506, 0
    %v509 = vshrl.u32 %v508, 5
    %v510 = vand.u32 %v508, 31
    %v511 = vsub.s32 32, %v510
    %v512 = vshrl.u32 683565275, %v511
    %v513 = vshll.u32 683565275, %v510
    %v514 = vshrl.u32 2475754826, %v511
    %v515 = vor.u32 %v513, %v514
    %v516 = vshll.u32 2475754826, %v510
    %v517 = vshrl.u32 2131351028, %v511
    %v518 = vor.u32 %v516, %v517
    %v519 = vshll.u32 2131351028, %v510
    %v520 = vshrl.u32 2102212464, %v511
    %v521 = vor.u32 %v519, %v520
    %v522 = vshll.u32 2102212464, %v510
    %v523 = vshrl.u32 920167782, %v511
    %v524 = vor.u32 %v522, %v523
    %v525 = vshll.u32 920167782, %v510
    %v526 = vshrl.u32 1326507024, %v511
    %v527 = vor.u32 %v525, %v526
    %vm528 = vcmp.lt.s32.totalorder %v509, 1
    %vm529 = vcmp.lt.s32.totalorder %v509, 2
    %vm530 = vcmp.lt.s32.totalorder %v509, 3
    %vm531 = vcmp.lt.s32.totalorder %v509, 4
    %v532 = vsel %vm528, %v512, %v515
    %v533 = vsel %vm531, %v521, 2102212464
    %v534 = vsel %vm530, %v518, %v533
    %v535 = vsel %vm529, %v532, %v534
    %v536 = vsel %vm528, %v515, %v518
    %v537 = vsel %vm531, %v524, 920167782
    %v538 = vsel %vm530, %v521, %v537
    %v539 = vsel %vm529, %v536, %v538
    %v540 = vsel %vm528, %v518, %v521
    %v541 = vsel %vm531, %v527, 1326507024
    %v542 = vsel %vm530, %v524, %v541
    %v543 = vsel %vm529, %v540, %v542
    %v544 = vshll.u32 %v504, 8
    %v545 = vand.u32 %v544, 65535
    %v546 = vshrl.u32 %v544, 16
    %v547 = vand.u32 %v543, 65535
    %v548 = vshrl.u32 %v543, 16
    %v549 = vmul.u32 %v545, %v547
    %v550 = vmul.u32 %v545, %v548
    %v551 = vmul.u32 %v546, %v547
    %v552 = vmul.u32 %v546, %v548
    %v553 = vshll.u32 %v550, 16
    %v554 = vshrl.u32 %v550, 16
    %v555 = vshll.u32 %v551, 16
    %v556 = vshrl.u32 %v551, 16
    %vm557 = vc.u32 %v549, %v553
    %v558 = vsel %vm557, 1, 0
    %v559 = vadd.s32 %v549, %v553
    %v560 = vadd.s32 %v552, %v558
    %vm561 = vc.u32 %v559, %v555
    %v562 = vsel %vm561, 1, 0
    %v563 = vadd.s32 %v559, %v555
    %v564 = vadd.s32 %v560, %v562
    %v565 = vadd.s32 %v564, %v554
    %v566 = vadd.s32 %v565, %v556
    %v567 = vand.u32 %v544, 65535
    %v568 = vshrl.u32 %v544, 16
    %v569 = vand.u32 %v539, 65535
    %v570 = vshrl.u32 %v539, 16
    %v571 = vmul.u32 %v567, %v569
    %v572 = vmul.u32 %v567, %v570
    %v573 = vmul.u32 %v568, %v569
    %v574 = vmul.u32 %v568, %v570
    %v575 = vshll.u32 %v572, 16
    %v576 = vshrl.u32 %v572, 16
    %v577 = vshll.u32 %v573, 16
    %v578 = vshrl.u32 %v573, 16
    %vm579 = vc.u32 %v571, %v575
    %v580 = vsel %vm579, 1, 0
    %v581 = vadd.s32 %v571, %v575
    %v582 = vadd.s32 %v574, %v580
    %vm583 = vc.u32 %v581, %v577
    %v584 = vsel %vm583, 1, 0
    %v585 = vadd.s32 %v581, %v577
    %v586 = vadd.s32 %v582, %v584
    %v587 = vadd.s32 %v586, %v576
    %v588 = vadd.s32 %v587, %v578
    %v589 = vmul.u32 %v544, %v535
    %v590 = vadd.s32 %v566, %v585
    %vm591 = vc.u32 %v566, %v585
    %v592 = vadd.s32 %v588, 1
    %v593 = vsel %vm591, %v592, %v588
    %v594 = vadd.s32 %v589, %v593
    %v595 = vadd.s32 %v594, 536870912
    %v596 = vshrl.u32 %v595, 30
    %v597 = vshll.u32 %v596, 30
    %v598 = vsub.s32 %v594, %v597
    %vm599 = vcmp.lt.s32.totalorder %v598, 0
    %v600 = vsub.s32 0, %v598
    %v601 = vsel %vm599, %v600, %v598
    %v602 = vclz %v601
    %v603 = vsub.s32 %v602, 2
    %vm604 = vcmp.gt.s32.totalorder 0, %v603
    %v605 = vsel %vm604, 0, %v603
    %v606 = vsub.s32 32, %v605
    %v607 = vshll.u32 %v598, %v605
    %v608 = vshrl.u32 %v590, %v606
    %v609 = vor.u32 %v607, %v608
    %v610 = vsub.s32 4294967266, %v605
    %v611 = vadd.s32 %v610, 127
    %v612 = vshll.u32 %v611, 23
    %v613 = vor.u32 4788187, %v612
    %v614 = vand.u32 2147483647, %v613
    %v616 = vcvt.s32.f32 %v609
    %v617 = vmul.f32 %v616, %v614
    %v618 = vxor.u32 %v617, 2147483648
    %v619 = vsel %vm498, %v618, %v617
    %v620 = vsub.s32 4, %v596
    %v621 = vsel %vm498, %v620, %v596
    %v622 = vsel %vm497, %v26, %v619
    %v623 = vsel %vm497, 0, %v621
    %v624 = vmul.f32 %v622, %v622
    %v625 = vmul.f32 %v624, -0.001358992
    %v626 = vadd.f32 %v625, 0.041655596
    %v627 = vmul.f32 %v624, %v626
    %v628 = vadd.f32 %v627, -0.4999988
    %v629 = vmul.f32 %v624, %v628
    %v630 = vadd.f32 1.0, %v629
    %v631 = vmul.f32 %v622, %v622
    %v632 = vmul.f32 %v631, -0.00019511016
    %v633 = vadd.f32 %v632, 0.008332121
    %v634 = vmul.f32 %v631, %v633
    %v635 = vadd.f32 %v634, -0.16666654
    %v636 = vmul.f32 %v631, %v635
    %v637 = vadd.f32 %v636, 1.0
    %v638 = vmul.f32 %v637, %v622
    %vm639 = vweird.f32 %v26
    %v640 = vadd.s32 %v623, 3
    %v641 = vand.u32 %v640, 3
    %vm642 = vcmp.lt.s32.totalorder %v641, 2
    %vm643 = vcmp.eq.s32.totalorder %v641, 0
    %v644 = vxor.u32 %v638, 2147483648
    %v645 = vsel %vm643, %v630, %v644
    %vm646 = vcmp.eq.s32.totalorder %v641, 2
    %v647 = vxor.u32 %v630, 2147483648
    %v648 = vsel %vm646, %v647, %v638
    %v649 = vsel %vm642, %v645, %v648
    %v650 = vsel %vm639, nan, %v649
    %v651 = vand.u32 2147483647, %v23
    %vm652 = vcmp.le.f32.partialorder %v651, 0.7853982
    %vm653 = vcmp.lt.s32.totalorder %v23, 0
    %v654 = vand.u32 %v23, 2139095040
    %v655 = vshrl.u32 %v654, 23
    %v656 = vsub.s32 %v655, 127
    %v657 = vand.u32 2147483647, %v23
    %v658 = vand.u32 %v657, 8388607
    %v659 = vor.u32 %v658, 8388608
    %v660 = vsub.s32 0, %v659
    %v661 = vadd.s32 %v656, 1
    %vm662 = vcmp.gt.s32.totalorder %v661, 0
    %v663 = vsel %vm662, %v661, 0
    %v664 = vshrl.u32 %v663, 5
    %v665 = vand.u32 %v663, 31
    %v666 = vsub.s32 32, %v665
    %v667 = vshrl.u32 683565275, %v666
    %v668 = vshll.u32 683565275, %v665
    %v669 = vshrl.u32 2475754826, %v666
    %v670 = vor.u32 %v668, %v669
    %v671 = vshll.u32 2475754826, %v665
    %v672 = vshrl.u32 2131351028, %v666
    %v673 = vor.u32 %v671, %v672
    %v674 = vshll.u32 2131351028, %v665
    %v675 = vshrl.u32 2102212464, %v666
    %v676 = vor.u32 %v674, %v675
    %v677 = vshll.u32 2102212464, %v665
    %v678 = vshrl.u32 920167782, %v666
    %v679 = vor.u32 %v677, %v678
    %v680 = vshll.u32 920167782, %v665
    %v681 = vshrl.u32 1326507024, %v666
    %v682 = vor.u32 %v680, %v681
    %vm683 = vcmp.lt.s32.totalorder %v664, 1
    %vm684 = vcmp.lt.s32.totalorder %v664, 2
    %vm685 = vcmp.lt.s32.totalorder %v664, 3
    %vm686 = vcmp.lt.s32.totalorder %v664, 4
    %v687 = vsel %vm683, %v667, %v670
    %v688 = vsel %vm686, %v676, 2102212464
    %v689 = vsel %vm685, %v673, %v688
    %v690 = vsel %vm684, %v687, %v689
    %v691 = vsel %vm683, %v670, %v673
    %v692 = vsel %vm686, %v679, 920167782
    %v693 = vsel %vm685, %v676, %v692
    %v694 = vsel %vm684, %v691, %v693
    %v695 = vsel %vm683, %v673, %v676
    %v696 = vsel %vm686, %v682, 1326507024
    %v697 = vsel %vm685, %v679, %v696
    %v698 = vsel %vm684, %v695, %v697
    %v699 = vshll.u32 %v659, 8
    %v700 = vand.u32 %v699, 65535
    %v701 = vshrl.u32 %v699, 16
    %v702 = vand.u32 %v698, 65535
    %v703 = vshrl.u32 %v698, 16
    %v704 = vmul.u32 %v700, %v702
    %v705 = vmul.u32 %v700, %v703
    %v706 = vmul.u32 %v701, %v702
    %v707 = vmul.u32 %v701, %v703
    %v708 = vshll.u32 %v705, 16
    %v709 = vshrl.u32 %v705, 16
    %v710 = vshll.u32 %v706, 16
    %v711 = vshrl.u32 %v706, 16
    %vm712 = vc.u32 %v704, %v708
    %v713 = vsel %vm712, 1, 0
    %v714 = vadd.s32 %v704, %v708
    %v715 = vadd.s32 %v707, %v713
    %vm716 = vc.u32 %v714, %v710
    %v717 = vsel %vm716, 1, 0
    %v718 = vadd.s32 %v714, %v710
    %v719 = vadd.s32 %v715, %v717
    %v720 = vadd.s32 %v719, %v709
    %v721 = vadd.s32 %v720, %v711
    %v722 = vand.u32 %v699, 65535
    %v723 = vshrl.u32 %v699, 16
    %v724 = vand.u32 %v694, 65535
    %v725 = vshrl.u32 %v694, 16
    %v726 = vmul.u32 %v722, %v724
    %v727 = vmul.u32 %v722, %v725
    %v728 = vmul.u32 %v723, %v724
    %v729 = vmul.u32 %v723, %v725
    %v730 = vshll.u32 %v727, 16
    %v731 = vshrl.u32 %v727, 16
    %v732 = vshll.u32 %v728, 16
    %v733 = vshrl.u32 %v728, 16
    %vm734 = vc.u32 %v726, %v730
    %v735 = vsel %vm734, 1, 0
    %v736 = vadd.s32 %v726, %v730
    %v737 = vadd.s32 %v729, %v735
    %vm738 = vc.u32 %v736, %v732
    %v739 = vsel %vm738, 1, 0
    %v740 = vadd.s32 %v736, %v732
    %v741 = vadd.s32 %v737, %v739
    %v742 = vadd.s32 %v741, %v731
    %v743 = vadd.s32 %v742, %v733
    %v744 = vmul.u32 %v699, %v690
    %v745 = vadd.s32 %v721, %v740
    %vm746 = vc.u32 %v721, %v740
    %v747 = vadd.s32 %v743, 1
    %v748 = vsel %vm746, %v747, %v743
    %v749 = vadd.s32 %v744, %v748
    %v750 = vadd.s32 %v749, 536870912
    %v751 = vshrl.u32 %v750, 30
    %v752 = vshll.u32 %v751, 30
    %v753 = vsub.s32 %v749, %v752
    %vm754 = vcmp.lt.s32.totalorder %v753, 0
    %v755 = vsub.s32 0, %v753
    %v756 = vsel %vm754, %v755, %v753
    %v757 = vclz %v756
    %v758 = vsub.s32 %v757, 2
    %vm759 = vcmp.gt.s32.totalorder 0, %v758
    %v760 = vsel %vm759, 0, %v758
    %v761 = vsub.s32 32, %v760
    %v762 = vshll.u32 %v753, %v760
    %v763 = vshrl.u32 %v745, %v761
    %v764 = vor.u32 %v762, %v763
    %v765 = vsub.s32 4294967266, %v760
    %v766 = vadd.s32 %v765, 127
    %v767 = vshll.u32 %v766, 23
    %v768 = vor.u32 4788187, %v767
    %v769 = vand.u32 2147483647, %v768
    %v771 = vcvt.s32.f32 %v764
    %v772 = vmul.f32 %v771, %v769
    %v773 = vxor.u32 %v772, 2147483648
    %v774 = vsel %vm653, %v773, %v772
    %v775 = vsub.s32 4, %v751
    %v776 = vsel %vm653, %v775, %v751
    %v777 = vsel %vm652, %v23, %v774
    %v778 = vsel %vm652, 0, %v776
    %v779 = vmul.f32 %v777, %v777
    %v780 = vmul.f32 %v779, -0.001358992
    %v781 = vadd.f32 %v780, 0.041655596
    %v782 = vmul.f32 %v779, %v781
    %v783 = vadd.f32 %v782, -0.4999988
    %v784 = vmul.f32 %v779, %v783
    %v785 = vadd.f32 1.0, %v784
    %v786 = vmul.f32 %v777, %v777
    %v787 = vmul.f32 %v786, -0.00019511016
    %v788 = vadd.f32 %v787, 0.008332121
    %v789 = vmul.f32 %v786, %v788
    %v790 = vadd.f32 %v789, -0.16666654
    %v791 = vmul.f32 %v786, %v790
    %v792 = vadd.f32 %v791, 1.0
    %v793 = vmul.f32 %v792, %v777
    %vm794 = vweird.f32 %v23
    %v795 = vand.u32 %v778, 3
    %vm796 = vcmp.lt.s32.totalorder %v795, 2
    %vm797 = vcmp.eq.s32.totalorder %v795, 0
    %v798 = vxor.u32 %v793, 2147483648
    %v799 = vsel %vm797, %v785, %v798
    %vm800 = vcmp.eq.s32.totalorder %v795, 2
    %v801 = vxor.u32 %v785, 2147483648
    %v802 = vsel %vm800, %v801, %v793
    %v803 = vsel %vm796, %v799, %v802
    %v804 = vsel %vm794, nan, %v803
    %v805 = vand.u32 2147483647, %v24
    %vm806 = vcmp.le.f32.partialorder %v805, 0.7853982
    %vm807 = vcmp.lt.s32.totalorder %v24, 0
    %v808 = vand.u32 %v24, 2139095040
    %v809 = vshrl.u32 %v808, 23
    %v810 = vsub.s32 %v809, 127
    %v811 = vand.u32 2147483647, %v24
    %v812 = vand.u32 %v811, 8388607
    %v813 = vor.u32 %v812, 8388608
    %v814 = vsub.s32 0, %v813
    %v815 = vadd.s32 %v810, 1
    %vm816 = vcmp.gt.s32.totalorder %v815, 0
    %v817 = vsel %vm816, %v815, 0
    %v818 = vshrl.u32 %v817, 5
    %v819 = vand.u32 %v817, 31
    %v820 = vsub.s32 32, %v819
    %v821 = vshrl.u32 683565275, %v820
    %v822 = vshll.u32 683565275, %v819
    %v823 = vshrl.u32 2475754826, %v820
    %v824 = vor.u32 %v822, %v823
    %v825 = vshll.u32 2475754826, %v819
    %v826 = vshrl.u32 2131351028, %v820
    %v827 = vor.u32 %v825, %v826
    %v828 = vshll.u32 2131351028, %v819
    %v829 = vshrl.u32 2102212464, %v820
    %v830 = vor.u32 %v828, %v829
    %v831 = vshll.u32 2102212464, %v819
    %v832 = vshrl.u32 920167782, %v820
    %v833 = vor.u32 %v831, %v832
    %v834 = vshll.u32 920167782, %v819
    %v835 = vshrl.u32 1326507024, %v820
    %v836 = vor.u32 %v834, %v835
    %vm837 = vcmp.lt.s32.totalorder %v818, 1
    %vm838 = vcmp.lt.s32.totalorder %v818, 2
    %vm839 = vcmp.lt.s32.totalorder %v818, 3
    %vm840 = vcmp.lt.s32.totalorder %v818, 4
    %v841 = vsel %vm837, %v821, %v824
    %v842 = vsel %vm840, %v830, 2102212464
    %v843 = vsel %vm839, %v827, %v842
    %v844 = vsel %vm838, %v841, %v843
    %v845 = vsel %vm837, %v824, %v827
    %v846 = vsel %vm840, %v833, 920167782
    %v847 = vsel %vm839, %v830, %v846
    %v848 = vsel %vm838, %v845, %v847
    %v849 = vsel %vm837, %v827, %v830
    %v850 = vsel %vm840, %v836, 1326507024
    %v851 = vsel %vm839, %v833, %v850
    %v852 = vsel %vm838, %v849, %v851
    %v853 = vshll.u32 %v813, 8
    %v854 = vand.u32 %v853, 65535
    %v855 = vshrl.u32 %v853, 16
    %v856 = vand.u32 %v852, 65535
    %v857 = vshrl.u32 %v852, 16
    %v858 = vmul.u32 %v854, %v856
    %v859 = vmul.u32 %v854, %v857
    %v860 = vmul.u32 %v855, %v856
    %v861 = vmul.u32 %v855, %v857
    %v862 = vshll.u32 %v859, 16
    %v863 = vshrl.u32 %v859, 16
    %v864 = vshll.u32 %v860, 16
    %v865 = vshrl.u32 %v860, 16
    %vm866 = vc.u32 %v858, %v862
    %v867 = vsel %vm866, 1, 0
    %v868 = vadd.s32 %v858, %v862
    %v869 = vadd.s32 %v861, %v867
    %vm870 = vc.u32 %v868, %v864
    %v871 = vsel %vm870, 1, 0
    %v872 = vadd.s32 %v868, %v864
    %v873 = vadd.s32 %v869, %v871
    %v874 = vadd.s32 %v873, %v863
    %v875 = vadd.s32 %v874, %v865
    %v876 = vand.u32 %v853, 65535
    %v877 = vshrl.u32 %v853, 16
    %v878 = vand.u32 %v848, 65535
    %v879 = vshrl.u32 %v848, 16
    %v880 = vmul.u32 %v876, %v878
    %v881 = vmul.u32 %v876, %v879
    %v882 = vmul.u32 %v877, %v878
    %v883 = vmul.u32 %v877, %v879
    %v884 = vshll.u32 %v881, 16
    %v885 = vshrl.u32 %v881, 16
    %v886 = vshll.u32 %v882, 16
    %v887 = vshrl.u32 %v882, 16
    %vm888 = vc.u32 %v880, %v884
    %v889 = vsel %vm888, 1, 0
    %v890 = vadd.s32 %v880, %v884
    %v891 = vadd.s32 %v883, %v889
    %vm892 = vc.u32 %v890, %v886
    %v893 = vsel %vm892, 1, 0
    %v894 = vadd.s32 %v890, %v886
    %v895 = vadd.s32 %v891, %v893
    %v896 = vadd.s32 %v895, %v885
    %v897 = vadd.s32 %v896, %v887
    %v898 = vmul.u32 %v853, %v844
    %v899 = vadd.s32 %v875, %v894
    %vm900 = vc.u32 %v875, %v894
    %v901 = vadd.s32 %v897, 1
    %v902 = vsel %vm900, %v901, %v897
    %v903 = vadd.s32 %v898, %v902
    %v904 = vadd.s32 %v903, 536870912
    %v905 = vshrl.u32 %v904, 30
    %v906 = vshll.u32 %v905, 30
    %v907 = vsub.s32 %v903, %v906
    %vm908 = vcmp.lt.s32.totalorder %v907, 0
    %v909 = vsub.s32 0, %v907
    %v910 = vsel %vm908, %v909, %v907
    %v911 = vclz %v910
    %v912 = vsub.s32 %v911, 2
    %vm913 = vcmp.gt.s32.totalorder 0, %v912
    %v914 = vsel %vm913, 0, %v912
    %v915 = vsub.s32 32, %v914
    %v916 = vshll.u32 %v907, %v914
    %v917 = vshrl.u32 %v899, %v915
    %v918 = vor.u32 %v916, %v917
    %v919 = vsub.s32 4294967266, %v914
    %v920 = vadd.s32 %v919, 127
    %v921 = vshll.u32 %v920, 23
    %v922 = vor.u32 4788187, %v921
    %v923 = vand.u32 2147483647, %v922
    %v925 = vcvt.s32.f32 %v918
    %v926 = vmul.f32 %v925, %v923
    %v927 = vxor.u32 %v926, 2147483648
    %v928 = vsel %vm807, %v927, %v926
    %v929 = vsub.s32 4, %v905
    %v930 = vsel %vm807, %v929, %v905
    %v931 = vsel %vm806, %v24, %v928
    %v932 = vsel %vm806, 0, %v930
    %v933 = vmul.f32 %v931, %v931
    %v934 = vmul.f32 %v933, -0.001358992
    %v935 = vadd.f32 %v934, 0.041655596
    %v936 = vmul.f32 %v933, %v935
    %v937 = vadd.f32 %v936, -0.4999988
    %v938 = vmul.f32 %v933, %v937
    %v939 = vadd.f32 1.0, %v938
    %v940 = vmul.f32 %v931, %v931
    %v941 = vmul.f32 %v940, -0.00019511016
    %v942 = vadd.f32 %v941, 0.008332121
    %v943 = vmul.f32 %v940, %v942
    %v944 = vadd.f32 %v943, -0.16666654
    %v945 = vmul.f32 %v940, %v944
    %v946 = vadd.f32 %v945, 1.0
    %v947 = vmul.f32 %v946, %v931
    %vm948 = vweird.f32 %v24
    %v949 = vand.u32 %v932, 3
    %vm950 = vcmp.lt.s32.totalorder %v949, 2
    %vm951 = vcmp.eq.s32.totalorder %v949, 0
    %v952 = vxor.u32 %v947, 2147483648
    %v953 = vsel %vm951, %v939, %v952
    %vm954 = vcmp.eq.s32.totalorder %v949, 2
    %v955 = vxor.u32 %v939, 2147483648
    %v956 = vsel %vm954, %v955, %v947
    %v957 = vsel %vm950, %v953, %v956
    %v958 = vsel %vm948, nan, %v957
    %v959 = vand.u32 2147483647, %v25
    %vm960 = vcmp.le.f32.partialorder %v959, 0.7853982
    %vm961 = vcmp.lt.s32.totalorder %v25, 0
    %v962 = vand.u32 %v25, 2139095040
    %v963 = vshrl.u32 %v962, 23
    %v964 = vsub.s32 %v963, 127
    %v965 = vand.u32 2147483647, %v25
    %v966 = vand.u32 %v965, 8388607
    %v967 = vor.u32 %v966, 8388608
    %v968 = vsub.s32 0, %v967
    %v969 = vadd.s32 %v964, 1
    %vm970 = vcmp.gt.s32.totalorder %v969, 0
    %v971 = vsel %vm970, %v969, 0
    %v972 = vshrl.u32 %v971, 5
    %v973 = vand.u32 %v971, 31
    %v974 = vsub.s32 32, %v973
    %v975 = vshrl.u32 683565275, %v974
    %v976 = vshll.u32 683565275, %v973
    %v977 = vshrl.u32 2475754826, %v974
    %v978 = vor.u32 %v976, %v977
    %v979 = vshll.u32 2475754826, %v973
    %v980 = vshrl.u32 2131351028, %v974
    %v981 = vor.u32 %v979, %v980
    %v982 = vshll.u32 2131351028, %v973
    %v983 = vshrl.u32 2102212464, %v974
    %v984 = vor.u32 %v982, %v983
    %v985 = vshll.u32 2102212464, %v973
    %v986 = vshrl.u32 920167782, %v974
    %v987 = vor.u32 %v985, %v986
    %v988 = vshll.u32 920167782, %v973
    %v989 = vshrl.u32 1326507024, %v974
    %v990 = vor.u32 %v988, %v989
    %vm991 = vcmp.lt.s32.totalorder %v972, 1
    %vm992 = vcmp.lt.s32.totalorder %v972, 2
    %vm993 = vcmp.lt.s32.totalorder %v972, 3
    %vm994 = vcmp.lt.s32.totalorder %v972, 4
    %v995 = vsel %vm991, %v975, %v978
    %v996 = vsel %vm994, %v984, 2102212464
    %v997 = vsel %vm993, %v981, %v996
    %v998 = vsel %vm992, %v995, %v997
    %v999 = vsel %vm991, %v978, %v981
    %v1000 = vsel %vm994, %v987, 920167782
    %v1001 = vsel %vm993, %v984, %v1000
    %v1002 = vsel %vm992, %v999, %v1001
    %v1003 = vsel %vm991, %v981, %v984
    %v1004 = vsel %vm994, %v990, 1326507024
    %v1005 = vsel %vm993, %v987, %v1004
    %v1006 = vsel %vm992, %v1003, %v1005
    %v1007 = vshll.u32 %v967, 8
    %v1008 = vand.u32 %v1007, 65535
    %v1009 = vshrl.u32 %v1007, 16
    %v1010 = vand.u32 %v1006, 65535
    %v1011 = vshrl.u32 %v1006, 16
    %v1012 = vmul.u32 %v1008, %v1010
    %v1013 = vmul.u32 %v1008, %v1011
    %v1014 = vmul.u32 %v1009, %v1010
    %v1015 = vmul.u32 %v1009, %v1011
    %v1016 = vshll.u32 %v1013, 16
    %v1017 = vshrl.u32 %v1013, 16
    %v1018 = vshll.u32 %v1014, 16
    %v1019 = vshrl.u32 %v1014, 16
    %vm1020 = vc.u32 %v1012, %v1016
    %v1021 = vsel %vm1020, 1, 0
    %v1022 = vadd.s32 %v1012, %v1016
    %v1023 = vadd.s32 %v1015, %v1021
    %vm1024 = vc.u32 %v1022, %v1018
    %v1025 = vsel %vm1024, 1, 0
    %v1026 = vadd.s32 %v1022, %v1018
    %v1027 = vadd.s32 %v1023, %v1025
    %v1028 = vadd.s32 %v1027, %v1017
    %v1029 = vadd.s32 %v1028, %v1019
    %v1030 = vand.u32 %v1007, 65535
    %v1031 = vshrl.u32 %v1007, 16
    %v1032 = vand.u32 %v1002, 65535
    %v1033 = vshrl.u32 %v1002, 16
    %v1034 = vmul.u32 %v1030, %v1032
    %v1035 = vmul.u32 %v1030, %v1033
    %v1036 = vmul.u32 %v1031, %v1032
    %v1037 = vmul.u32 %v1031, %v1033
    %v1038 = vshll.u32 %v1035, 16
    %v1039 = vshrl.u32 %v1035, 16
    %v1040 = vshll.u32 %v1036, 16
    %v1041 = vshrl.u32 %v1036, 16
    %vm1042 = vc.u32 %v1034, %v1038
    %v1043 = vsel %vm1042, 1, 0
    %v1044 = vadd.s32 %v1034, %v1038
    %v1045 = vadd.s32 %v1037, %v1043
    %vm1046 = vc.u32 %v1044, %v1040
    %v1047 = vsel %vm1046, 1, 0
    %v1048 = vadd.s32 %v1044, %v1040
    %v1049 = vadd.s32 %v1045, %v1047
    %v1050 = vadd.s32 %v1049, %v1039
    %v1051 = vadd.s32 %v1050, %v1041
    %v1052 = vmul.u32 %v1007, %v998
    %v1053 = vadd.s32 %v1029, %v1048
    %vm1054 = vc.u32 %v1029, %v1048
    %v1055 = vadd.s32 %v1051, 1
    %v1056 = vsel %vm1054, %v1055, %v1051
    %v1057 = vadd.s32 %v1052, %v1056
    %v1058 = vadd.s32 %v1057, 536870912
    %v1059 = vshrl.u32 %v1058, 30
    %v1060 = vshll.u32 %v1059, 30
    %v1061 = vsub.s32 %v1057, %v1060
    %vm1062 = vcmp.lt.s32.totalorder %v1061, 0
    %v1063 = vsub.s32 0, %v1061
    %v1064 = vsel %vm1062, %v1063, %v1061
    %v1065 = vclz %v1064
    %v1066 = vsub.s32 %v1065, 2
    %vm1067 = vcmp.gt.s32.totalorder 0, %v1066
    %v1068 = vsel %vm1067, 0, %v1066
    %v1069 = vsub.s32 32, %v1068
    %v1070 = vshll.u32 %v1061, %v1068
    %v1071 = vshrl.u32 %v1053, %v1069
    %v1072 = vor.u32 %v1070, %v1071
    %v1073 = vsub.s32 4294967266, %v1068
    %v1074 = vadd.s32 %v1073, 127
    %v1075 = vshll.u32 %v1074, 23
    %v1076 = vor.u32 4788187, %v1075
    %v1077 = vand.u32 2147483647, %v1076
    %v1079 = vcvt.s32.f32 %v1072
    %v1080 = vmul.f32 %v1079, %v1077
    %v1081 = vxor.u32 %v1080, 2147483648
    %v1082 = vsel %vm961, %v1081, %v1080
    %v1083 = vsub.s32 4, %v1059
    %v1084 = vsel %vm961, %v1083, %v1059
    %v1085 = vsel %vm960, %v25, %v1082
    %v1086 = vsel %vm960, 0, %v1084
    %v1087 = vmul.f32 %v1085, %v1085
    %v1088 = vmul.f32 %v1087, -0.001358992
    %v1089 = vadd.f32 %v1088, 0.041655596
    %v1090 = vmul.f32 %v1087, %v1089
    %v1091 = vadd.f32 %v1090, -0.4999988
    %v1092 = vmul.f32 %v1087, %v1091
    %v1093 = vadd.f32 1.0, %v1092
    %v1094 = vmul.f32 %v1085, %v1085
    %v1095 = vmul.f32 %v1094, -0.00019511016
    %v1096 = vadd.f32 %v1095, 0.008332121
    %v1097 = vmul.f32 %v1094, %v1096
    %v1098 = vadd.f32 %v1097, -0.16666654
    %v1099 = vmul.f32 %v1094, %v1098
    %v1100 = vadd.f32 %v1099, 1.0
    %v1101 = vmul.f32 %v1100, %v1085
    %vm1102 = vweird.f32 %v25
    %v1103 = vand.u32 %v1086, 3
    %vm1104 = vcmp.lt.s32.totalorder %v1103, 2
    %vm1105 = vcmp.eq.s32.totalorder %v1103, 0
    %v1106 = vxor.u32 %v1101, 2147483648
    %v1107 = vsel %vm1105, %v1093, %v1106
    %vm1108 = vcmp.eq.s32.totalorder %v1103, 2
    %v1109 = vxor.u32 %v1093, 2147483648
    %v1110 = vsel %vm1108, %v1109, %v1101
    %v1111 = vsel %vm1104, %v1107, %v1110
    %v1112 = vsel %vm1102, nan, %v1111
    %v1113 = vand.u32 2147483647, %v26
    %vm1114 = vcmp.le.f32.partialorder %v1113, 0.7853982
    %vm1115 = vcmp.lt.s32.totalorder %v26, 0
    %v1116 = vand.u32 %v26, 2139095040
    %v1117 = vshrl.u32 %v1116, 23
    %v1118 = vsub.s32 %v1117, 127
    %v1119 = vand.u32 2147483647, %v26
    %v1120 = vand.u32 %v1119, 8388607
    %v1121 = vor.u32 %v1120, 8388608
    %v1122 = vsub.s32 0, %v1121
    %v1123 = vadd.s32 %v1118, 1
    %vm1124 = vcmp.gt.s32.totalorder %v1123, 0
    %v1125 = vsel %vm1124, %v1123, 0
    %v1126 = vshrl.u32 %v1125, 5
    %v1127 = vand.u32 %v1125, 31
    %v1128 = vsub.s32 32, %v1127
    %v1129 = vshrl.u32 683565275, %v1128
    %v1130 = vshll.u32 683565275, %v1127
    %v1131 = vshrl.u32 2475754826, %v1128
    %v1132 = vor.u32 %v1130, %v1131
    %v1133 = vshll.u32 2475754826, %v1127
    %v1134 = vshrl.u32 2131351028, %v1128
    %v1135 = vor.u32 %v1133, %v1134
    %v1136 = vshll.u32 2131351028, %v1127
    %v1137 = vshrl.u32 2102212464, %v1128
    %v1138 = vor.u32 %v1136, %v1137
    %v1139 = vshll.u32 2102212464, %v1127
    %v1140 = vshrl.u32 920167782, %v1128
    %v1141 = vor.u32 %v1139, %v1140
    %v1142 = vshll.u32 920167782, %v1127
    %v1143 = vshrl.u32 1326507024, %v1128
    %v1144 = vor.u32 %v1142, %v1143
    %vm1145 = vcmp.lt.s32.totalorder %v1126, 1
    %vm1146 = vcmp.lt.s32.totalorder %v1126, 2
    %vm1147 = vcmp.lt.s32.totalorder %v1126, 3
    %vm1148 = vcmp.lt.s32.totalorder %v1126, 4
    %v1149 = vsel %vm1145, %v1129, %v1132
    %v1150 = vsel %vm1148, %v1138, 2102212464
    %v1151 = vsel %vm1147, %v1135, %v1150
    %v1152 = vsel %vm1146, %v1149, %v1151
    %v1153 = vsel %vm1145, %v1132, %v1135
    %v1154 = vsel %vm1148, %v1141, 920167782
    %v1155 = vsel %vm1147, %v1138, %v1154
    %v1156 = vsel %vm1146, %v1153, %v1155
    %v1157 = vsel %vm1145, %v1135, %v1138
    %v1158 = vsel %vm1148, %v1144, 1326507024
    %v1159 = vsel %vm1147, %v1141, %v1158
    %v1160 = vsel %vm1146, %v1157, %v1159
    %v1161 = vshll.u32 %v1121, 8
    %v1162 = vand.u32 %v1161, 65535
    %v1163 = vshrl.u32 %v1161, 16
    %v1164 = vand.u32 %v1160, 65535
    %v1165 = vshrl.u32 %v1160, 16
    %v1166 = vmul.u32 %v1162, %v1164
    %v1167 = vmul.u32 %v1162, %v1165
    %v1168 = vmul.u32 %v1163, %v1164
    %v1169 = vmul.u32 %v1163, %v1165
    %v1170 = vshll.u32 %v1167, 16
    %v1171 = vshrl.u32 %v1167, 16
    %v1172 = vshll.u32 %v1168, 16
    %v1173 = vshrl.u32 %v1168, 16
    %vm1174 = vc.u32 %v1166, %v1170
    %v1175 = vsel %vm1174, 1, 0
    %v1176 = vadd.s32 %v1166, %v1170
    %v1177 = vadd.s32 %v1169, %v1175
    %vm1178 = vc.u32 %v1176, %v1172
    %v1179 = vsel %vm1178, 1, 0
    %v1180 = vadd.s32 %v1176, %v1172
    %v1181 = vadd.s32 %v1177, %v1179
    %v1182 = vadd.s32 %v1181, %v1171
    %v1183 = vadd.s32 %v1182, %v1173
    %v1184 = vand.u32 %v1161, 65535
    %v1185 = vshrl.u32 %v1161, 16
    %v1186 = vand.u32 %v1156, 65535
    %v1187 = vshrl.u32 %v1156, 16
    %v1188 = vmul.u32 %v1184, %v1186
    %v1189 = vmul.u32 %v1184, %v1187
    %v1190 = vmul.u32 %v1185, %v1186
    %v1191 = vmul.u32 %v1185, %v1187
    %v1192 = vshll.u32 %v1189, 16
    %v1193 = vshrl.u32 %v1189, 16
    %v1194 = vshll.u32 %v1190, 16
    %v1195 = vshrl.u32 %v1190, 16
    %vm1196 = vc.u32 %v1188, %v1192
    %v1197 = vsel %vm1196, 1, 0
    %v1198 = vadd.s32 %v1188, %v1192
    %v1199 = vadd.s32 %v1191, %v1197
    %vm1200 = vc.u32 %v1198, %v1194
    %v1201 = vsel %vm1200, 1, 0
    %v1202 = vadd.s32 %v1198, %v1194
    %v1203 = vadd.s32 %v1199, %v1201
    %v1204 = vadd.s32 %v1203, %v1193
    %v1205 = vadd.s32 %v1204, %v1195
    %v1206 = vmul.u32 %v1161, %v1152
    %v1207 = vadd.s32 %v1183, %v1202
    %vm1208 = vc.u32 %v1183, %v1202
    %v1209 = vadd.s32 %v1205, 1
    %v1210 = vsel %vm1208, %v1209, %v1205
    %v1211 = vadd.s32 %v1206, %v1210
    %v1212 = vadd.s32 %v1211, 536870912
    %v1213 = vshrl.u32 %v1212, 30
    %v1214 = vshll.u32 %v1213, 30
    %v1215 = vsub.s32 %v1211, %v1214
    %vm1216 = vcmp.lt.s32.totalorder %v1215, 0
    %v1217 = vsub.s32 0, %v1215
    %v1218 = vsel %vm1216, %v1217, %v1215
    %v1219 = vclz %v1218
    %v1220 = vsub.s32 %v1219, 2
    %vm1221 = vcmp.gt.s32.totalorder 0, %v1220
    %v1222 = vsel %vm1221, 0, %v1220
    %v1223 = vsub.s32 32, %v1222
    %v1224 = vshll.u32 %v1215, %v1222
    %v1225 = vshrl.u32 %v1207, %v1223
    %v1226 = vor.u32 %v1224, %v1225
    %v1227 = vsub.s32 4294967266, %v1222
    %v1228 = vadd.s32 %v1227, 127
    %v1229 = vshll.u32 %v1228, 23
    %v1230 = vor.u32 4788187, %v1229
    %v1231 = vand.u32 2147483647, %v1230
    %v1233 = vcvt.s32.f32 %v1226
    %v1234 = vmul.f32 %v1233, %v1231
    %v1235 = vxor.u32 %v1234, 2147483648
    %v1236 = vsel %vm1115, %v1235, %v1234
    %v1237 = vsub.s32 4, %v1213
    %v1238 = vsel %vm1115, %v1237, %v1213
    %v1239 = vsel %vm1114, %v26, %v1236
    %v1240 = vsel %vm1114, 0, %v1238
    %v1241 = vmul.f32 %v1239, %v1239
    %v1242 = vmul.f32 %v1241, -0.001358992
    %v1243 = vadd.f32 %v1242, 0.041655596
    %v1244 = vmul.f32 %v1241, %v1243
    %v1245 = vadd.f32 %v1244, -0.4999988
    %v1246 = vmul.f32 %v1241, %v1245
    %v1247 = vadd.f32 1.0, %v1246
    %v1248 = vmul.f32 %v1239, %v1239
    %v1249 = vmul.f32 %v1248, -0.00019511016
    %v1250 = vadd.f32 %v1249, 0.008332121
    %v1251 = vmul.f32 %v1248, %v1250
    %v1252 = vadd.f32 %v1251, -0.16666654
    %v1253 = vmul.f32 %v1248, %v1252
    %v1254 = vadd.f32 %v1253, 1.0
    %v1255 = vmul.f32 %v1254, %v1239
    %vm1256 = vweird.f32 %v26
    %v1257 = vand.u32 %v1240, 3
    %vm1258 = vcmp.lt.s32.totalorder %v1257, 2
    %vm1259 = vcmp.eq.s32.totalorder %v1257, 0
    %v1260 = vxor.u32 %v1255, 2147483648
    %v1261 = vsel %vm1259, %v1247, %v1260
    %vm1262 = vcmp.eq.s32.totalorder %v1257, 2
    %v1263 = vxor.u32 %v1247, 2147483648
    %v1264 = vsel %vm1262, %v1263, %v1255
    %v1265 = vsel %vm1258, %v1261, %v1264
    %v1266 = vsel %vm1256, nan, %v1265
    %s1267 = scalar_lea.vmem [#allocation5], 32
    %1268 = vst [vmem:[%s1267] sm:$0xff] %v185
    %1269 = vst [vmem:[%s1267 + $0x8] sm:$0xff] %v340
    %1270 = vst [vmem:[%s1267 + $0x10] sm:$0xff] %v495
    %1271 = vst [vmem:[%s1267 + $0x18] sm:$0xff] %v650
    %s1272 = scalar_lea.vmem [#allocation5], 64
    %1273 = vst [vmem:[%s1272] sm:$0xff] %v804
    %1274 = vst [vmem:[%s1272 + $0x8] sm:$0xff] %v958
    %1275 = vst [vmem:[%s1272 + $0x10] sm:$0xff] %v1112
    %1276 = vst [vmem:[%s1272 + $0x18] sm:$0xff] %v1266
    %v1277 = vmul.f32 %v185, 2.0
    %v1278 = vmul.f32 %v340, 2.0
    %v1279 = vmul.f32 %v495, 2.0
    %v1280 = vmul.f32 %v650, 2.0
    %v1281 = vmul.f32 %v1277, %v804
    %v1282 = vmul.f32 %v1278, %v958
    %v1283 = vmul.f32 %v1279, %v1112
    %v1284 = vmul.f32 %v1280, %v1266
    %v1285 = vmul.f32 %v1277, %v185
    %v1286 = vmul.f32 %v1278, %v340
    %v1287 = vmul.f32 %v1279, %v495
    %v1288 = vmul.f32 %v1280, %v650
    %v1289 = vsub.f32 1.0, %v1285
    %v1290 = vsub.f32 1.0, %v1286
    %v1291 = vsub.f32 1.0, %v1287
    %v1292 = vsub.f32 1.0, %v1288
    %s1293 = scalar_lea.vmem [#allocation5], 96
    %1294 = vst [vmem:[%s1293] sm:$0xff] %v1281
    %1295 = vst [vmem:[%s1293 + $0x8] sm:$0xff] %v1282
    %1296 = vst [vmem:[%s1293 + $0x10] sm:$0xff] %v1283
    %1297 = vst [vmem:[%s1293 + $0x18] sm:$0xff] %v1284
    %s1298 = scalar_lea.vmem [#allocation5], 128
    %1299 = vst [vmem:[%s1298] sm:$0xff] %v1289
    %1300 = vst [vmem:[%s1298 + $0x8] sm:$0xff] %v1290
    %1301 = vst [vmem:[%s1298 + $0x10] sm:$0xff] %v1291
    %1302 = vst [vmem:[%s1298 + $0x18] sm:$0xff] %v1292
    %v1303 = vmul.f32 %v1281, 2.0
    %v1304 = vmul.f32 %v1282, 2.0
    %v1305 = vmul.f32 %v1283, 2.0
    %v1306 = vmul.f32 %v1284, 2.0
    %v1307 = vmul.f32 %v1303, %v1289
    %v1308 = vmul.f32 %v1304, %v1290
    %v1309 = vmul.f32 %v1305, %v1291
    %v1310 = vmul.f32 %v1306, %v1292
    %v1311 = vmul.f32 %v1303, %v1281
    %v1312 = vmul.f32 %v1304, %v1282
    %v1313 = vmul.f32 %v1305, %v1283
    %v1314 = vmul.f32 %v1306, %v1284
    %v1315 = vsub.f32 1.0, %v1311
    %v1316 = vsub.f32 1.0, %v1312
    %v1317 = vsub.f32 1.0, %v1313
    %v1318 = vsub.f32 1.0, %v1314
    %s1319 = scalar_lea.vmem [#allocation5], 160
    %1320 = vst [vmem:[%s1319] sm:$0xff] %v1307
    %1321 = vst [vmem:[%s1319 + $0x8] sm:$0xff] %v1308
    %1322 = vst [vmem:[%s1319 + $0x10] sm:$0xff] %v1309
    %1323 = vst [vmem:[%s1319 + $0x18] sm:$0xff] %v1310
    %s1324 = scalar_lea.vmem [#allocation5], 192
    %1325 = vst [vmem:[%s1324] sm:$0xff] %v1315
    %1326 = vst [vmem:[%s1324 + $0x8] sm:$0xff] %v1316
    %1327 = vst [vmem:[%s1324 + $0x10] sm:$0xff] %v1317
    %1328 = vst [vmem:[%s1324 + $0x18] sm:$0xff] %v1318
    %v1329 = vmul.f32 %v1307, 2.0
    %v1330 = vmul.f32 %v1308, 2.0
    %v1331 = vmul.f32 %v1309, 2.0
    %v1332 = vmul.f32 %v1310, 2.0
    %v1333 = vmul.f32 %v1329, %v1315
    %v1334 = vmul.f32 %v1330, %v1316
    %v1335 = vmul.f32 %v1331, %v1317
    %v1336 = vmul.f32 %v1332, %v1318
    %v1337 = vmul.f32 %v1329, %v1307
    %v1338 = vmul.f32 %v1330, %v1308
    %v1339 = vmul.f32 %v1331, %v1309
    %v1340 = vmul.f32 %v1332, %v1310
    %v1341 = vsub.f32 1.0, %v1337
    %v1342 = vsub.f32 1.0, %v1338
    %v1343 = vsub.f32 1.0, %v1339
    %v1344 = vsub.f32 1.0, %v1340
    %s1345 = scalar_lea.vmem [#allocation5], 224
    %1346 = vst [vmem:[%s1345] sm:$0xff] %v1333
    %1347 = vst [vmem:[%s1345 + $0x8] sm:$0xff] %v1334
    %1348 = vst [vmem:[%s1345 + $0x10] sm:$0xff] %v1335
    %1349 = vst [vmem:[%s1345 + $0x18] sm:$0xff] %v1336
    %s1350 = scalar_lea.vmem [#allocation5], 256
    %1351 = vst [vmem:[%s1350] sm:$0xff] %v1341
    %1352 = vst [vmem:[%s1350 + $0x8] sm:$0xff] %v1342
    %1353 = vst [vmem:[%s1350 + $0x10] sm:$0xff] %v1343
    %1354 = vst [vmem:[%s1350 + $0x18] sm:$0xff] %v1344
    %v1355 = vmul.f32 %v23, 16.0
    %v1356 = vmul.f32 %v24, 16.0
    %v1357 = vmul.f32 %v25, 16.0
    %v1358 = vmul.f32 %v26, 16.0
    %v1359 = vand.u32 2147483647, %v1355
    %vm1360 = vcmp.le.f32.partialorder %v1359, 0.7853982
    %vm1361 = vcmp.lt.s32.totalorder %v1355, 0
    %v1362 = vand.u32 %v1355, 2139095040
    %v1363 = vshrl.u32 %v1362, 23
    %v1364 = vsub.s32 %v1363, 127
    %v1365 = vand.u32 2147483647, %v1355
    %v1366 = vand.u32 %v1365, 8388607
    %v1367 = vor.u32 %v1366, 8388608
    %v1368 = vsub.s32 0, %v1367
    %v1369 = vadd.s32 %v1364, 1
    %vm1370 = vcmp.gt.s32.totalorder %v1369, 0
    %v1371 = vsel %vm1370, %v1369, 0
    %v1372 = vshrl.u32 %v1371, 5
    %v1373 = vand.u32 %v1371, 31
    %v1374 = vsub.s32 32, %v1373
    %v1375 = vshrl.u32 683565275, %v1374
    %v1376 = vshll.u32 683565275, %v1373
    %v1377 = vshrl.u32 2475754826, %v1374
    %v1378 = vor.u32 %v1376, %v1377
    %v1379 = vshll.u32 2475754826, %v1373
    %v1380 = vshrl.u32 2131351028, %v1374
    %v1381 = vor.u32 %v1379, %v1380
    %v1382 = vshll.u32 2131351028, %v1373
    %v1383 = vshrl.u32 2102212464, %v1374
    %v1384 = vor.u32 %v1382, %v1383
    %v1385 = vshll.u32 2102212464, %v1373
    %v1386 = vshrl.u32 920167782, %v1374
    %v1387 = vor.u32 %v1385, %v1386
    %v1388 = vshll.u32 920167782, %v1373
    %v1389 = vshrl.u32 1326507024, %v1374
    %v1390 = vor.u32 %v1388, %v1389
    %vm1391 = vcmp.lt.s32.totalorder %v1372, 1
    %vm1392 = vcmp.lt.s32.totalorder %v1372, 2
    %vm1393 = vcmp.lt.s32.totalorder %v1372, 3
    %vm1394 = vcmp.lt.s32.totalorder %v1372, 4
    %v1395 = vsel %vm1391, %v1375, %v1378
    %v1396 = vsel %vm1394, %v1384, 2102212464
    %v1397 = vsel %vm1393, %v1381, %v1396
    %v1398 = vsel %vm1392, %v1395, %v1397
    %v1399 = vsel %vm1391, %v1378, %v1381
    %v1400 = vsel %vm1394, %v1387, 920167782
    %v1401 = vsel %vm1393, %v1384, %v1400
    %v1402 = vsel %vm1392, %v1399, %v1401
    %v1403 = vsel %vm1391, %v1381, %v1384
    %v1404 = vsel %vm1394, %v1390, 1326507024
    %v1405 = vsel %vm1393, %v1387, %v1404
    %v1406 = vsel %vm1392, %v1403, %v1405
    %v1407 = vshll.u32 %v1367, 8
    %v1408 = vand.u32 %v1407, 65535
    %v1409 = vshrl.u32 %v1407, 16
    %v1410 = vand.u32 %v1406, 65535
    %v1411 = vshrl.u32 %v1406, 16
    %v1412 = vmul.u32 %v1408, %v1410
    %v1413 = vmul.u32 %v1408, %v1411
    %v1414 = vmul.u32 %v1409, %v1410
    %v1415 = vmul.u32 %v1409, %v1411
    %v1416 = vshll.u32 %v1413, 16
    %v1417 = vshrl.u32 %v1413, 16
    %v1418 = vshll.u32 %v1414, 16
    %v1419 = vshrl.u32 %v1414, 16
    %vm1420 = vc.u32 %v1412, %v1416
    %v1421 = vsel %vm1420, 1, 0
    %v1422 = vadd.s32 %v1412, %v1416
    %v1423 = vadd.s32 %v1415, %v1421
    %vm1424 = vc.u32 %v1422, %v1418
    %v1425 = vsel %vm1424, 1, 0
    %v1426 = vadd.s32 %v1422, %v1418
    %v1427 = vadd.s32 %v1423, %v1425
    %v1428 = vadd.s32 %v1427, %v1417
    %v1429 = vadd.s32 %v1428, %v1419
    %v1430 = vand.u32 %v1407, 65535
    %v1431 = vshrl.u32 %v1407, 16
    %v1432 = vand.u32 %v1402, 65535
    %v1433 = vshrl.u32 %v1402, 16
    %v1434 = vmul.u32 %v1430, %v1432
    %v1435 = vmul.u32 %v1430, %v1433
    %v1436 = vmul.u32 %v1431, %v1432
    %v1437 = vmul.u32 %v1431, %v1433
    %v1438 = vshll.u32 %v1435, 16
    %v1439 = vshrl.u32 %v1435, 16
    %v1440 = vshll.u32 %v1436, 16
    %v1441 = vshrl.u32 %v1436, 16
    %vm1442 = vc.u32 %v1434, %v1438
    %v1443 = vsel %vm1442, 1, 0
    %v1444 = vadd.s32 %v1434, %v1438
    %v1445 = vadd.s32 %v1437, %v1443
    %vm1446 = vc.u32 %v1444, %v1440
    %v1447 = vsel %vm1446, 1, 0
    %v1448 = vadd.s32 %v1444, %v1440
    %v1449 = vadd.s32 %v1445, %v1447
    %v1450 = vadd.s32 %v1449, %v1439
    %v1451 = vadd.s32 %v1450, %v1441
    %v1452 = vmul.u32 %v1407, %v1398
    %v1453 = vadd.s32 %v1429, %v1448
    %vm1454 = vc.u32 %v1429, %v1448
    %v1455 = vadd.s32 %v1451, 1
    %v1456 = vsel %vm1454, %v1455, %v1451
    %v1457 = vadd.s32 %v1452, %v1456
    %v1458 = vadd.s32 %v1457, 536870912
    %v1459 = vshrl.u32 %v1458, 30
    %v1460 = vshll.u32 %v1459, 30
    %v1461 = vsub.s32 %v1457, %v1460
    %vm1462 = vcmp.lt.s32.totalorder %v1461, 0
    %v1463 = vsub.s32 0, %v1461
    %v1464 = vsel %vm1462, %v1463, %v1461
    %v1465 = vclz %v1464
    %v1466 = vsub.s32 %v1465, 2
    %vm1467 = vcmp.gt.s32.totalorder 0, %v1466
    %v1468 = vsel %vm1467, 0, %v1466
    %v1469 = vsub.s32 32, %v1468
    %v1470 = vshll.u32 %v1461, %v1468
    %v1471 = vshrl.u32 %v1453, %v1469
    %v1472 = vor.u32 %v1470, %v1471
    %v1473 = vsub.s32 4294967266, %v1468
    %v1474 = vadd.s32 %v1473, 127
    %v1475 = vshll.u32 %v1474, 23
    %v1476 = vor.u32 4788187, %v1475
    %v1477 = vand.u32 2147483647, %v1476
    %v1479 = vcvt.s32.f32 %v1472
    %v1480 = vmul.f32 %v1479, %v1477
    %v1481 = vxor.u32 %v1480, 2147483648
    %v1482 = vsel %vm1361, %v1481, %v1480
    %v1483 = vsub.s32 4, %v1459
    %v1484 = vsel %vm1361, %v1483, %v1459
    %v1485 = vsel %vm1360, %v1355, %v1482
    %v1486 = vsel %vm1360, 0, %v1484
    %v1487 = vmul.f32 %v1485, %v1485
    %v1488 = vmul.f32 %v1487, -0.001358992
    %v1489 = vadd.f32 %v1488, 0.041655596
    %v1490 = vmul.f32 %v1487, %v1489
    %v1491 = vadd.f32 %v1490, -0.4999988
    %v1492 = vmul.f32 %v1487, %v1491
    %v1493 = vadd.f32 1.0, %v1492
    %v1494 = vmul.f32 %v1485, %v1485
    %v1495 = vmul.f32 %v1494, -0.00019511016
    %v1496 = vadd.f32 %v1495, 0.008332121
    %v1497 = vmul.f32 %v1494, %v1496
    %v1498 = vadd.f32 %v1497, -0.16666654
    %v1499 = vmul.f32 %v1494, %v1498
    %v1500 = vadd.f32 %v1499, 1.0
    %v1501 = vmul.f32 %v1500, %v1485
    %vm1502 = vweird.f32 %v1355
    %v1503 = vadd.s32 %v1486, 3
    %v1504 = vand.u32 %v1503, 3
    %vm1505 = vcmp.lt.s32.totalorder %v1504, 2
    %vm1506 = vcmp.eq.s32.totalorder %v1504, 0
    %v1507 = vxor.u32 %v1501, 2147483648
    %v1508 = vsel %vm1506, %v1493, %v1507
    %vm1509 = vcmp.eq.s32.totalorder %v1504, 2
    %v1510 = vxor.u32 %v1493, 2147483648
    %v1511 = vsel %vm1509, %v1510, %v1501
    %v1512 = vsel %vm1505, %v1508, %v1511
    %v1513 = vsel %vm1502, nan, %v1512
    %v1514 = vand.u32 2147483647, %v1356
    %vm1515 = vcmp.le.f32.partialorder %v1514, 0.7853982
    %vm1516 = vcmp.lt.s32.totalorder %v1356, 0
    %v1517 = vand.u32 %v1356, 2139095040
    %v1518 = vshrl.u32 %v1517, 23
    %v1519 = vsub.s32 %v1518, 127
    %v1520 = vand.u32 2147483647, %v1356
    %v1521 = vand.u32 %v1520, 8388607
    %v1522 = vor.u32 %v1521, 8388608
    %v1523 = vsub.s32 0, %v1522
    %v1524 = vadd.s32 %v1519, 1
    %vm1525 = vcmp.gt.s32.totalorder %v1524, 0
    %v1526 = vsel %vm1525, %v1524, 0
    %v1527 = vshrl.u32 %v1526, 5
    %v1528 = vand.u32 %v1526, 31
    %v1529 = vsub.s32 32, %v1528
    %v1530 = vshrl.u32 683565275, %v1529
    %v1531 = vshll.u32 683565275, %v1528
    %v1532 = vshrl.u32 2475754826, %v1529
    %v1533 = vor.u32 %v1531, %v1532
    %v1534 = vshll.u32 2475754826, %v1528
    %v1535 = vshrl.u32 2131351028, %v1529
    %v1536 = vor.u32 %v1534, %v1535
    %v1537 = vshll.u32 2131351028, %v1528
    %v1538 = vshrl.u32 2102212464, %v1529
    %v1539 = vor.u32 %v1537, %v1538
    %v1540 = vshll.u32 2102212464, %v1528
    %v1541 = vshrl.u32 920167782, %v1529
    %v1542 = vor.u32 %v1540, %v1541
    %v1543 = vshll.u32 920167782, %v1528
    %v1544 = vshrl.u32 1326507024, %v1529
    %v1545 = vor.u32 %v1543, %v1544
    %vm1546 = vcmp.lt.s32.totalorder %v1527, 1
    %vm1547 = vcmp.lt.s32.totalorder %v1527, 2
    %vm1548 = vcmp.lt.s32.totalorder %v1527, 3
    %vm1549 = vcmp.lt.s32.totalorder %v1527, 4
    %v1550 = vsel %vm1546, %v1530, %v1533
    %v1551 = vsel %vm1549, %v1539, 2102212464
    %v1552 = vsel %vm1548, %v1536, %v1551
    %v1553 = vsel %vm1547, %v1550, %v1552
    %v1554 = vsel %vm1546, %v1533, %v1536
    %v1555 = vsel %vm1549, %v1542, 920167782
    %v1556 = vsel %vm1548, %v1539, %v1555
    %v1557 = vsel %vm1547, %v1554, %v1556
    %v1558 = vsel %vm1546, %v1536, %v1539
    %v1559 = vsel %vm1549, %v1545, 1326507024
    %v1560 = vsel %vm1548, %v1542, %v1559
    %v1561 = vsel %vm1547, %v1558, %v1560
    %v1562 = vshll.u32 %v1522, 8
    %v1563 = vand.u32 %v1562, 65535
    %v1564 = vshrl.u32 %v1562, 16
    %v1565 = vand.u32 %v1561, 65535
    %v1566 = vshrl.u32 %v1561, 16
    %v1567 = vmul.u32 %v1563, %v1565
    %v1568 = vmul.u32 %v1563, %v1566
    %v1569 = vmul.u32 %v1564, %v1565
    %v1570 = vmul.u32 %v1564, %v1566
    %v1571 = vshll.u32 %v1568, 16
    %v1572 = vshrl.u32 %v1568, 16
    %v1573 = vshll.u32 %v1569, 16
    %v1574 = vshrl.u32 %v1569, 16
    %vm1575 = vc.u32 %v1567, %v1571
    %v1576 = vsel %vm1575, 1, 0
    %v1577 = vadd.s32 %v1567, %v1571
    %v1578 = vadd.s32 %v1570, %v1576
    %vm1579 = vc.u32 %v1577, %v1573
    %v1580 = vsel %vm1579, 1, 0
    %v1581 = vadd.s32 %v1577, %v1573
    %v1582 = vadd.s32 %v1578, %v1580
    %v1583 = vadd.s32 %v1582, %v1572
    %v1584 = vadd.s32 %v1583, %v1574
    %v1585 = vand.u32 %v1562, 65535
    %v1586 = vshrl.u32 %v1562, 16
    %v1587 = vand.u32 %v1557, 65535
    %v1588 = vshrl.u32 %v1557, 16
    %v1589 = vmul.u32 %v1585, %v1587
    %v1590 = vmul.u32 %v1585, %v1588
    %v1591 = vmul.u32 %v1586, %v1587
    %v1592 = vmul.u32 %v1586, %v1588
    %v1593 = vshll.u32 %v1590, 16
    %v1594 = vshrl.u32 %v1590, 16
    %v1595 = vshll.u32 %v1591, 16
    %v1596 = vshrl.u32 %v1591, 16
    %vm1597 = vc.u32 %v1589, %v1593
    %v1598 = vsel %vm1597, 1, 0
    %v1599 = vadd.s32 %v1589, %v1593
    %v1600 = vadd.s32 %v1592, %v1598
    %vm1601 = vc.u32 %v1599, %v1595
    %v1602 = vsel %vm1601, 1, 0
    %v1603 = vadd.s32 %v1599, %v1595
    %v1604 = vadd.s32 %v1600, %v1602
    %v1605 = vadd.s32 %v1604, %v1594
    %v1606 = vadd.s32 %v1605, %v1596
    %v1607 = vmul.u32 %v1562, %v1553
    %v1608 = vadd.s32 %v1584, %v1603
    %vm1609 = vc.u32 %v1584, %v1603
    %v1610 = vadd.s32 %v1606, 1
    %v1611 = vsel %vm1609, %v1610, %v1606
    %v1612 = vadd.s32 %v1607, %v1611
    %v1613 = vadd.s32 %v1612, 536870912
    %v1614 = vshrl.u32 %v1613, 30
    %v1615 = vshll.u32 %v1614, 30
    %v1616 = vsub.s32 %v1612, %v1615
    %vm1617 = vcmp.lt.s32.totalorder %v1616, 0
    %v1618 = vsub.s32 0, %v1616
    %v1619 = vsel %vm1617, %v1618, %v1616
    %v1620 = vclz %v1619
    %v1621 = vsub.s32 %v1620, 2
    %vm1622 = vcmp.gt.s32.totalorder 0, %v1621
    %v1623 = vsel %vm1622, 0, %v1621
    %v1624 = vsub.s32 32, %v1623
    %v1625 = vshll.u32 %v1616, %v1623
    %v1626 = vshrl.u32 %v1608, %v1624
    %v1627 = vor.u32 %v1625, %v1626
    %v1628 = vsub.s32 4294967266, %v1623
    %v1629 = vadd.s32 %v1628, 127
    %v1630 = vshll.u32 %v1629, 23
    %v1631 = vor.u32 4788187, %v1630
    %v1632 = vand.u32 2147483647, %v1631
    %v1634 = vcvt.s32.f32 %v1627
    %v1635 = vmul.f32 %v1634, %v1632
    %v1636 = vxor.u32 %v1635, 2147483648
    %v1637 = vsel %vm1516, %v1636, %v1635
    %v1638 = vsub.s32 4, %v1614
    %v1639 = vsel %vm1516, %v1638, %v1614
    %v1640 = vsel %vm1515, %v1356, %v1637
    %v1641 = vsel %vm1515, 0, %v1639
    %v1642 = vmul.f32 %v1640, %v1640
    %v1643 = vmul.f32 %v1642, -0.001358992
    %v1644 = vadd.f32 %v1643, 0.041655596
    %v1645 = vmul.f32 %v1642, %v1644
    %v1646 = vadd.f32 %v1645, -0.4999988
    %v1647 = vmul.f32 %v1642, %v1646
    %v1648 = vadd.f32 1.0, %v1647
    %v1649 = vmul.f32 %v1640, %v1640
    %v1650 = vmul.f32 %v1649, -0.00019511016
    %v1651 = vadd.f32 %v1650, 0.008332121
    %v1652 = vmul.f32 %v1649, %v1651
    %v1653 = vadd.f32 %v1652, -0.16666654
    %v1654 = vmul.f32 %v1649, %v1653
    %v1655 = vadd.f32 %v1654, 1.0
    %v1656 = vmul.f32 %v1655, %v1640
    %vm1657 = vweird.f32 %v1356
    %v1658 = vadd.s32 %v1641, 3
    %v1659 = vand.u32 %v1658, 3
    %vm1660 = vcmp.lt.s32.totalorder %v1659, 2
    %vm1661 = vcmp.eq.s32.totalorder %v1659, 0
    %v1662 = vxor.u32 %v1656, 2147483648
    %v1663 = vsel %vm1661, %v1648, %v1662
    %vm1664 = vcmp.eq.s32.totalorder %v1659, 2
    %v1665 = vxor.u32 %v1648, 2147483648
    %v1666 = vsel %vm1664, %v1665, %v1656
    %v1667 = vsel %vm1660, %v1663, %v1666
    %v1668 = vsel %vm1657, nan, %v1667
    %v1669 = vand.u32 2147483647, %v1357
    %vm1670 = vcmp.le.f32.partialorder %v1669, 0.7853982
    %vm1671 = vcmp.lt.s32.totalorder %v1357, 0
    %v1672 = vand.u32 %v1357, 2139095040
    %v1673 = vshrl.u32 %v1672, 23
    %v1674 = vsub.s32 %v1673, 127
    %v1675 = vand.u32 2147483647, %v1357
    %v1676 = vand.u32 %v1675, 8388607
    %v1677 = vor.u32 %v1676, 8388608
    %v1678 = vsub.s32 0, %v1677
    %v1679 = vadd.s32 %v1674, 1
    %vm1680 = vcmp.gt.s32.totalorder %v1679, 0
    %v1681 = vsel %vm1680, %v1679, 0
    %v1682 = vshrl.u32 %v1681, 5
    %v1683 = vand.u32 %v1681, 31
    %v1684 = vsub.s32 32, %v1683
    %v1685 = vshrl.u32 683565275, %v1684
    %v1686 = vshll.u32 683565275, %v1683
    %v1687 = vshrl.u32 2475754826, %v1684
    %v1688 = vor.u32 %v1686, %v1687
    %v1689 = vshll.u32 2475754826, %v1683
    %v1690 = vshrl.u32 2131351028, %v1684
    %v1691 = vor.u32 %v1689, %v1690
    %v1692 = vshll.u32 2131351028, %v1683
    %v1693 = vshrl.u32 2102212464, %v1684
    %v1694 = vor.u32 %v1692, %v1693
    %v1695 = vshll.u32 2102212464, %v1683
    %v1696 = vshrl.u32 920167782, %v1684
    %v1697 = vor.u32 %v1695, %v1696
    %v1698 = vshll.u32 920167782, %v1683
    %v1699 = vshrl.u32 1326507024, %v1684
    %v1700 = vor.u32 %v1698, %v1699
    %vm1701 = vcmp.lt.s32.totalorder %v1682, 1
    %vm1702 = vcmp.lt.s32.totalorder %v1682, 2
    %vm1703 = vcmp.lt.s32.totalorder %v1682, 3
    %vm1704 = vcmp.lt.s32.totalorder %v1682, 4
    %v1705 = vsel %vm1701, %v1685, %v1688
    %v1706 = vsel %vm1704, %v1694, 2102212464
    %v1707 = vsel %vm1703, %v1691, %v1706
    %v1708 = vsel %vm1702, %v1705, %v1707
    %v1709 = vsel %vm1701, %v1688, %v1691
    %v1710 = vsel %vm1704, %v1697, 920167782
    %v1711 = vsel %vm1703, %v1694, %v1710
    %v1712 = vsel %vm1702, %v1709, %v1711
    %v1713 = vsel %vm1701, %v1691, %v1694
    %v1714 = vsel %vm1704, %v1700, 1326507024
    %v1715 = vsel %vm1703, %v1697, %v1714
    %v1716 = vsel %vm1702, %v1713, %v1715
    %v1717 = vshll.u32 %v1677, 8
    %v1718 = vand.u32 %v1717, 65535
    %v1719 = vshrl.u32 %v1717, 16
    %v1720 = vand.u32 %v1716, 65535
    %v1721 = vshrl.u32 %v1716, 16
    %v1722 = vmul.u32 %v1718, %v1720
    %v1723 = vmul.u32 %v1718, %v1721
    %v1724 = vmul.u32 %v1719, %v1720
    %v1725 = vmul.u32 %v1719, %v1721
    %v1726 = vshll.u32 %v1723, 16
    %v1727 = vshrl.u32 %v1723, 16
    %v1728 = vshll.u32 %v1724, 16
    %v1729 = vshrl.u32 %v1724, 16
    %vm1730 = vc.u32 %v1722, %v1726
    %v1731 = vsel %vm1730, 1, 0
    %v1732 = vadd.s32 %v1722, %v1726
    %v1733 = vadd.s32 %v1725, %v1731
    %vm1734 = vc.u32 %v1732, %v1728
    %v1735 = vsel %vm1734, 1, 0
    %v1736 = vadd.s32 %v1732, %v1728
    %v1737 = vadd.s32 %v1733, %v1735
    %v1738 = vadd.s32 %v1737, %v1727
    %v1739 = vadd.s32 %v1738, %v1729
    %v1740 = vand.u32 %v1717, 65535
    %v1741 = vshrl.u32 %v1717, 16
    %v1742 = vand.u32 %v1712, 65535
    %v1743 = vshrl.u32 %v1712, 16
    %v1744 = vmul.u32 %v1740, %v1742
    %v1745 = vmul.u32 %v1740, %v1743
    %v1746 = vmul.u32 %v1741, %v1742
    %v1747 = vmul.u32 %v1741, %v1743
    %v1748 = vshll.u32 %v1745, 16
    %v1749 = vshrl.u32 %v1745, 16
    %v1750 = vshll.u32 %v1746, 16
    %v1751 = vshrl.u32 %v1746, 16
    %vm1752 = vc.u32 %v1744, %v1748
    %v1753 = vsel %vm1752, 1, 0
    %v1754 = vadd.s32 %v1744, %v1748
    %v1755 = vadd.s32 %v1747, %v1753
    %vm1756 = vc.u32 %v1754, %v1750
    %v1757 = vsel %vm1756, 1, 0
    %v1758 = vadd.s32 %v1754, %v1750
    %v1759 = vadd.s32 %v1755, %v1757
    %v1760 = vadd.s32 %v1759, %v1749
    %v1761 = vadd.s32 %v1760, %v1751
    %v1762 = vmul.u32 %v1717, %v1708
    %v1763 = vadd.s32 %v1739, %v1758
    %vm1764 = vc.u32 %v1739, %v1758
    %v1765 = vadd.s32 %v1761, 1
    %v1766 = vsel %vm1764, %v1765, %v1761
    %v1767 = vadd.s32 %v1762, %v1766
    %v1768 = vadd.s32 %v1767, 536870912
    %v1769 = vshrl.u32 %v1768, 30
    %v1770 = vshll.u32 %v1769, 30
    %v1771 = vsub.s32 %v1767, %v1770
    %vm1772 = vcmp.lt.s32.totalorder %v1771, 0
    %v1773 = vsub.s32 0, %v1771
    %v1774 = vsel %vm1772, %v1773, %v1771
    %v1775 = vclz %v1774
    %v1776 = vsub.s32 %v1775, 2
    %vm1777 = vcmp.gt.s32.totalorder 0, %v1776
    %v1778 = vsel %vm1777, 0, %v1776
    %v1779 = vsub.s32 32, %v1778
    %v1780 = vshll.u32 %v1771, %v1778
    %v1781 = vshrl.u32 %v1763, %v1779
    %v1782 = vor.u32 %v1780, %v1781
    %v1783 = vsub.s32 4294967266, %v1778
    %v1784 = vadd.s32 %v1783, 127
    %v1785 = vshll.u32 %v1784, 23
    %v1786 = vor.u32 4788187, %v1785
    %v1787 = vand.u32 2147483647, %v1786
    %v1789 = vcvt.s32.f32 %v1782
    %v1790 = vmul.f32 %v1789, %v1787
    %v1791 = vxor.u32 %v1790, 2147483648
    %v1792 = vsel %vm1671, %v1791, %v1790
    %v1793 = vsub.s32 4, %v1769
    %v1794 = vsel %vm1671, %v1793, %v1769
    %v1795 = vsel %vm1670, %v1357, %v1792
    %v1796 = vsel %vm1670, 0, %v1794
    %v1797 = vmul.f32 %v1795, %v1795
    %v1798 = vmul.f32 %v1797, -0.001358992
    %v1799 = vadd.f32 %v1798, 0.041655596
    %v1800 = vmul.f32 %v1797, %v1799
    %v1801 = vadd.f32 %v1800, -0.4999988
    %v1802 = vmul.f32 %v1797, %v1801
    %v1803 = vadd.f32 1.0, %v1802
    %v1804 = vmul.f32 %v1795, %v1795
    %v1805 = vmul.f32 %v1804, -0.00019511016
    %v1806 = vadd.f32 %v1805, 0.008332121
    %v1807 = vmul.f32 %v1804, %v1806
    %v1808 = vadd.f32 %v1807, -0.16666654
    %v1809 = vmul.f32 %v1804, %v1808
    %v1810 = vadd.f32 %v1809, 1.0
    %v1811 = vmul.f32 %v1810, %v1795
    %vm1812 = vweird.f32 %v1357
    %v1813 = vadd.s32 %v1796, 3
    %v1814 = vand.u32 %v1813, 3
    %vm1815 = vcmp.lt.s32.totalorder %v1814, 2
    %vm1816 = vcmp.eq.s32.totalorder %v1814, 0
    %v1817 = vxor.u32 %v1811, 2147483648
    %v1818 = vsel %vm1816, %v1803, %v1817
    %vm1819 = vcmp.eq.s32.totalorder %v1814, 2
    %v1820 = vxor.u32 %v1803, 2147483648
    %v1821 = vsel %vm1819, %v1820, %v1811
    %v1822 = vsel %vm1815, %v1818, %v1821
    %v1823 = vsel %vm1812, nan, %v1822
    %v1824 = vand.u32 2147483647, %v1358
    %vm1825 = vcmp.le.f32.partialorder %v1824, 0.7853982
    %vm1826 = vcmp.lt.s32.totalorder %v1358, 0
    %v1827 = vand.u32 %v1358, 2139095040
    %v1828 = vshrl.u32 %v1827, 23
    %v1829 = vsub.s32 %v1828, 127
    %v1830 = vand.u32 2147483647, %v1358
    %v1831 = vand.u32 %v1830, 8388607
    %v1832 = vor.u32 %v1831, 8388608
    %v1833 = vsub.s32 0, %v1832
    %v1834 = vadd.s32 %v1829, 1
    %vm1835 = vcmp.gt.s32.totalorder %v1834, 0
    %v1836 = vsel %vm1835, %v1834, 0
    %v1837 = vshrl.u32 %v1836, 5
    %v1838 = vand.u32 %v1836, 31
    %v1839 = vsub.s32 32, %v1838
    %v1840 = vshrl.u32 683565275, %v1839
    %v1841 = vshll.u32 683565275, %v1838
    %v1842 = vshrl.u32 2475754826, %v1839
    %v1843 = vor.u32 %v1841, %v1842
    %v1844 = vshll.u32 2475754826, %v1838
    %v1845 = vshrl.u32 2131351028, %v1839
    %v1846 = vor.u32 %v1844, %v1845
    %v1847 = vshll.u32 2131351028, %v1838
    %v1848 = vshrl.u32 2102212464, %v1839
    %v1849 = vor.u32 %v1847, %v1848
    %v1850 = vshll.u32 2102212464, %v1838
    %v1851 = vshrl.u32 920167782, %v1839
    %v1852 = vor.u32 %v1850, %v1851
    %v1853 = vshll.u32 920167782, %v1838
    %v1854 = vshrl.u32 1326507024, %v1839
    %v1855 = vor.u32 %v1853, %v1854
    %vm1856 = vcmp.lt.s32.totalorder %v1837, 1
    %vm1857 = vcmp.lt.s32.totalorder %v1837, 2
    %vm1858 = vcmp.lt.s32.totalorder %v1837, 3
    %vm1859 = vcmp.lt.s32.totalorder %v1837, 4
    %v1860 = vsel %vm1856, %v1840, %v1843
    %v1861 = vsel %vm1859, %v1849, 2102212464
    %v1862 = vsel %vm1858, %v1846, %v1861
    %v1863 = vsel %vm1857, %v1860, %v1862
    %v1864 = vsel %vm1856, %v1843, %v1846
    %v1865 = vsel %vm1859, %v1852, 920167782
    %v1866 = vsel %vm1858, %v1849, %v1865
    %v1867 = vsel %vm1857, %v1864, %v1866
    %v1868 = vsel %vm1856, %v1846, %v1849
    %v1869 = vsel %vm1859, %v1855, 1326507024
    %v1870 = vsel %vm1858, %v1852, %v1869
    %v1871 = vsel %vm1857, %v1868, %v1870
    %v1872 = vshll.u32 %v1832, 8
    %v1873 = vand.u32 %v1872, 65535
    %v1874 = vshrl.u32 %v1872, 16
    %v1875 = vand.u32 %v1871, 65535
    %v1876 = vshrl.u32 %v1871, 16
    %v1877 = vmul.u32 %v1873, %v1875
    %v1878 = vmul.u32 %v1873, %v1876
    %v1879 = vmul.u32 %v1874, %v1875
    %v1880 = vmul.u32 %v1874, %v1876
    %v1881 = vshll.u32 %v1878, 16
    %v1882 = vshrl.u32 %v1878, 16
    %v1883 = vshll.u32 %v1879, 16
    %v1884 = vshrl.u32 %v1879, 16
    %vm1885 = vc.u32 %v1877, %v1881
    %v1886 = vsel %vm1885, 1, 0
    %v1887 = vadd.s32 %v1877, %v1881
    %v1888 = vadd.s32 %v1880, %v1886
    %vm1889 = vc.u32 %v1887, %v1883
    %v1890 = vsel %vm1889, 1, 0
    %v1891 = vadd.s32 %v1887, %v1883
    %v1892 = vadd.s32 %v1888, %v1890
    %v1893 = vadd.s32 %v1892, %v1882
    %v1894 = vadd.s32 %v1893, %v1884
    %v1895 = vand.u32 %v1872, 65535
    %v1896 = vshrl.u32 %v1872, 16
    %v1897 = vand.u32 %v1867, 65535
    %v1898 = vshrl.u32 %v1867, 16
    %v1899 = vmul.u32 %v1895, %v1897
    %v1900 = vmul.u32 %v1895, %v1898
    %v1901 = vmul.u32 %v1896, %v1897
    %v1902 = vmul.u32 %v1896, %v1898
    %v1903 = vshll.u32 %v1900, 16
    %v1904 = vshrl.u32 %v1900, 16
    %v1905 = vshll.u32 %v1901, 16
    %v1906 = vshrl.u32 %v1901, 16
    %vm1907 = vc.u32 %v1899, %v1903
    %v1908 = vsel %vm1907, 1, 0
    %v1909 = vadd.s32 %v1899, %v1903
    %v1910 = vadd.s32 %v1902, %v1908
    %vm1911 = vc.u32 %v1909, %v1905
    %v1912 = vsel %vm1911, 1, 0
    %v1913 = vadd.s32 %v1909, %v1905
    %v1914 = vadd.s32 %v1910, %v1912
    %v1915 = vadd.s32 %v1914, %v1904
    %v1916 = vadd.s32 %v1915, %v1906
    %v1917 = vmul.u32 %v1872, %v1863
    %v1918 = vadd.s32 %v1894, %v1913
    %vm1919 = vc.u32 %v1894, %v1913
    %v1920 = vadd.s32 %v1916, 1
    %v1921 = vsel %vm1919, %v1920, %v1916
    %v1922 = vadd.s32 %v1917, %v1921
    %v1923 = vadd.s32 %v1922, 536870912
    %v1924 = vshrl.u32 %v1923, 30
    %v1925 = vshll.u32 %v1924, 30
    %v1926 = vsub.s32 %v1922, %v1925
    %vm1927 = vcmp.lt.s32.totalorder %v1926, 0
    %v1928 = vsub.s32 0, %v1926
    %v1929 = vsel %vm1927, %v1928, %v1926
    %v1930 = vclz %v1929
    %v1931 = vsub.s32 %v1930, 2
    %vm1932 = vcmp.gt.s32.totalorder 0, %v1931
    %v1933 = vsel %vm1932, 0, %v1931
    %v1934 = vsub.s32 32, %v1933
    %v1935 = vshll.u32 %v1926, %v1933
    %v1936 = vshrl.u32 %v1918, %v1934
    %v1937 = vor.u32 %v1935, %v1936
    %v1938 = vsub.s32 4294967266, %v1933
    %v1939 = vadd.s32 %v1938, 127
    %v1940 = vshll.u32 %v1939, 23
    %v1941 = vor.u32 4788187, %v1940
    %v1942 = vand.u32 2147483647, %v1941
    %v1944 = vcvt.s32.f32 %v1937
    %v1945 = vmul.f32 %v1944, %v1942
    %v1946 = vxor.u32 %v1945, 2147483648
    %v1947 = vsel %vm1826, %v1946, %v1945
    %v1948 = vsub.s32 4, %v1924
    %v1949 = vsel %vm1826, %v1948, %v1924
    %v1950 = vsel %vm1825, %v1358, %v1947
    %v1951 = vsel %vm1825, 0, %v1949
    %v1952 = vmul.f32 %v1950, %v1950
    %v1953 = vmul.f32 %v1952, -0.001358992
    %v1954 = vadd.f32 %v1953, 0.041655596
    %v1955 = vmul.f32 %v1952, %v1954
    %v1956 = vadd.f32 %v1955, -0.4999988
    %v1957 = vmul.f32 %v1952, %v1956
    %v1958 = vadd.f32 1.0, %v1957
    %v1959 = vmul.f32 %v1950, %v1950
    %v1960 = vmul.f32 %v1959, -0.00019511016
    %v1961 = vadd.f32 %v1960, 0.008332121
    %v1962 = vmul.f32 %v1959, %v1961
    %v1963 = vadd.f32 %v1962, -0.16666654
    %v1964 = vmul.f32 %v1959, %v1963
    %v1965 = vadd.f32 %v1964, 1.0
    %v1966 = vmul.f32 %v1965, %v1950
    %vm1967 = vweird.f32 %v1358
    %v1968 = vadd.s32 %v1951, 3
    %v1969 = vand.u32 %v1968, 3
    %vm1970 = vcmp.lt.s32.totalorder %v1969, 2
    %vm1971 = vcmp.eq.s32.totalorder %v1969, 0
    %v1972 = vxor.u32 %v1966, 2147483648
    %v1973 = vsel %vm1971, %v1958, %v1972
    %vm1974 = vcmp.eq.s32.totalorder %v1969, 2
    %v1975 = vxor.u32 %v1958, 2147483648
    %v1976 = vsel %vm1974, %v1975, %v1966
    %v1977 = vsel %vm1970, %v1973, %v1976
    %v1978 = vsel %vm1967, nan, %v1977
    %v1979 = vand.u32 2147483647, %v1355
    %vm1980 = vcmp.le.f32.partialorder %v1979, 0.7853982
    %vm1981 = vcmp.lt.s32.totalorder %v1355, 0
    %v1982 = vand.u32 %v1355, 2139095040
    %v1983 = vshrl.u32 %v1982, 23
    %v1984 = vsub.s32 %v1983, 127
    %v1985 = vand.u32 2147483647, %v1355
    %v1986 = vand.u32 %v1985, 8388607
    %v1987 = vor.u32 %v1986, 8388608
    %v1988 = vsub.s32 0, %v1987
    %v1989 = vadd.s32 %v1984, 1
    %vm1990 = vcmp.gt.s32.totalorder %v1989, 0
    %v1991 = vsel %vm1990, %v1989, 0
    %v1992 = vshrl.u32 %v1991, 5
    %v1993 = vand.u32 %v1991, 31
    %v1994 = vsub.s32 32, %v1993
    %v1995 = vshrl.u32 683565275, %v1994
    %v1996 = vshll.u32 683565275, %v1993
    %v1997 = vshrl.u32 2475754826, %v1994
    %v1998 = vor.u32 %v1996, %v1997
    %v1999 = vshll.u32 2475754826, %v1993
    %v2000 = vshrl.u32 2131351028, %v1994
    %v2001 = vor.u32 %v1999, %v2000
    %v2002 = vshll.u32 2131351028, %v1993
    %v2003 = vshrl.u32 2102212464, %v1994
    %v2004 = vor.u32 %v2002, %v2003
    %v2005 = vshll.u32 2102212464, %v1993
    %v2006 = vshrl.u32 920167782, %v1994
    %v2007 = vor.u32 %v2005, %v2006
    %v2008 = vshll.u32 920167782, %v1993
    %v2009 = vshrl.u32 1326507024, %v1994
    %v2010 = vor.u32 %v2008, %v2009
    %vm2011 = vcmp.lt.s32.totalorder %v1992, 1
    %vm2012 = vcmp.lt.s32.totalorder %v1992, 2
    %vm2013 = vcmp.lt.s32.totalorder %v1992, 3
    %vm2014 = vcmp.lt.s32.totalorder %v1992, 4
    %v2015 = vsel %vm2011, %v1995, %v1998
    %v2016 = vsel %vm2014, %v2004, 2102212464
    %v2017 = vsel %vm2013, %v2001, %v2016
    %v2018 = vsel %vm2012, %v2015, %v2017
    %v2019 = vsel %vm2011, %v1998, %v2001
    %v2020 = vsel %vm2014, %v2007, 920167782
    %v2021 = vsel %vm2013, %v2004, %v2020
    %v2022 = vsel %vm2012, %v2019, %v2021
    %v2023 = vsel %vm2011, %v2001, %v2004
    %v2024 = vsel %vm2014, %v2010, 1326507024
    %v2025 = vsel %vm2013, %v2007, %v2024
    %v2026 = vsel %vm2012, %v2023, %v2025
    %v2027 = vshll.u32 %v1987, 8
    %v2028 = vand.u32 %v2027, 65535
    %v2029 = vshrl.u32 %v2027, 16
    %v2030 = vand.u32 %v2026, 65535
    %v2031 = vshrl.u32 %v2026, 16
    %v2032 = vmul.u32 %v2028, %v2030
    %v2033 = vmul.u32 %v2028, %v2031
    %v2034 = vmul.u32 %v2029, %v2030
    %v2035 = vmul.u32 %v2029, %v2031
    %v2036 = vshll.u32 %v2033, 16
    %v2037 = vshrl.u32 %v2033, 16
    %v2038 = vshll.u32 %v2034, 16
    %v2039 = vshrl.u32 %v2034, 16
    %vm2040 = vc.u32 %v2032, %v2036
    %v2041 = vsel %vm2040, 1, 0
    %v2042 = vadd.s32 %v2032, %v2036
    %v2043 = vadd.s32 %v2035, %v2041
    %vm2044 = vc.u32 %v2042, %v2038
    %v2045 = vsel %vm2044, 1, 0
    %v2046 = vadd.s32 %v2042, %v2038
    %v2047 = vadd.s32 %v2043, %v2045
    %v2048 = vadd.s32 %v2047, %v2037
    %v2049 = vadd.s32 %v2048, %v2039
    %v2050 = vand.u32 %v2027, 65535
    %v2051 = vshrl.u32 %v2027, 16
    %v2052 = vand.u32 %v2022, 65535
    %v2053 = vshrl.u32 %v2022, 16
    %v2054 = vmul.u32 %v2050, %v2052
    %v2055 = vmul.u32 %v2050, %v2053
    %v2056 = vmul.u32 %v2051, %v2052
    %v2057 = vmul.u32 %v2051, %v2053
    %v2058 = vshll.u32 %v2055, 16
    %v2059 = vshrl.u32 %v2055, 16
    %v2060 = vshll.u32 %v2056, 16
    %v2061 = vshrl.u32 %v2056, 16
    %vm2062 = vc.u32 %v2054, %v2058
    %v2063 = vsel %vm2062, 1, 0
    %v2064 = vadd.s32 %v2054, %v2058
    %v2065 = vadd.s32 %v2057, %v2063
    %vm2066 = vc.u32 %v2064, %v2060
    %v2067 = vsel %vm2066, 1, 0
    %v2068 = vadd.s32 %v2064, %v2060
    %v2069 = vadd.s32 %v2065, %v2067
    %v2070 = vadd.s32 %v2069, %v2059
    %v2071 = vadd.s32 %v2070, %v2061
    %v2072 = vmul.u32 %v2027, %v2018
    %v2073 = vadd.s32 %v2049, %v2068
    %vm2074 = vc.u32 %v2049, %v2068
    %v2075 = vadd.s32 %v2071, 1
    %v2076 = vsel %vm2074, %v2075, %v2071
    %v2077 = vadd.s32 %v2072, %v2076
    %v2078 = vadd.s32 %v2077, 536870912
    %v2079 = vshrl.u32 %v2078, 30
    %v2080 = vshll.u32 %v2079, 30
    %v2081 = vsub.s32 %v2077, %v2080
    %vm2082 = vcmp.lt.s32.totalorder %v2081, 0
    %v2083 = vsub.s32 0, %v2081
    %v2084 = vsel %vm2082, %v2083, %v2081
    %v2085 = vclz %v2084
    %v2086 = vsub.s32 %v2085, 2
    %vm2087 = vcmp.gt.s32.totalorder 0, %v2086
    %v2088 = vsel %vm2087, 0, %v2086
    %v2089 = vsub.s32 32, %v2088
    %v2090 = vshll.u32 %v2081, %v2088
    %v2091 = vshrl.u32 %v2073, %v2089
    %v2092 = vor.u32 %v2090, %v2091
    %v2093 = vsub.s32 4294967266, %v2088
    %v2094 = vadd.s32 %v2093, 127
    %v2095 = vshll.u32 %v2094, 23
    %v2096 = vor.u32 4788187, %v2095
    %v2097 = vand.u32 2147483647, %v2096
    %v2099 = vcvt.s32.f32 %v2092
    %v2100 = vmul.f32 %v2099, %v2097
    %v2101 = vxor.u32 %v2100, 2147483648
    %v2102 = vsel %vm1981, %v2101, %v2100
    %v2103 = vsub.s32 4, %v2079
    %v2104 = vsel %vm1981, %v2103, %v2079
    %v2105 = vsel %vm1980, %v1355, %v2102
    %v2106 = vsel %vm1980, 0, %v2104
    %v2107 = vmul.f32 %v2105, %v2105
    %v2108 = vmul.f32 %v2107, -0.001358992
    %v2109 = vadd.f32 %v2108, 0.041655596
    %v2110 = vmul.f32 %v2107, %v2109
    %v2111 = vadd.f32 %v2110, -0.4999988
    %v2112 = vmul.f32 %v2107, %v2111
    %v2113 = vadd.f32 1.0, %v2112
    %v2114 = vmul.f32 %v2105, %v2105
    %v2115 = vmul.f32 %v2114, -0.00019511016
    %v2116 = vadd.f32 %v2115, 0.008332121
    %v2117 = vmul.f32 %v2114, %v2116
    %v2118 = vadd.f32 %v2117, -0.16666654
    %v2119 = vmul.f32 %v2114, %v2118
    %v2120 = vadd.f32 %v2119, 1.0
    %v2121 = vmul.f32 %v2120, %v2105
    %vm2122 = vweird.f32 %v1355
    %v2123 = vand.u32 %v2106, 3
    %vm2124 = vcmp.lt.s32.totalorder %v2123, 2
    %vm2125 = vcmp.eq.s32.totalorder %v2123, 0
    %v2126 = vxor.u32 %v2121, 2147483648
    %v2127 = vsel %vm2125, %v2113, %v2126
    %vm2128 = vcmp.eq.s32.totalorder %v2123, 2
    %v2129 = vxor.u32 %v2113, 2147483648
    %v2130 = vsel %vm2128, %v2129, %v2121
    %v2131 = vsel %vm2124, %v2127, %v2130
    %v2132 = vsel %vm2122, nan, %v2131
    %v2133 = vand.u32 2147483647, %v1356
    %vm2134 = vcmp.le.f32.partialorder %v2133, 0.7853982
    %vm2135 = vcmp.lt.s32.totalorder %v1356, 0
    %v2136 = vand.u32 %v1356, 2139095040
    %v2137 = vshrl.u32 %v2136, 23
    %v2138 = vsub.s32 %v2137, 127
    %v2139 = vand.u32 2147483647, %v1356
    %v2140 = vand.u32 %v2139, 8388607
    %v2141 = vor.u32 %v2140, 8388608
    %v2142 = vsub.s32 0, %v2141
    %v2143 = vadd.s32 %v2138, 1
    %vm2144 = vcmp.gt.s32.totalorder %v2143, 0
    %v2145 = vsel %vm2144, %v2143, 0
    %v2146 = vshrl.u32 %v2145, 5
    %v2147 = vand.u32 %v2145, 31
    %v2148 = vsub.s32 32, %v2147
    %v2149 = vshrl.u32 683565275, %v2148
    %v2150 = vshll.u32 683565275, %v2147
    %v2151 = vshrl.u32 2475754826, %v2148
    %v2152 = vor.u32 %v2150, %v2151
    %v2153 = vshll.u32 2475754826, %v2147
    %v2154 = vshrl.u32 2131351028, %v2148
    %v2155 = vor.u32 %v2153, %v2154
    %v2156 = vshll.u32 2131351028, %v2147
    %v2157 = vshrl.u32 2102212464, %v2148
    %v2158 = vor.u32 %v2156, %v2157
    %v2159 = vshll.u32 2102212464, %v2147
    %v2160 = vshrl.u32 920167782, %v2148
    %v2161 = vor.u32 %v2159, %v2160
    %v2162 = vshll.u32 920167782, %v2147
    %v2163 = vshrl.u32 1326507024, %v2148
    %v2164 = vor.u32 %v2162, %v2163
    %vm2165 = vcmp.lt.s32.totalorder %v2146, 1
    %vm2166 = vcmp.lt.s32.totalorder %v2146, 2
    %vm2167 = vcmp.lt.s32.totalorder %v2146, 3
    %vm2168 = vcmp.lt.s32.totalorder %v2146, 4
    %v2169 = vsel %vm2165, %v2149, %v2152
    %v2170 = vsel %vm2168, %v2158, 2102212464
    %v2171 = vsel %vm2167, %v2155, %v2170
    %v2172 = vsel %vm2166, %v2169, %v2171
    %v2173 = vsel %vm2165, %v2152, %v2155
    %v2174 = vsel %vm2168, %v2161, 920167782
    %v2175 = vsel %vm2167, %v2158, %v2174
    %v2176 = vsel %vm2166, %v2173, %v2175
    %v2177 = vsel %vm2165, %v2155, %v2158
    %v2178 = vsel %vm2168, %v2164, 1326507024
    %v2179 = vsel %vm2167, %v2161, %v2178
    %v2180 = vsel %vm2166, %v2177, %v2179
    %v2181 = vshll.u32 %v2141, 8
    %v2182 = vand.u32 %v2181, 65535
    %v2183 = vshrl.u32 %v2181, 16
    %v2184 = vand.u32 %v2180, 65535
    %v2185 = vshrl.u32 %v2180, 16
    %v2186 = vmul.u32 %v2182, %v2184
    %v2187 = vmul.u32 %v2182, %v2185
    %v2188 = vmul.u32 %v2183, %v2184
    %v2189 = vmul.u32 %v2183, %v2185
    %v2190 = vshll.u32 %v2187, 16
    %v2191 = vshrl.u32 %v2187, 16
    %v2192 = vshll.u32 %v2188, 16
    %v2193 = vshrl.u32 %v2188, 16
    %vm2194 = vc.u32 %v2186, %v2190
    %v2195 = vsel %vm2194, 1, 0
    %v2196 = vadd.s32 %v2186, %v2190
    %v2197 = vadd.s32 %v2189, %v2195
    %vm2198 = vc.u32 %v2196, %v2192
    %v2199 = vsel %vm2198, 1, 0
    %v2200 = vadd.s32 %v2196, %v2192
    %v2201 = vadd.s32 %v2197, %v2199
    %v2202 = vadd.s32 %v2201, %v2191
    %v2203 = vadd.s32 %v2202, %v2193
    %v2204 = vand.u32 %v2181, 65535
    %v2205 = vshrl.u32 %v2181, 16
    %v2206 = vand.u32 %v2176, 65535
    %v2207 = vshrl.u32 %v2176, 16
    %v2208 = vmul.u32 %v2204, %v2206
    %v2209 = vmul.u32 %v2204, %v2207
    %v2210 = vmul.u32 %v2205, %v2206
    %v2211 = vmul.u32 %v2205, %v2207
    %v2212 = vshll.u32 %v2209, 16
    %v2213 = vshrl.u32 %v2209, 16
    %v2214 = vshll.u32 %v2210, 16
    %v2215 = vshrl.u32 %v2210, 16
    %vm2216 = vc.u32 %v2208, %v2212
    %v2217 = vsel %vm2216, 1, 0
    %v2218 = vadd.s32 %v2208, %v2212
    %v2219 = vadd.s32 %v2211, %v2217
    %vm2220 = vc.u32 %v2218, %v2214
    %v2221 = vsel %vm2220, 1, 0
    %v2222 = vadd.s32 %v2218, %v2214
    %v2223 = vadd.s32 %v2219, %v2221
    %v2224 = vadd.s32 %v2223, %v2213
    %v2225 = vadd.s32 %v2224, %v2215
    %v2226 = vmul.u32 %v2181, %v2172
    %v2227 = vadd.s32 %v2203, %v2222
    %vm2228 = vc.u32 %v2203, %v2222
    %v2229 = vadd.s32 %v2225, 1
    %v2230 = vsel %vm2228, %v2229, %v2225
    %v2231 = vadd.s32 %v2226, %v2230
    %v2232 = vadd.s32 %v2231, 536870912
    %v2233 = vshrl.u32 %v2232, 30
    %v2234 = vshll.u32 %v2233, 30
    %v2235 = vsub.s32 %v2231, %v2234
    %vm2236 = vcmp.lt.s32.totalorder %v2235, 0
    %v2237 = vsub.s32 0, %v2235
    %v2238 = vsel %vm2236, %v2237, %v2235
    %v2239 = vclz %v2238
    %v2240 = vsub.s32 %v2239, 2
    %vm2241 = vcmp.gt.s32.totalorder 0, %v2240
    %v2242 = vsel %vm2241, 0, %v2240
    %v2243 = vsub.s32 32, %v2242
    %v2244 = vshll.u32 %v2235, %v2242
    %v2245 = vshrl.u32 %v2227, %v2243
    %v2246 = vor.u32 %v2244, %v2245
    %v2247 = vsub.s32 4294967266, %v2242
    %v2248 = vadd.s32 %v2247, 127
    %v2249 = vshll.u32 %v2248, 23
    %v2250 = vor.u32 4788187, %v2249
    %v2251 = vand.u32 2147483647, %v2250
    %v2253 = vcvt.s32.f32 %v2246
    %v2254 = vmul.f32 %v2253, %v2251
    %v2255 = vxor.u32 %v2254, 2147483648
    %v2256 = vsel %vm2135, %v2255, %v2254
    %v2257 = vsub.s32 4, %v2233
    %v2258 = vsel %vm2135, %v2257, %v2233
    %v2259 = vsel %vm2134, %v1356, %v2256
    %v2260 = vsel %vm2134, 0, %v2258
    %v2261 = vmul.f32 %v2259, %v2259
    %v2262 = vmul.f32 %v2261, -0.001358992
    %v2263 = vadd.f32 %v2262, 0.041655596
    %v2264 = vmul.f32 %v2261, %v2263
    %v2265 = vadd.f32 %v2264, -0.4999988
    %v2266 = vmul.f32 %v2261, %v2265
    %v2267 = vadd.f32 1.0, %v2266
    %v2268 = vmul.f32 %v2259, %v2259
    %v2269 = vmul.f32 %v2268, -0.00019511016
    %v2270 = vadd.f32 %v2269, 0.008332121
    %v2271 = vmul.f32 %v2268, %v2270
    %v2272 = vadd.f32 %v2271, -0.16666654
    %v2273 = vmul.f32 %v2268, %v2272
    %v2274 = vadd.f32 %v2273, 1.0
    %v2275 = vmul.f32 %v2274, %v2259
    %vm2276 = vweird.f32 %v1356
    %v2277 = vand.u32 %v2260, 3
    %vm2278 = vcmp.lt.s32.totalorder %v2277, 2
    %vm2279 = vcmp.eq.s32.totalorder %v2277, 0
    %v2280 = vxor.u32 %v2275, 2147483648
    %v2281 = vsel %vm2279, %v2267, %v2280
    %vm2282 = vcmp.eq.s32.totalorder %v2277, 2
    %v2283 = vxor.u32 %v2267, 2147483648
    %v2284 = vsel %vm2282, %v2283, %v2275
    %v2285 = vsel %vm2278, %v2281, %v2284
    %v2286 = vsel %vm2276, nan, %v2285
    %v2287 = vand.u32 2147483647, %v1357
    %vm2288 = vcmp.le.f32.partialorder %v2287, 0.7853982
    %vm2289 = vcmp.lt.s32.totalorder %v1357, 0
    %v2290 = vand.u32 %v1357, 2139095040
    %v2291 = vshrl.u32 %v2290, 23
    %v2292 = vsub.s32 %v2291, 127
    %v2293 = vand.u32 2147483647, %v1357
    %v2294 = vand.u32 %v2293, 8388607
    %v2295 = vor.u32 %v2294, 8388608
    %v2296 = vsub.s32 0, %v2295
    %v2297 = vadd.s32 %v2292, 1
    %vm2298 = vcmp.gt.s32.totalorder %v2297, 0
    %v2299 = vsel %vm2298, %v2297, 0
    %v2300 = vshrl.u32 %v2299, 5
    %v2301 = vand.u32 %v2299, 31
    %v2302 = vsub.s32 32, %v2301
    %v2303 = vshrl.u32 683565275, %v2302
    %v2304 = vshll.u32 683565275, %v2301
    %v2305 = vshrl.u32 2475754826, %v2302
    %v2306 = vor.u32 %v2304, %v2305
    %v2307 = vshll.u32 2475754826, %v2301
    %v2308 = vshrl.u32 2131351028, %v2302
    %v2309 = vor.u32 %v2307, %v2308
    %v2310 = vshll.u32 2131351028, %v2301
    %v2311 = vshrl.u32 2102212464, %v2302
    %v2312 = vor.u32 %v2310, %v2311
    %v2313 = vshll.u32 2102212464, %v2301
    %v2314 = vshrl.u32 920167782, %v2302
    %v2315 = vor.u32 %v2313, %v2314
    %v2316 = vshll.u32 920167782, %v2301
    %v2317 = vshrl.u32 1326507024, %v2302
    %v2318 = vor.u32 %v2316, %v2317
    %vm2319 = vcmp.lt.s32.totalorder %v2300, 1
    %vm2320 = vcmp.lt.s32.totalorder %v2300, 2
    %vm2321 = vcmp.lt.s32.totalorder %v2300, 3
    %vm2322 = vcmp.lt.s32.totalorder %v2300, 4
    %v2323 = vsel %vm2319, %v2303, %v2306
    %v2324 = vsel %vm2322, %v2312, 2102212464
    %v2325 = vsel %vm2321, %v2309, %v2324
    %v2326 = vsel %vm2320, %v2323, %v2325
    %v2327 = vsel %vm2319, %v2306, %v2309
    %v2328 = vsel %vm2322, %v2315, 920167782
    %v2329 = vsel %vm2321, %v2312, %v2328
    %v2330 = vsel %vm2320, %v2327, %v2329
    %v2331 = vsel %vm2319, %v2309, %v2312
    %v2332 = vsel %vm2322, %v2318, 1326507024
    %v2333 = vsel %vm2321, %v2315, %v2332
    %v2334 = vsel %vm2320, %v2331, %v2333
    %v2335 = vshll.u32 %v2295, 8
    %v2336 = vand.u32 %v2335, 65535
    %v2337 = vshrl.u32 %v2335, 16
    %v2338 = vand.u32 %v2334, 65535
    %v2339 = vshrl.u32 %v2334, 16
    %v2340 = vmul.u32 %v2336, %v2338
    %v2341 = vmul.u32 %v2336, %v2339
    %v2342 = vmul.u32 %v2337, %v2338
    %v2343 = vmul.u32 %v2337, %v2339
    %v2344 = vshll.u32 %v2341, 16
    %v2345 = vshrl.u32 %v2341, 16
    %v2346 = vshll.u32 %v2342, 16
    %v2347 = vshrl.u32 %v2342, 16
    %vm2348 = vc.u32 %v2340, %v2344
    %v2349 = vsel %vm2348, 1, 0
    %v2350 = vadd.s32 %v2340, %v2344
    %v2351 = vadd.s32 %v2343, %v2349
    %vm2352 = vc.u32 %v2350, %v2346
    %v2353 = vsel %vm2352, 1, 0
    %v2354 = vadd.s32 %v2350, %v2346
    %v2355 = vadd.s32 %v2351, %v2353
    %v2356 = vadd.s32 %v2355, %v2345
    %v2357 = vadd.s32 %v2356, %v2347
    %v2358 = vand.u32 %v2335, 65535
    %v2359 = vshrl.u32 %v2335, 16
    %v2360 = vand.u32 %v2330, 65535
    %v2361 = vshrl.u32 %v2330, 16
    %v2362 = vmul.u32 %v2358, %v2360
    %v2363 = vmul.u32 %v2358, %v2361
    %v2364 = vmul.u32 %v2359, %v2360
    %v2365 = vmul.u32 %v2359, %v2361
    %v2366 = vshll.u32 %v2363, 16
    %v2367 = vshrl.u32 %v2363, 16
    %v2368 = vshll.u32 %v2364, 16
    %v2369 = vshrl.u32 %v2364, 16
    %vm2370 = vc.u32 %v2362, %v2366
    %v2371 = vsel %vm2370, 1, 0
    %v2372 = vadd.s32 %v2362, %v2366
    %v2373 = vadd.s32 %v2365, %v2371
    %vm2374 = vc.u32 %v2372, %v2368
    %v2375 = vsel %vm2374, 1, 0
    %v2376 = vadd.s32 %v2372, %v2368
    %v2377 = vadd.s32 %v2373, %v2375
    %v2378 = vadd.s32 %v2377, %v2367
    %v2379 = vadd.s32 %v2378, %v2369
    %v2380 = vmul.u32 %v2335, %v2326
    %v2381 = vadd.s32 %v2357, %v2376
    %vm2382 = vc.u32 %v2357, %v2376
    %v2383 = vadd.s32 %v2379, 1
    %v2384 = vsel %vm2382, %v2383, %v2379
    %v2385 = vadd.s32 %v2380, %v2384
    %v2386 = vadd.s32 %v2385, 536870912
    %v2387 = vshrl.u32 %v2386, 30
    %v2388 = vshll.u32 %v2387, 30
    %v2389 = vsub.s32 %v2385, %v2388
    %vm2390 = vcmp.lt.s32.totalorder %v2389, 0
    %v2391 = vsub.s32 0, %v2389
    %v2392 = vsel %vm2390, %v2391, %v2389
    %v2393 = vclz %v2392
    %v2394 = vsub.s32 %v2393, 2
    %vm2395 = vcmp.gt.s32.totalorder 0, %v2394
    %v2396 = vsel %vm2395, 0, %v2394
    %v2397 = vsub.s32 32, %v2396
    %v2398 = vshll.u32 %v2389, %v2396
    %v2399 = vshrl.u32 %v2381, %v2397
    %v2400 = vor.u32 %v2398, %v2399
    %v2401 = vsub.s32 4294967266, %v2396
    %v2402 = vadd.s32 %v2401, 127
    %v2403 = vshll.u32 %v2402, 23
    %v2404 = vor.u32 4788187, %v2403
    %v2405 = vand.u32 2147483647, %v2404
    %v2407 = vcvt.s32.f32 %v2400
    %v2408 = vmul.f32 %v2407, %v2405
    %v2409 = vxor.u32 %v2408, 2147483648
    %v2410 = vsel %vm2289, %v2409, %v2408
    %v2411 = vsub.s32 4, %v2387
    %v2412 = vsel %vm2289, %v2411, %v2387
    %v2413 = vsel %vm2288, %v1357, %v2410
    %v2414 = vsel %vm2288, 0, %v2412
    %v2415 = vmul.f32 %v2413, %v2413
    %v2416 = vmul.f32 %v2415, -0.001358992
    %v2417 = vadd.f32 %v2416, 0.041655596
    %v2418 = vmul.f32 %v2415, %v2417
    %v2419 = vadd.f32 %v2418, -0.4999988
    %v2420 = vmul.f32 %v2415, %v2419
    %v2421 = vadd.f32 1.0, %v2420
    %v2422 = vmul.f32 %v2413, %v2413
    %v2423 = vmul.f32 %v2422, -0.00019511016
    %v2424 = vadd.f32 %v2423, 0.008332121
    %v2425 = vmul.f32 %v2422, %v2424
    %v2426 = vadd.f32 %v2425, -0.16666654
    %v2427 = vmul.f32 %v2422, %v2426
    %v2428 = vadd.f32 %v2427, 1.0
    %v2429 = vmul.f32 %v2428, %v2413
    %vm2430 = vweird.f32 %v1357
    %v2431 = vand.u32 %v2414, 3
    %vm2432 = vcmp.lt.s32.totalorder %v2431, 2
    %vm2433 = vcmp.eq.s32.totalorder %v2431, 0
    %v2434 = vxor.u32 %v2429, 2147483648
    %v2435 = vsel %vm2433, %v2421, %v2434
    %vm2436 = vcmp.eq.s32.totalorder %v2431, 2
    %v2437 = vxor.u32 %v2421, 2147483648
    %v2438 = vsel %vm2436, %v2437, %v2429
    %v2439 = vsel %vm2432, %v2435, %v2438
    %v2440 = vsel %vm2430, nan, %v2439
    %v2441 = vand.u32 2147483647, %v1358
    %vm2442 = vcmp.le.f32.partialorder %v2441, 0.7853982
    %vm2443 = vcmp.lt.s32.totalorder %v1358, 0
    %v2444 = vand.u32 %v1358, 2139095040
    %v2445 = vshrl.u32 %v2444, 23
    %v2446 = vsub.s32 %v2445, 127
    %v2447 = vand.u32 2147483647, %v1358
    %v2448 = vand.u32 %v2447, 8388607
    %v2449 = vor.u32 %v2448, 8388608
    %v2450 = vsub.s32 0, %v2449
    %v2451 = vadd.s32 %v2446, 1
    %vm2452 = vcmp.gt.s32.totalorder %v2451, 0
    %v2453 = vsel %vm2452, %v2451, 0
    %v2454 = vshrl.u32 %v2453, 5
    %v2455 = vand.u32 %v2453, 31
    %v2456 = vsub.s32 32, %v2455
    %v2457 = vshrl.u32 683565275, %v2456
    %v2458 = vshll.u32 683565275, %v2455
    %v2459 = vshrl.u32 2475754826, %v2456
    %v2460 = vor.u32 %v2458, %v2459
    %v2461 = vshll.u32 2475754826, %v2455
    %v2462 = vshrl.u32 2131351028, %v2456
    %v2463 = vor.u32 %v2461, %v2462
    %v2464 = vshll.u32 2131351028, %v2455
    %v2465 = vshrl.u32 2102212464, %v2456
    %v2466 = vor.u32 %v2464, %v2465
    %v2467 = vshll.u32 2102212464, %v2455
    %v2468 = vshrl.u32 920167782, %v2456
    %v2469 = vor.u32 %v2467, %v2468
    %v2470 = vshll.u32 920167782, %v2455
    %v2471 = vshrl.u32 1326507024, %v2456
    %v2472 = vor.u32 %v2470, %v2471
    %vm2473 = vcmp.lt.s32.totalorder %v2454, 1
    %vm2474 = vcmp.lt.s32.totalorder %v2454, 2
    %vm2475 = vcmp.lt.s32.totalorder %v2454, 3
    %vm2476 = vcmp.lt.s32.totalorder %v2454, 4
    %v2477 = vsel %vm2473, %v2457, %v2460
    %v2478 = vsel %vm2476, %v2466, 2102212464
    %v2479 = vsel %vm2475, %v2463, %v2478
    %v2480 = vsel %vm2474, %v2477, %v2479
    %v2481 = vsel %vm2473, %v2460, %v2463
    %v2482 = vsel %vm2476, %v2469, 920167782
    %v2483 = vsel %vm2475, %v2466, %v2482
    %v2484 = vsel %vm2474, %v2481, %v2483
    %v2485 = vsel %vm2473, %v2463, %v2466
    %v2486 = vsel %vm2476, %v2472, 1326507024
    %v2487 = vsel %vm2475, %v2469, %v2486
    %v2488 = vsel %vm2474, %v2485, %v2487
    %v2489 = vshll.u32 %v2449, 8
    %v2490 = vand.u32 %v2489, 65535
    %v2491 = vshrl.u32 %v2489, 16
    %v2492 = vand.u32 %v2488, 65535
    %v2493 = vshrl.u32 %v2488, 16
    %v2494 = vmul.u32 %v2490, %v2492
    %v2495 = vmul.u32 %v2490, %v2493
    %v2496 = vmul.u32 %v2491, %v2492
    %v2497 = vmul.u32 %v2491, %v2493
    %v2498 = vshll.u32 %v2495, 16
    %v2499 = vshrl.u32 %v2495, 16
    %v2500 = vshll.u32 %v2496, 16
    %v2501 = vshrl.u32 %v2496, 16
    %vm2502 = vc.u32 %v2494, %v2498
    %v2503 = vsel %vm2502, 1, 0
    %v2504 = vadd.s32 %v2494, %v2498
    %v2505 = vadd.s32 %v2497, %v2503
    %vm2506 = vc.u32 %v2504, %v2500
    %v2507 = vsel %vm2506, 1, 0
    %v2508 = vadd.s32 %v2504, %v2500
    %v2509 = vadd.s32 %v2505, %v2507
    %v2510 = vadd.s32 %v2509, %v2499
    %v2511 = vadd.s32 %v2510, %v2501
    %v2512 = vand.u32 %v2489, 65535
    %v2513 = vshrl.u32 %v2489, 16
    %v2514 = vand.u32 %v2484, 65535
    %v2515 = vshrl.u32 %v2484, 16
    %v2516 = vmul.u32 %v2512, %v2514
    %v2517 = vmul.u32 %v2512, %v2515
    %v2518 = vmul.u32 %v2513, %v2514
    %v2519 = vmul.u32 %v2513, %v2515
    %v2520 = vshll.u32 %v2517, 16
    %v2521 = vshrl.u32 %v2517, 16
    %v2522 = vshll.u32 %v2518, 16
    %v2523 = vshrl.u32 %v2518, 16
    %vm2524 = vc.u32 %v2516, %v2520
    %v2525 = vsel %vm2524, 1, 0
    %v2526 = vadd.s32 %v2516, %v2520
    %v2527 = vadd.s32 %v2519, %v2525
    %vm2528 = vc.u32 %v2526, %v2522
    %v2529 = vsel %vm2528, 1, 0
    %v2530 = vadd.s32 %v2526, %v2522
    %v2531 = vadd.s32 %v2527, %v2529
    %v2532 = vadd.s32 %v2531, %v2521
    %v2533 = vadd.s32 %v2532, %v2523
    %v2534 = vmul.u32 %v2489, %v2480
    %v2535 = vadd.s32 %v2511, %v2530
    %vm2536 = vc.u32 %v2511, %v2530
    %v2537 = vadd.s32 %v2533, 1
    %v2538 = vsel %vm2536, %v2537, %v2533
    %v2539 = vadd.s32 %v2534, %v2538
    %v2540 = vadd.s32 %v2539, 536870912
    %v2541 = vshrl.u32 %v2540, 30
    %v2542 = vshll.u32 %v2541, 30
    %v2543 = vsub.s32 %v2539, %v2542
    %vm2544 = vcmp.lt.s32.totalorder %v2543, 0
    %v2545 = vsub.s32 0, %v2543
    %v2546 = vsel %vm2544, %v2545, %v2543
    %v2547 = vclz %v2546
    %v2548 = vsub.s32 %v2547, 2
    %vm2549 = vcmp.gt.s32.totalorder 0, %v2548
    %v2550 = vsel %vm2549, 0, %v2548
    %v2551 = vsub.s32 32, %v2550
    %v2552 = vshll.u32 %v2543, %v2550
    %v2553 = vshrl.u32 %v2535, %v2551
    %v2554 = vor.u32 %v2552, %v2553
    %v2555 = vsub.s32 4294967266, %v2550
    %v2556 = vadd.s32 %v2555, 127
    %v2557 = vshll.u32 %v2556, 23
    %v2558 = vor.u32 4788187, %v2557
    %v2559 = vand.u32 2147483647, %v2558
    %v2561 = vcvt.s32.f32 %v2554
    %v2562 = vmul.f32 %v2561, %v2559
    %v2563 = vxor.u32 %v2562, 2147483648
    %v2564 = vsel %vm2443, %v2563, %v2562
    %v2565 = vsub.s32 4, %v2541
    %v2566 = vsel %vm2443, %v2565, %v2541
    %v2567 = vsel %vm2442, %v1358, %v2564
    %v2568 = vsel %vm2442, 0, %v2566
    %v2569 = vmul.f32 %v2567, %v2567
    %v2570 = vmul.f32 %v2569, -0.001358992
    %v2571 = vadd.f32 %v2570, 0.041655596
    %v2572 = vmul.f32 %v2569, %v2571
    %v2573 = vadd.f32 %v2572, -0.4999988
    %v2574 = vmul.f32 %v2569, %v2573
    %v2575 = vadd.f32 1.0, %v2574
    %v2576 = vmul.f32 %v2567, %v2567
    %v2577 = vmul.f32 %v2576, -0.00019511016
    %v2578 = vadd.f32 %v2577, 0.008332121
    %v2579 = vmul.f32 %v2576, %v2578
    %v2580 = vadd.f32 %v2579, -0.16666654
    %v2581 = vmul.f32 %v2576, %v2580
    %v2582 = vadd.f32 %v2581, 1.0
    %v2583 = vmul.f32 %v2582, %v2567
    %vm2584 = vweird.f32 %v1358
    %v2585 = vand.u32 %v2568, 3
    %vm2586 = vcmp.lt.s32.totalorder %v2585, 2
    %vm2587 = vcmp.eq.s32.totalorder %v2585, 0
    %v2588 = vxor.u32 %v2583, 2147483648
    %v2589 = vsel %vm2587, %v2575, %v2588
    %vm2590 = vcmp.eq.s32.totalorder %v2585, 2
    %v2591 = vxor.u32 %v2575, 2147483648
    %v2592 = vsel %vm2590, %v2591, %v2583
    %v2593 = vsel %vm2586, %v2589, %v2592
    %v2594 = vsel %vm2584, nan, %v2593
    %s2595 = scalar_lea.vmem [#allocation5], 288
    %2596 = vst [vmem:[%s2595] sm:$0xff] %v1513
    %2597 = vst [vmem:[%s2595 + $0x8] sm:$0xff] %v1668
    %2598 = vst [vmem:[%s2595 + $0x10] sm:$0xff] %v1823
    %2599 = vst [vmem:[%s2595 + $0x18] sm:$0xff] %v1978
    %s2600 = scalar_lea.vmem [#allocation5], 320
    %2601 = vst [vmem:[%s2600] sm:$0xff] %v2132
    %2602 = vst [vmem:[%s2600 + $0x8] sm:$0xff] %v2286
    %2603 = vst [vmem:[%s2600 + $0x10] sm:$0xff] %v2440
    %2604 = vst [vmem:[%s2600 + $0x18] sm:$0xff] %v2594
    %v2605 = vmul.f32 %v1513, 2.0
    %v2606 = vmul.f32 %v1668, 2.0
    %v2607 = vmul.f32 %v1823, 2.0
    %v2608 = vmul.f32 %v1978, 2.0
    %v2609 = vmul.f32 %v2605, %v2132
    %v2610 = vmul.f32 %v2606, %v2286
    %v2611 = vmul.f32 %v2607, %v2440
    %v2612 = vmul.f32 %v2608, %v2594
    %v2613 = vmul.f32 %v2605, %v1513
    %v2614 = vmul.f32 %v2606, %v1668
    %v2615 = vmul.f32 %v2607, %v1823
    %v2616 = vmul.f32 %v2608, %v1978
    %v2617 = vsub.f32 1.0, %v2613
    %v2618 = vsub.f32 1.0, %v2614
    %v2619 = vsub.f32 1.0, %v2615
    %v2620 = vsub.f32 1.0, %v2616
    %s2621 = scalar_lea.vmem [#allocation5], 352
    %2622 = vst [vmem:[%s2621] sm:$0xff] %v2609
    %2623 = vst [vmem:[%s2621 + $0x8] sm:$0xff] %v2610
    %2624 = vst [vmem:[%s2621 + $0x10] sm:$0xff] %v2611
    %2625 = vst [vmem:[%s2621 + $0x18] sm:$0xff] %v2612
    %s2626 = scalar_lea.vmem [#allocation5], 384
    %2627 = vst [vmem:[%s2626] sm:$0xff] %v2617
    %2628 = vst [vmem:[%s2626 + $0x8] sm:$0xff] %v2618
    %2629 = vst [vmem:[%s2626 + $0x10] sm:$0xff] %v2619
    %2630 = vst [vmem:[%s2626 + $0x18] sm:$0xff] %v2620
    %v2631 = vmul.f32 %v2609, 2.0
    %v2632 = vmul.f32 %v2610, 2.0
    %v2633 = vmul.f32 %v2611, 2.0
    %v2634 = vmul.f32 %v2612, 2.0
    %v2635 = vmul.f32 %v2631, %v2617
    %v2636 = vmul.f32 %v2632, %v2618
    %v2637 = vmul.f32 %v2633, %v2619
    %v2638 = vmul.f32 %v2634, %v2620
    %v2639 = vmul.f32 %v2631, %v2609
    %v2640 = vmul.f32 %v2632, %v2610
    %v2641 = vmul.f32 %v2633, %v2611
    %v2642 = vmul.f32 %v2634, %v2612
    %v2643 = vsub.f32 1.0, %v2639
    %v2644 = vsub.f32 1.0, %v2640
    %v2645 = vsub.f32 1.0, %v2641
    %v2646 = vsub.f32 1.0, %v2642
    %s2647 = scalar_lea.vmem [#allocation5], 416
    %2648 = vst [vmem:[%s2647] sm:$0xff] %v2635
    %2649 = vst [vmem:[%s2647 + $0x8] sm:$0xff] %v2636
    %2650 = vst [vmem:[%s2647 + $0x10] sm:$0xff] %v2637
    %2651 = vst [vmem:[%s2647 + $0x18] sm:$0xff] %v2638
    %s2652 = scalar_lea.vmem [#allocation5], 448
    %2653 = vst [vmem:[%s2652] sm:$0xff] %v2643
    %2654 = vst [vmem:[%s2652 + $0x8] sm:$0xff] %v2644
    %2655 = vst [vmem:[%s2652 + $0x10] sm:$0xff] %v2645
    %2656 = vst [vmem:[%s2652 + $0x18] sm:$0xff] %v2646
    %v2657 = vmul.f32 %v2635, 2.0
    %v2658 = vmul.f32 %v2636, 2.0
    %v2659 = vmul.f32 %v2637, 2.0
    %v2660 = vmul.f32 %v2638, 2.0
    %v2661 = vmul.f32 %v2657, %v2643
    %v2662 = vmul.f32 %v2658, %v2644
    %v2663 = vmul.f32 %v2659, %v2645
    %v2664 = vmul.f32 %v2660, %v2646
    %v2665 = vmul.f32 %v2657, %v2635
    %v2666 = vmul.f32 %v2658, %v2636
    %v2667 = vmul.f32 %v2659, %v2637
    %v2668 = vmul.f32 %v2660, %v2638
    %v2669 = vsub.f32 1.0, %v2665
    %v2670 = vsub.f32 1.0, %v2666
    %v2671 = vsub.f32 1.0, %v2667
    %v2672 = vsub.f32 1.0, %v2668
    %s2673 = scalar_lea.vmem [#allocation5], 480
    %2674 = vst [vmem:[%s2673] sm:$0xff] %v2661
    %2675 = vst [vmem:[%s2673 + $0x8] sm:$0xff] %v2662
    %2676 = vst [vmem:[%s2673 + $0x10] sm:$0xff] %v2663
    %2677 = vst [vmem:[%s2673 + $0x18] sm:$0xff] %v2664
    %s2678 = scalar_lea.vmem [#allocation5], 512
    %2679 = vst [vmem:[%s2678] sm:$0xff] %v2669
    %2680 = vst [vmem:[%s2678 + $0x8] sm:$0xff] %v2670
    %2681 = vst [vmem:[%s2678 + $0x10] sm:$0xff] %v2671
    %2682 = vst [vmem:[%s2678 + $0x18] sm:$0xff] %v2672
    %v2683 = vmul.f32 %v23, 256.0
    %v2684 = vmul.f32 %v24, 256.0
    %v2685 = vmul.f32 %v25, 256.0
    %v2686 = vmul.f32 %v26, 256.0
    %v2687 = vand.u32 2147483647, %v2683
    %vm2688 = vcmp.le.f32.partialorder %v2687, 0.7853982
    %vm2689 = vcmp.lt.s32.totalorder %v2683, 0
    %v2690 = vand.u32 %v2683, 2139095040
    %v2691 = vshrl.u32 %v2690, 23
    %v2692 = vsub.s32 %v2691, 127
    %v2693 = vand.u32 2147483647, %v2683
    %v2694 = vand.u32 %v2693, 8388607
    %v2695 = vor.u32 %v2694, 8388608
    %v2696 = vsub.s32 0, %v2695
    %v2697 = vadd.s32 %v2692, 1
    %vm2698 = vcmp.gt.s32.totalorder %v2697, 0
    %v2699 = vsel %vm2698, %v2697, 0
    %v2700 = vshrl.u32 %v2699, 5
    %v2701 = vand.u32 %v2699, 31
    %v2702 = vsub.s32 32, %v2701
    %v2703 = vshrl.u32 683565275, %v2702
    %v2704 = vshll.u32 683565275, %v2701
    %v2705 = vshrl.u32 2475754826, %v2702
    %v2706 = vor.u32 %v2704, %v2705
    %v2707 = vshll.u32 2475754826, %v2701
    %v2708 = vshrl.u32 2131351028, %v2702
    %v2709 = vor.u32 %v2707, %v2708
    %v2710 = vshll.u32 2131351028, %v2701
    %v2711 = vshrl.u32 2102212464, %v2702
    %v2712 = vor.u32 %v2710, %v2711
    %v2713 = vshll.u32 2102212464, %v2701
    %v2714 = vshrl.u32 920167782, %v2702
    %v2715 = vor.u32 %v2713, %v2714
    %v2716 = vshll.u32 920167782, %v2701
    %v2717 = vshrl.u32 1326507024, %v2702
    %v2718 = vor.u32 %v2716, %v2717
    %vm2719 = vcmp.lt.s32.totalorder %v2700, 1
    %vm2720 = vcmp.lt.s32.totalorder %v2700, 2
    %vm2721 = vcmp.lt.s32.totalorder %v2700, 3
    %vm2722 = vcmp.lt.s32.totalorder %v2700, 4
    %v2723 = vsel %vm2719, %v2703, %v2706
    %v2724 = vsel %vm2722, %v2712, 2102212464
    %v2725 = vsel %vm2721, %v2709, %v2724
    %v2726 = vsel %vm2720, %v2723, %v2725
    %v2727 = vsel %vm2719, %v2706, %v2709
    %v2728 = vsel %vm2722, %v2715, 920167782
    %v2729 = vsel %vm2721, %v2712, %v2728
    %v2730 = vsel %vm2720, %v2727, %v2729
    %v2731 = vsel %vm2719, %v2709, %v2712
    %v2732 = vsel %vm2722, %v2718, 1326507024
    %v2733 = vsel %vm2721, %v2715, %v2732
    %v2734 = vsel %vm2720, %v2731, %v2733
    %v2735 = vshll.u32 %v2695, 8
    %v2736 = vand.u32 %v2735, 65535
    %v2737 = vshrl.u32 %v2735, 16
    %v2738 = vand.u32 %v2734, 65535
    %v2739 = vshrl.u32 %v2734, 16
    %v2740 = vmul.u32 %v2736, %v2738
    %v2741 = vmul.u32 %v2736, %v2739
    %v2742 = vmul.u32 %v2737, %v2738
    %v2743 = vmul.u32 %v2737, %v2739
    %v2744 = vshll.u32 %v2741, 16
    %v2745 = vshrl.u32 %v2741, 16
    %v2746 = vshll.u32 %v2742, 16
    %v2747 = vshrl.u32 %v2742, 16
    %vm2748 = vc.u32 %v2740, %v2744
    %v2749 = vsel %vm2748, 1, 0
    %v2750 = vadd.s32 %v2740, %v2744
    %v2751 = vadd.s32 %v2743, %v2749
    %vm2752 = vc.u32 %v2750, %v2746
    %v2753 = vsel %vm2752, 1, 0
    %v2754 = vadd.s32 %v2750, %v2746
    %v2755 = vadd.s32 %v2751, %v2753
    %v2756 = vadd.s32 %v2755, %v2745
    %v2757 = vadd.s32 %v2756, %v2747
    %v2758 = vand.u32 %v2735, 65535
    %v2759 = vshrl.u32 %v2735, 16
    %v2760 = vand.u32 %v2730, 65535
    %v2761 = vshrl.u32 %v2730, 16
    %v2762 = vmul.u32 %v2758, %v2760
    %v2763 = vmul.u32 %v2758, %v2761
    %v2764 = vmul.u32 %v2759, %v2760
    %v2765 = vmul.u32 %v2759, %v2761
    %v2766 = vshll.u32 %v2763, 16
    %v2767 = vshrl.u32 %v2763, 16
    %v2768 = vshll.u32 %v2764, 16
    %v2769 = vshrl.u32 %v2764, 16
    %vm2770 = vc.u32 %v2762, %v2766
    %v2771 = vsel %vm2770, 1, 0
    %v2772 = vadd.s32 %v2762, %v2766
    %v2773 = vadd.s32 %v2765, %v2771
    %vm2774 = vc.u32 %v2772, %v2768
    %v2775 = vsel %vm2774, 1, 0
    %v2776 = vadd.s32 %v2772, %v2768
    %v2777 = vadd.s32 %v2773, %v2775
    %v2778 = vadd.s32 %v2777, %v2767
    %v2779 = vadd.s32 %v2778, %v2769
    %v2780 = vmul.u32 %v2735, %v2726
    %v2781 = vadd.s32 %v2757, %v2776
    %vm2782 = vc.u32 %v2757, %v2776
    %v2783 = vadd.s32 %v2779, 1
    %v2784 = vsel %vm2782, %v2783, %v2779
    %v2785 = vadd.s32 %v2780, %v2784
    %v2786 = vadd.s32 %v2785, 536870912
    %v2787 = vshrl.u32 %v2786, 30
    %v2788 = vshll.u32 %v2787, 30
    %v2789 = vsub.s32 %v2785, %v2788
    %vm2790 = vcmp.lt.s32.totalorder %v2789, 0
    %v2791 = vsub.s32 0, %v2789
    %v2792 = vsel %vm2790, %v2791, %v2789
    %v2793 = vclz %v2792
    %v2794 = vsub.s32 %v2793, 2
    %vm2795 = vcmp.gt.s32.totalorder 0, %v2794
    %v2796 = vsel %vm2795, 0, %v2794
    %v2797 = vsub.s32 32, %v2796
    %v2798 = vshll.u32 %v2789, %v2796
    %v2799 = vshrl.u32 %v2781, %v2797
    %v2800 = vor.u32 %v2798, %v2799
    %v2801 = vsub.s32 4294967266, %v2796
    %v2802 = vadd.s32 %v2801, 127
    %v2803 = vshll.u32 %v2802, 23
    %v2804 = vor.u32 4788187, %v2803
    %v2805 = vand.u32 2147483647, %v2804
    %v2807 = vcvt.s32.f32 %v2800
    %v2808 = vmul.f32 %v2807, %v2805
    %v2809 = vxor.u32 %v2808, 2147483648
    %v2810 = vsel %vm2689, %v2809, %v2808
    %v2811 = vsub.s32 4, %v2787
    %v2812 = vsel %vm2689, %v2811, %v2787
    %v2813 = vsel %vm2688, %v2683, %v2810
    %v2814 = vsel %vm2688, 0, %v2812
    %v2815 = vmul.f32 %v2813, %v2813
    %v2816 = vmul.f32 %v2815, -0.001358992
    %v2817 = vadd.f32 %v2816, 0.041655596
    %v2818 = vmul.f32 %v2815, %v2817
    %v2819 = vadd.f32 %v2818, -0.4999988
    %v2820 = vmul.f32 %v2815, %v2819
    %v2821 = vadd.f32 1.0, %v2820
    %v2822 = vmul.f32 %v2813, %v2813
    %v2823 = vmul.f32 %v2822, -0.00019511016
    %v2824 = vadd.f32 %v2823, 0.008332121
    %v2825 = vmul.f32 %v2822, %v2824
    %v2826 = vadd.f32 %v2825, -0.16666654
    %v2827 = vmul.f32 %v2822, %v2826
    %v2828 = vadd.f32 %v2827, 1.0
    %v2829 = vmul.f32 %v2828, %v2813
    %vm2830 = vweird.f32 %v2683
    %v2831 = vadd.s32 %v2814, 3
    %v2832 = vand.u32 %v2831, 3
    %vm2833 = vcmp.lt.s32.totalorder %v2832, 2
    %vm2834 = vcmp.eq.s32.totalorder %v2832, 0
    %v2835 = vxor.u32 %v2829, 2147483648
    %v2836 = vsel %vm2834, %v2821, %v2835
    %vm2837 = vcmp.eq.s32.totalorder %v2832, 2
    %v2838 = vxor.u32 %v2821, 2147483648
    %v2839 = vsel %vm2837, %v2838, %v2829
    %v2840 = vsel %vm2833, %v2836, %v2839
    %v2841 = vsel %vm2830, nan, %v2840
    %v2842 = vand.u32 2147483647, %v2684
    %vm2843 = vcmp.le.f32.partialorder %v2842, 0.7853982
    %vm2844 = vcmp.lt.s32.totalorder %v2684, 0
    %v2845 = vand.u32 %v2684, 2139095040
    %v2846 = vshrl.u32 %v2845, 23
    %v2847 = vsub.s32 %v2846, 127
    %v2848 = vand.u32 2147483647, %v2684
    %v2849 = vand.u32 %v2848, 8388607
    %v2850 = vor.u32 %v2849, 8388608
    %v2851 = vsub.s32 0, %v2850
    %v2852 = vadd.s32 %v2847, 1
    %vm2853 = vcmp.gt.s32.totalorder %v2852, 0
    %v2854 = vsel %vm2853, %v2852, 0
    %v2855 = vshrl.u32 %v2854, 5
    %v2856 = vand.u32 %v2854, 31
    %v2857 = vsub.s32 32, %v2856
    %v2858 = vshrl.u32 683565275, %v2857
    %v2859 = vshll.u32 683565275, %v2856
    %v2860 = vshrl.u32 2475754826, %v2857
    %v2861 = vor.u32 %v2859, %v2860
    %v2862 = vshll.u32 2475754826, %v2856
    %v2863 = vshrl.u32 2131351028, %v2857
    %v2864 = vor.u32 %v2862, %v2863
    %v2865 = vshll.u32 2131351028, %v2856
    %v2866 = vshrl.u32 2102212464, %v2857
    %v2867 = vor.u32 %v2865, %v2866
    %v2868 = vshll.u32 2102212464, %v2856
    %v2869 = vshrl.u32 920167782, %v2857
    %v2870 = vor.u32 %v2868, %v2869
    %v2871 = vshll.u32 920167782, %v2856
    %v2872 = vshrl.u32 1326507024, %v2857
    %v2873 = vor.u32 %v2871, %v2872
    %vm2874 = vcmp.lt.s32.totalorder %v2855, 1
    %vm2875 = vcmp.lt.s32.totalorder %v2855, 2
    %vm2876 = vcmp.lt.s32.totalorder %v2855, 3
    %vm2877 = vcmp.lt.s32.totalorder %v2855, 4
    %v2878 = vsel %vm2874, %v2858, %v2861
    %v2879 = vsel %vm2877, %v2867, 2102212464
    %v2880 = vsel %vm2876, %v2864, %v2879
    %v2881 = vsel %vm2875, %v2878, %v2880
    %v2882 = vsel %vm2874, %v2861, %v2864
    %v2883 = vsel %vm2877, %v2870, 920167782
    %v2884 = vsel %vm2876, %v2867, %v2883
    %v2885 = vsel %vm2875, %v2882, %v2884
    %v2886 = vsel %vm2874, %v2864, %v2867
    %v2887 = vsel %vm2877, %v2873, 1326507024
    %v2888 = vsel %vm2876, %v2870, %v2887
    %v2889 = vsel %vm2875, %v2886, %v2888
    %v2890 = vshll.u32 %v2850, 8
    %v2891 = vand.u32 %v2890, 65535
    %v2892 = vshrl.u32 %v2890, 16
    %v2893 = vand.u32 %v2889, 65535
    %v2894 = vshrl.u32 %v2889, 16
    %v2895 = vmul.u32 %v2891, %v2893
    %v2896 = vmul.u32 %v2891, %v2894
    %v2897 = vmul.u32 %v2892, %v2893
    %v2898 = vmul.u32 %v2892, %v2894
    %v2899 = vshll.u32 %v2896, 16
    %v2900 = vshrl.u32 %v2896, 16
    %v2901 = vshll.u32 %v2897, 16
    %v2902 = vshrl.u32 %v2897, 16
    %vm2903 = vc.u32 %v2895, %v2899
    %v2904 = vsel %vm2903, 1, 0
    %v2905 = vadd.s32 %v2895, %v2899
    %v2906 = vadd.s32 %v2898, %v2904
    %vm2907 = vc.u32 %v2905, %v2901
    %v2908 = vsel %vm2907, 1, 0
    %v2909 = vadd.s32 %v2905, %v2901
    %v2910 = vadd.s32 %v2906, %v2908
    %v2911 = vadd.s32 %v2910, %v2900
    %v2912 = vadd.s32 %v2911, %v2902
    %v2913 = vand.u32 %v2890, 65535
    %v2914 = vshrl.u32 %v2890, 16
    %v2915 = vand.u32 %v2885, 65535
    %v2916 = vshrl.u32 %v2885, 16
    %v2917 = vmul.u32 %v2913, %v2915
    %v2918 = vmul.u32 %v2913, %v2916
    %v2919 = vmul.u32 %v2914, %v2915
    %v2920 = vmul.u32 %v2914, %v2916
    %v2921 = vshll.u32 %v2918, 16
    %v2922 = vshrl.u32 %v2918, 16
    %v2923 = vshll.u32 %v2919, 16
    %v2924 = vshrl.u32 %v2919, 16
    %vm2925 = vc.u32 %v2917, %v2921
    %v2926 = vsel %vm2925, 1, 0
    %v2927 = vadd.s32 %v2917, %v2921
    %v2928 = vadd.s32 %v2920, %v2926
    %vm2929 = vc.u32 %v2927, %v2923
    %v2930 = vsel %vm2929, 1, 0
    %v2931 = vadd.s32 %v2927, %v2923
    %v2932 = vadd.s32 %v2928, %v2930
    %v2933 = vadd.s32 %v2932, %v2922
    %v2934 = vadd.s32 %v2933, %v2924
    %v2935 = vmul.u32 %v2890, %v2881
    %v2936 = vadd.s32 %v2912, %v2931
    %vm2937 = vc.u32 %v2912, %v2931
    %v2938 = vadd.s32 %v2934, 1
    %v2939 = vsel %vm2937, %v2938, %v2934
    %v2940 = vadd.s32 %v2935, %v2939
    %v2941 = vadd.s32 %v2940, 536870912
    %v2942 = vshrl.u32 %v2941, 30
    %v2943 = vshll.u32 %v2942, 30
    %v2944 = vsub.s32 %v2940, %v2943
    %vm2945 = vcmp.lt.s32.totalorder %v2944, 0
    %v2946 = vsub.s32 0, %v2944
    %v2947 = vsel %vm2945, %v2946, %v2944
    %v2948 = vclz %v2947
    %v2949 = vsub.s32 %v2948, 2
    %vm2950 = vcmp.gt.s32.totalorder 0, %v2949
    %v2951 = vsel %vm2950, 0, %v2949
    %v2952 = vsub.s32 32, %v2951
    %v2953 = vshll.u32 %v2944, %v2951
    %v2954 = vshrl.u32 %v2936, %v2952
    %v2955 = vor.u32 %v2953, %v2954
    %v2956 = vsub.s32 4294967266, %v2951
    %v2957 = vadd.s32 %v2956, 127
    %v2958 = vshll.u32 %v2957, 23
    %v2959 = vor.u32 4788187, %v2958
    %v2960 = vand.u32 2147483647, %v2959
    %v2962 = vcvt.s32.f32 %v2955
    %v2963 = vmul.f32 %v2962, %v2960
    %v2964 = vxor.u32 %v2963, 2147483648
    %v2965 = vsel %vm2844, %v2964, %v2963
    %v2966 = vsub.s32 4, %v2942
    %v2967 = vsel %vm2844, %v2966, %v2942
    %v2968 = vsel %vm2843, %v2684, %v2965
    %v2969 = vsel %vm2843, 0, %v2967
    %v2970 = vmul.f32 %v2968, %v2968
    %v2971 = vmul.f32 %v2970, -0.001358992
    %v2972 = vadd.f32 %v2971, 0.041655596
    %v2973 = vmul.f32 %v2970, %v2972
    %v2974 = vadd.f32 %v2973, -0.4999988
    %v2975 = vmul.f32 %v2970, %v2974
    %v2976 = vadd.f32 1.0, %v2975
    %v2977 = vmul.f32 %v2968, %v2968
    %v2978 = vmul.f32 %v2977, -0.00019511016
    %v2979 = vadd.f32 %v2978, 0.008332121
    %v2980 = vmul.f32 %v2977, %v2979
    %v2981 = vadd.f32 %v2980, -0.16666654
    %v2982 = vmul.f32 %v2977, %v2981
    %v2983 = vadd.f32 %v2982, 1.0
    %v2984 = vmul.f32 %v2983, %v2968
    %vm2985 = vweird.f32 %v2684
    %v2986 = vadd.s32 %v2969, 3
    %v2987 = vand.u32 %v2986, 3
    %vm2988 = vcmp.lt.s32.totalorder %v2987, 2
    %vm2989 = vcmp.eq.s32.totalorder %v2987, 0
    %v2990 = vxor.u32 %v2984, 2147483648
    %v2991 = vsel %vm2989, %v2976, %v2990
    %vm2992 = vcmp.eq.s32.totalorder %v2987, 2
    %v2993 = vxor.u32 %v2976, 2147483648
    %v2994 = vsel %vm2992, %v2993, %v2984
    %v2995 = vsel %vm2988, %v2991, %v2994
    %v2996 = vsel %vm2985, nan, %v2995
    %v2997 = vand.u32 2147483647, %v2685
    %vm2998 = vcmp.le.f32.partialorder %v2997, 0.7853982
    %vm2999 = vcmp.lt.s32.totalorder %v2685, 0
    %v3000 = vand.u32 %v2685, 2139095040
    %v3001 = vshrl.u32 %v3000, 23
    %v3002 = vsub.s32 %v3001, 127
    %v3003 = vand.u32 2147483647, %v2685
    %v3004 = vand.u32 %v3003, 8388607
    %v3005 = vor.u32 %v3004, 8388608
    %v3006 = vsub.s32 0, %v3005
    %v3007 = vadd.s32 %v3002, 1
    %vm3008 = vcmp.gt.s32.totalorder %v3007, 0
    %v3009 = vsel %vm3008, %v3007, 0
    %v3010 = vshrl.u32 %v3009, 5
    %v3011 = vand.u32 %v3009, 31
    %v3012 = vsub.s32 32, %v3011
    %v3013 = vshrl.u32 683565275, %v3012
    %v3014 = vshll.u32 683565275, %v3011
    %v3015 = vshrl.u32 2475754826, %v3012
    %v3016 = vor.u32 %v3014, %v3015
    %v3017 = vshll.u32 2475754826, %v3011
    %v3018 = vshrl.u32 2131351028, %v3012
    %v3019 = vor.u32 %v3017, %v3018
    %v3020 = vshll.u32 2131351028, %v3011
    %v3021 = vshrl.u32 2102212464, %v3012
    %v3022 = vor.u32 %v3020, %v3021
    %v3023 = vshll.u32 2102212464, %v3011
    %v3024 = vshrl.u32 920167782, %v3012
    %v3025 = vor.u32 %v3023, %v3024
    %v3026 = vshll.u32 920167782, %v3011
    %v3027 = vshrl.u32 1326507024, %v3012
    %v3028 = vor.u32 %v3026, %v3027
    %vm3029 = vcmp.lt.s32.totalorder %v3010, 1
    %vm3030 = vcmp.lt.s32.totalorder %v3010, 2
    %vm3031 = vcmp.lt.s32.totalorder %v3010, 3
    %vm3032 = vcmp.lt.s32.totalorder %v3010, 4
    %v3033 = vsel %vm3029, %v3013, %v3016
    %v3034 = vsel %vm3032, %v3022, 2102212464
    %v3035 = vsel %vm3031, %v3019, %v3034
    %v3036 = vsel %vm3030, %v3033, %v3035
    %v3037 = vsel %vm3029, %v3016, %v3019
    %v3038 = vsel %vm3032, %v3025, 920167782
    %v3039 = vsel %vm3031, %v3022, %v3038
    %v3040 = vsel %vm3030, %v3037, %v3039
    %v3041 = vsel %vm3029, %v3019, %v3022
    %v3042 = vsel %vm3032, %v3028, 1326507024
    %v3043 = vsel %vm3031, %v3025, %v3042
    %v3044 = vsel %vm3030, %v3041, %v3043
    %v3045 = vshll.u32 %v3005, 8
    %v3046 = vand.u32 %v3045, 65535
    %v3047 = vshrl.u32 %v3045, 16
    %v3048 = vand.u32 %v3044, 65535
    %v3049 = vshrl.u32 %v3044, 16
    %v3050 = vmul.u32 %v3046, %v3048
    %v3051 = vmul.u32 %v3046, %v3049
    %v3052 = vmul.u32 %v3047, %v3048
    %v3053 = vmul.u32 %v3047, %v3049
    %v3054 = vshll.u32 %v3051, 16
    %v3055 = vshrl.u32 %v3051, 16
    %v3056 = vshll.u32 %v3052, 16
    %v3057 = vshrl.u32 %v3052, 16
    %vm3058 = vc.u32 %v3050, %v3054
    %v3059 = vsel %vm3058, 1, 0
    %v3060 = vadd.s32 %v3050, %v3054
    %v3061 = vadd.s32 %v3053, %v3059
    %vm3062 = vc.u32 %v3060, %v3056
    %v3063 = vsel %vm3062, 1, 0
    %v3064 = vadd.s32 %v3060, %v3056
    %v3065 = vadd.s32 %v3061, %v3063
    %v3066 = vadd.s32 %v3065, %v3055
    %v3067 = vadd.s32 %v3066, %v3057
    %v3068 = vand.u32 %v3045, 65535
    %v3069 = vshrl.u32 %v3045, 16
    %v3070 = vand.u32 %v3040, 65535
    %v3071 = vshrl.u32 %v3040, 16
    %v3072 = vmul.u32 %v3068, %v3070
    %v3073 = vmul.u32 %v3068, %v3071
    %v3074 = vmul.u32 %v3069, %v3070
    %v3075 = vmul.u32 %v3069, %v3071
    %v3076 = vshll.u32 %v3073, 16
    %v3077 = vshrl.u32 %v3073, 16
    %v3078 = vshll.u32 %v3074, 16
    %v3079 = vshrl.u32 %v3074, 16
    %vm3080 = vc.u32 %v3072, %v3076
    %v3081 = vsel %vm3080, 1, 0
    %v3082 = vadd.s32 %v3072, %v3076
    %v3083 = vadd.s32 %v3075, %v3081
    %vm3084 = vc.u32 %v3082, %v3078
    %v3085 = vsel %vm3084, 1, 0
    %v3086 = vadd.s32 %v3082, %v3078
    %v3087 = vadd.s32 %v3083, %v3085
    %v3088 = vadd.s32 %v3087, %v3077
    %v3089 = vadd.s32 %v3088, %v3079
    %v3090 = vmul.u32 %v3045, %v3036
    %v3091 = vadd.s32 %v3067, %v3086
    %vm3092 = vc.u32 %v3067, %v3086
    %v3093 = vadd.s32 %v3089, 1
    %v3094 = vsel %vm3092, %v3093, %v3089
    %v3095 = vadd.s32 %v3090, %v3094
    %v3096 = vadd.s32 %v3095, 536870912
    %v3097 = vshrl.u32 %v3096, 30
    %v3098 = vshll.u32 %v3097, 30
    %v3099 = vsub.s32 %v3095, %v3098
    %vm3100 = vcmp.lt.s32.totalorder %v3099, 0
    %v3101 = vsub.s32 0, %v3099
    %v3102 = vsel %vm3100, %v3101, %v3099
    %v3103 = vclz %v3102
    %v3104 = vsub.s32 %v3103, 2
    %vm3105 = vcmp.gt.s32.totalorder 0, %v3104
    %v3106 = vsel %vm3105, 0, %v3104
    %v3107 = vsub.s32 32, %v3106
    %v3108 = vshll.u32 %v3099, %v3106
    %v3109 = vshrl.u32 %v3091, %v3107
    %v3110 = vor.u32 %v3108, %v3109
    %v3111 = vsub.s32 4294967266, %v3106
    %v3112 = vadd.s32 %v3111, 127
    %v3113 = vshll.u32 %v3112, 23
    %v3114 = vor.u32 4788187, %v3113
    %v3115 = vand.u32 2147483647, %v3114
    %v3117 = vcvt.s32.f32 %v3110
    %v3118 = vmul.f32 %v3117, %v3115
    %v3119 = vxor.u32 %v3118, 2147483648
    %v3120 = vsel %vm2999, %v3119, %v3118
    %v3121 = vsub.s32 4, %v3097
    %v3122 = vsel %vm2999, %v3121, %v3097
    %v3123 = vsel %vm2998, %v2685, %v3120
    %v3124 = vsel %vm2998, 0, %v3122
    %v3125 = vmul.f32 %v3123, %v3123
    %v3126 = vmul.f32 %v3125, -0.001358992
    %v3127 = vadd.f32 %v3126, 0.041655596
    %v3128 = vmul.f32 %v3125, %v3127
    %v3129 = vadd.f32 %v3128, -0.4999988
    %v3130 = vmul.f32 %v3125, %v3129
    %v3131 = vadd.f32 1.0, %v3130
    %v3132 = vmul.f32 %v3123, %v3123
    %v3133 = vmul.f32 %v3132, -0.00019511016
    %v3134 = vadd.f32 %v3133, 0.008332121
    %v3135 = vmul.f32 %v3132, %v3134
    %v3136 = vadd.f32 %v3135, -0.16666654
    %v3137 = vmul.f32 %v3132, %v3136
    %v3138 = vadd.f32 %v3137, 1.0
    %v3139 = vmul.f32 %v3138, %v3123
    %vm3140 = vweird.f32 %v2685
    %v3141 = vadd.s32 %v3124, 3
    %v3142 = vand.u32 %v3141, 3
    %vm3143 = vcmp.lt.s32.totalorder %v3142, 2
    %vm3144 = vcmp.eq.s32.totalorder %v3142, 0
    %v3145 = vxor.u32 %v3139, 2147483648
    %v3146 = vsel %vm3144, %v3131, %v3145
    %vm3147 = vcmp.eq.s32.totalorder %v3142, 2
    %v3148 = vxor.u32 %v3131, 2147483648
    %v3149 = vsel %vm3147, %v3148, %v3139
    %v3150 = vsel %vm3143, %v3146, %v3149
    %v3151 = vsel %vm3140, nan, %v3150
    %v3152 = vand.u32 2147483647, %v2686
    %vm3153 = vcmp.le.f32.partialorder %v3152, 0.7853982
    %vm3154 = vcmp.lt.s32.totalorder %v2686, 0
    %v3155 = vand.u32 %v2686, 2139095040
    %v3156 = vshrl.u32 %v3155, 23
    %v3157 = vsub.s32 %v3156, 127
    %v3158 = vand.u32 2147483647, %v2686
    %v3159 = vand.u32 %v3158, 8388607
    %v3160 = vor.u32 %v3159, 8388608
    %v3161 = vsub.s32 0, %v3160
    %v3162 = vadd.s32 %v3157, 1
    %vm3163 = vcmp.gt.s32.totalorder %v3162, 0
    %v3164 = vsel %vm3163, %v3162, 0
    %v3165 = vshrl.u32 %v3164, 5
    %v3166 = vand.u32 %v3164, 31
    %v3167 = vsub.s32 32, %v3166
    %v3168 = vshrl.u32 683565275, %v3167
    %v3169 = vshll.u32 683565275, %v3166
    %v3170 = vshrl.u32 2475754826, %v3167
    %v3171 = vor.u32 %v3169, %v3170
    %v3172 = vshll.u32 2475754826, %v3166
    %v3173 = vshrl.u32 2131351028, %v3167
    %v3174 = vor.u32 %v3172, %v3173
    %v3175 = vshll.u32 2131351028, %v3166
    %v3176 = vshrl.u32 2102212464, %v3167
    %v3177 = vor.u32 %v3175, %v3176
    %v3178 = vshll.u32 2102212464, %v3166
    %v3179 = vshrl.u32 920167782, %v3167
    %v3180 = vor.u32 %v3178, %v3179
    %v3181 = vshll.u32 920167782, %v3166
    %v3182 = vshrl.u32 1326507024, %v3167
    %v3183 = vor.u32 %v3181, %v3182
    %vm3184 = vcmp.lt.s32.totalorder %v3165, 1
    %vm3185 = vcmp.lt.s32.totalorder %v3165, 2
    %vm3186 = vcmp.lt.s32.totalorder %v3165, 3
    %vm3187 = vcmp.lt.s32.totalorder %v3165, 4
    %v3188 = vsel %vm3184, %v3168, %v3171
    %v3189 = vsel %vm3187, %v3177, 2102212464
    %v3190 = vsel %vm3186, %v3174, %v3189
    %v3191 = vsel %vm3185, %v3188, %v3190
    %v3192 = vsel %vm3184, %v3171, %v3174
    %v3193 = vsel %vm3187, %v3180, 920167782
    %v3194 = vsel %vm3186, %v3177, %v3193
    %v3195 = vsel %vm3185, %v3192, %v3194
    %v3196 = vsel %vm3184, %v3174, %v3177
    %v3197 = vsel %vm3187, %v3183, 1326507024
    %v3198 = vsel %vm3186, %v3180, %v3197
    %v3199 = vsel %vm3185, %v3196, %v3198
    %v3200 = vshll.u32 %v3160, 8
    %v3201 = vand.u32 %v3200, 65535
    %v3202 = vshrl.u32 %v3200, 16
    %v3203 = vand.u32 %v3199, 65535
    %v3204 = vshrl.u32 %v3199, 16
    %v3205 = vmul.u32 %v3201, %v3203
    %v3206 = vmul.u32 %v3201, %v3204
    %v3207 = vmul.u32 %v3202, %v3203
    %v3208 = vmul.u32 %v3202, %v3204
    %v3209 = vshll.u32 %v3206, 16
    %v3210 = vshrl.u32 %v3206, 16
    %v3211 = vshll.u32 %v3207, 16
    %v3212 = vshrl.u32 %v3207, 16
    %vm3213 = vc.u32 %v3205, %v3209
    %v3214 = vsel %vm3213, 1, 0
    %v3215 = vadd.s32 %v3205, %v3209
    %v3216 = vadd.s32 %v3208, %v3214
    %vm3217 = vc.u32 %v3215, %v3211
    %v3218 = vsel %vm3217, 1, 0
    %v3219 = vadd.s32 %v3215, %v3211
    %v3220 = vadd.s32 %v3216, %v3218
    %v3221 = vadd.s32 %v3220, %v3210
    %v3222 = vadd.s32 %v3221, %v3212
    %v3223 = vand.u32 %v3200, 65535
    %v3224 = vshrl.u32 %v3200, 16
    %v3225 = vand.u32 %v3195, 65535
    %v3226 = vshrl.u32 %v3195, 16
    %v3227 = vmul.u32 %v3223, %v3225
    %v3228 = vmul.u32 %v3223, %v3226
    %v3229 = vmul.u32 %v3224, %v3225
    %v3230 = vmul.u32 %v3224, %v3226
    %v3231 = vshll.u32 %v3228, 16
    %v3232 = vshrl.u32 %v3228, 16
    %v3233 = vshll.u32 %v3229, 16
    %v3234 = vshrl.u32 %v3229, 16
    %vm3235 = vc.u32 %v3227, %v3231
    %v3236 = vsel %vm3235, 1, 0
    %v3237 = vadd.s32 %v3227, %v3231
    %v3238 = vadd.s32 %v3230, %v3236
    %vm3239 = vc.u32 %v3237, %v3233
    %v3240 = vsel %vm3239, 1, 0
    %v3241 = vadd.s32 %v3237, %v3233
    %v3242 = vadd.s32 %v3238, %v3240
    %v3243 = vadd.s32 %v3242, %v3232
    %v3244 = vadd.s32 %v3243, %v3234
    %v3245 = vmul.u32 %v3200, %v3191
    %v3246 = vadd.s32 %v3222, %v3241
    %vm3247 = vc.u32 %v3222, %v3241
    %v3248 = vadd.s32 %v3244, 1
    %v3249 = vsel %vm3247, %v3248, %v3244
    %v3250 = vadd.s32 %v3245, %v3249
    %v3251 = vadd.s32 %v3250, 536870912
    %v3252 = vshrl.u32 %v3251, 30
    %v3253 = vshll.u32 %v3252, 30
    %v3254 = vsub.s32 %v3250, %v3253
    %vm3255 = vcmp.lt.s32.totalorder %v3254, 0
    %v3256 = vsub.s32 0, %v3254
    %v3257 = vsel %vm3255, %v3256, %v3254
    %v3258 = vclz %v3257
    %v3259 = vsub.s32 %v3258, 2
    %vm3260 = vcmp.gt.s32.totalorder 0, %v3259
    %v3261 = vsel %vm3260, 0, %v3259
    %v3262 = vsub.s32 32, %v3261
    %v3263 = vshll.u32 %v3254, %v3261
    %v3264 = vshrl.u32 %v3246, %v3262
    %v3265 = vor.u32 %v3263, %v3264
    %v3266 = vsub.s32 4294967266, %v3261
    %v3267 = vadd.s32 %v3266, 127
    %v3268 = vshll.u32 %v3267, 23
    %v3269 = vor.u32 4788187, %v3268
    %v3270 = vand.u32 2147483647, %v3269
    %v3272 = vcvt.s32.f32 %v3265
    %v3273 = vmul.f32 %v3272, %v3270
    %v3274 = vxor.u32 %v3273, 2147483648
    %v3275 = vsel %vm3154, %v3274, %v3273
    %v3276 = vsub.s32 4, %v3252
    %v3277 = vsel %vm3154, %v3276, %v3252
    %v3278 = vsel %vm3153, %v2686, %v3275
    %v3279 = vsel %vm3153, 0, %v3277
    %v3280 = vmul.f32 %v3278, %v3278
    %v3281 = vmul.f32 %v3280, -0.001358992
    %v3282 = vadd.f32 %v3281, 0.041655596
    %v3283 = vmul.f32 %v3280, %v3282
    %v3284 = vadd.f32 %v3283, -0.4999988
    %v3285 = vmul.f32 %v3280, %v3284
    %v3286 = vadd.f32 1.0, %v3285
    %v3287 = vmul.f32 %v3278, %v3278
    %v3288 = vmul.f32 %v3287, -0.00019511016
    %v3289 = vadd.f32 %v3288, 0.008332121
    %v3290 = vmul.f32 %v3287, %v3289
    %v3291 = vadd.f32 %v3290, -0.16666654
    %v3292 = vmul.f32 %v3287, %v3291
    %v3293 = vadd.f32 %v3292, 1.0
    %v3294 = vmul.f32 %v3293, %v3278
    %vm3295 = vweird.f32 %v2686
    %v3296 = vadd.s32 %v3279, 3
    %v3297 = vand.u32 %v3296, 3
    %vm3298 = vcmp.lt.s32.totalorder %v3297, 2
    %vm3299 = vcmp.eq.s32.totalorder %v3297, 0
    %v3300 = vxor.u32 %v3294, 2147483648
    %v3301 = vsel %vm3299, %v3286, %v3300
    %vm3302 = vcmp.eq.s32.totalorder %v3297, 2
    %v3303 = vxor.u32 %v3286, 2147483648
    %v3304 = vsel %vm3302, %v3303, %v3294
    %v3305 = vsel %vm3298, %v3301, %v3304
    %v3306 = vsel %vm3295, nan, %v3305
    %v3307 = vand.u32 2147483647, %v2683
    %vm3308 = vcmp.le.f32.partialorder %v3307, 0.7853982
    %vm3309 = vcmp.lt.s32.totalorder %v2683, 0
    %v3310 = vand.u32 %v2683, 2139095040
    %v3311 = vshrl.u32 %v3310, 23
    %v3312 = vsub.s32 %v3311, 127
    %v3313 = vand.u32 2147483647, %v2683
    %v3314 = vand.u32 %v3313, 8388607
    %v3315 = vor.u32 %v3314, 8388608
    %v3316 = vsub.s32 0, %v3315
    %v3317 = vadd.s32 %v3312, 1
    %vm3318 = vcmp.gt.s32.totalorder %v3317, 0
    %v3319 = vsel %vm3318, %v3317, 0
    %v3320 = vshrl.u32 %v3319, 5
    %v3321 = vand.u32 %v3319, 31
    %v3322 = vsub.s32 32, %v3321
    %v3323 = vshrl.u32 683565275, %v3322
    %v3324 = vshll.u32 683565275, %v3321
    %v3325 = vshrl.u32 2475754826, %v3322
    %v3326 = vor.u32 %v3324, %v3325
    %v3327 = vshll.u32 2475754826, %v3321
    %v3328 = vshrl.u32 2131351028, %v3322
    %v3329 = vor.u32 %v3327, %v3328
    %v3330 = vshll.u32 2131351028, %v3321
    %v3331 = vshrl.u32 2102212464, %v3322
    %v3332 = vor.u32 %v3330, %v3331
    %v3333 = vshll.u32 2102212464, %v3321
    %v3334 = vshrl.u32 920167782, %v3322
    %v3335 = vor.u32 %v3333, %v3334
    %v3336 = vshll.u32 920167782, %v3321
    %v3337 = vshrl.u32 1326507024, %v3322
    %v3338 = vor.u32 %v3336, %v3337
    %vm3339 = vcmp.lt.s32.totalorder %v3320, 1
    %vm3340 = vcmp.lt.s32.totalorder %v3320, 2
    %vm3341 = vcmp.lt.s32.totalorder %v3320, 3
    %vm3342 = vcmp.lt.s32.totalorder %v3320, 4
    %v3343 = vsel %vm3339, %v3323, %v3326
    %v3344 = vsel %vm3342, %v3332, 2102212464
    %v3345 = vsel %vm3341, %v3329, %v3344
    %v3346 = vsel %vm3340, %v3343, %v3345
    %v3347 = vsel %vm3339, %v3326, %v3329
    %v3348 = vsel %vm3342, %v3335, 920167782
    %v3349 = vsel %vm3341, %v3332, %v3348
    %v3350 = vsel %vm3340, %v3347, %v3349
    %v3351 = vsel %vm3339, %v3329, %v3332
    %v3352 = vsel %vm3342, %v3338, 1326507024
    %v3353 = vsel %vm3341, %v3335, %v3352
    %v3354 = vsel %vm3340, %v3351, %v3353
    %v3355 = vshll.u32 %v3315, 8
    %v3356 = vand.u32 %v3355, 65535
    %v3357 = vshrl.u32 %v3355, 16
    %v3358 = vand.u32 %v3354, 65535
    %v3359 = vshrl.u32 %v3354, 16
    %v3360 = vmul.u32 %v3356, %v3358
    %v3361 = vmul.u32 %v3356, %v3359
    %v3362 = vmul.u32 %v3357, %v3358
    %v3363 = vmul.u32 %v3357, %v3359
    %v3364 = vshll.u32 %v3361, 16
    %v3365 = vshrl.u32 %v3361, 16
    %v3366 = vshll.u32 %v3362, 16
    %v3367 = vshrl.u32 %v3362, 16
    %vm3368 = vc.u32 %v3360, %v3364
    %v3369 = vsel %vm3368, 1, 0
    %v3370 = vadd.s32 %v3360, %v3364
    %v3371 = vadd.s32 %v3363, %v3369
    %vm3372 = vc.u32 %v3370, %v3366
    %v3373 = vsel %vm3372, 1, 0
    %v3374 = vadd.s32 %v3370, %v3366
    %v3375 = vadd.s32 %v3371, %v3373
    %v3376 = vadd.s32 %v3375, %v3365
    %v3377 = vadd.s32 %v3376, %v3367
    %v3378 = vand.u32 %v3355, 65535
    %v3379 = vshrl.u32 %v3355, 16
    %v3380 = vand.u32 %v3350, 65535
    %v3381 = vshrl.u32 %v3350, 16
    %v3382 = vmul.u32 %v3378, %v3380
    %v3383 = vmul.u32 %v3378, %v3381
    %v3384 = vmul.u32 %v3379, %v3380
    %v3385 = vmul.u32 %v3379, %v3381
    %v3386 = vshll.u32 %v3383, 16
    %v3387 = vshrl.u32 %v3383, 16
    %v3388 = vshll.u32 %v3384, 16
    %v3389 = vshrl.u32 %v3384, 16
    %vm3390 = vc.u32 %v3382, %v3386
    %v3391 = vsel %vm3390, 1, 0
    %v3392 = vadd.s32 %v3382, %v3386
    %v3393 = vadd.s32 %v3385, %v3391
    %vm3394 = vc.u32 %v3392, %v3388
    %v3395 = vsel %vm3394, 1, 0
    %v3396 = vadd.s32 %v3392, %v3388
    %v3397 = vadd.s32 %v3393, %v3395
    %v3398 = vadd.s32 %v3397, %v3387
    %v3399 = vadd.s32 %v3398, %v3389
    %v3400 = vmul.u32 %v3355, %v3346
    %v3401 = vadd.s32 %v3377, %v3396
    %vm3402 = vc.u32 %v3377, %v3396
    %v3403 = vadd.s32 %v3399, 1
    %v3404 = vsel %vm3402, %v3403, %v3399
    %v3405 = vadd.s32 %v3400, %v3404
    %v3406 = vadd.s32 %v3405, 536870912
    %v3407 = vshrl.u32 %v3406, 30
    %v3408 = vshll.u32 %v3407, 30
    %v3409 = vsub.s32 %v3405, %v3408
    %vm3410 = vcmp.lt.s32.totalorder %v3409, 0
    %v3411 = vsub.s32 0, %v3409
    %v3412 = vsel %vm3410, %v3411, %v3409
    %v3413 = vclz %v3412
    %v3414 = vsub.s32 %v3413, 2
    %vm3415 = vcmp.gt.s32.totalorder 0, %v3414
    %v3416 = vsel %vm3415, 0, %v3414
    %v3417 = vsub.s32 32, %v3416
    %v3418 = vshll.u32 %v3409, %v3416
    %v3419 = vshrl.u32 %v3401, %v3417
    %v3420 = vor.u32 %v3418, %v3419
    %v3421 = vsub.s32 4294967266, %v3416
    %v3422 = vadd.s32 %v3421, 127
    %v3423 = vshll.u32 %v3422, 23
    %v3424 = vor.u32 4788187, %v3423
    %v3425 = vand.u32 2147483647, %v3424
    %v3427 = vcvt.s32.f32 %v3420
    %v3428 = vmul.f32 %v3427, %v3425
    %v3429 = vxor.u32 %v3428, 2147483648
    %v3430 = vsel %vm3309, %v3429, %v3428
    %v3431 = vsub.s32 4, %v3407
    %v3432 = vsel %vm3309, %v3431, %v3407
    %v3433 = vsel %vm3308, %v2683, %v3430
    %v3434 = vsel %vm3308, 0, %v3432
    %v3435 = vmul.f32 %v3433, %v3433
    %v3436 = vmul.f32 %v3435, -0.001358992
    %v3437 = vadd.f32 %v3436, 0.041655596
    %v3438 = vmul.f32 %v3435, %v3437
    %v3439 = vadd.f32 %v3438, -0.4999988
    %v3440 = vmul.f32 %v3435, %v3439
    %v3441 = vadd.f32 1.0, %v3440
    %v3442 = vmul.f32 %v3433, %v3433
    %v3443 = vmul.f32 %v3442, -0.00019511016
    %v3444 = vadd.f32 %v3443, 0.008332121
    %v3445 = vmul.f32 %v3442, %v3444
    %v3446 = vadd.f32 %v3445, -0.16666654
    %v3447 = vmul.f32 %v3442, %v3446
    %v3448 = vadd.f32 %v3447, 1.0
    %v3449 = vmul.f32 %v3448, %v3433
    %vm3450 = vweird.f32 %v2683
    %v3451 = vand.u32 %v3434, 3
    %vm3452 = vcmp.lt.s32.totalorder %v3451, 2
    %vm3453 = vcmp.eq.s32.totalorder %v3451, 0
    %v3454 = vxor.u32 %v3449, 2147483648
    %v3455 = vsel %vm3453, %v3441, %v3454
    %vm3456 = vcmp.eq.s32.totalorder %v3451, 2
    %v3457 = vxor.u32 %v3441, 2147483648
    %v3458 = vsel %vm3456, %v3457, %v3449
    %v3459 = vsel %vm3452, %v3455, %v3458
    %v3460 = vsel %vm3450, nan, %v3459
    %v3461 = vand.u32 2147483647, %v2684
    %vm3462 = vcmp.le.f32.partialorder %v3461, 0.7853982
    %vm3463 = vcmp.lt.s32.totalorder %v2684, 0
    %v3464 = vand.u32 %v2684, 2139095040
    %v3465 = vshrl.u32 %v3464, 23
    %v3466 = vsub.s32 %v3465, 127
    %v3467 = vand.u32 2147483647, %v2684
    %v3468 = vand.u32 %v3467, 8388607
    %v3469 = vor.u32 %v3468, 8388608
    %v3470 = vsub.s32 0, %v3469
    %v3471 = vadd.s32 %v3466, 1
    %vm3472 = vcmp.gt.s32.totalorder %v3471, 0
    %v3473 = vsel %vm3472, %v3471, 0
    %v3474 = vshrl.u32 %v3473, 5
    %v3475 = vand.u32 %v3473, 31
    %v3476 = vsub.s32 32, %v3475
    %v3477 = vshrl.u32 683565275, %v3476
    %v3478 = vshll.u32 683565275, %v3475
    %v3479 = vshrl.u32 2475754826, %v3476
    %v3480 = vor.u32 %v3478, %v3479
    %v3481 = vshll.u32 2475754826, %v3475
    %v3482 = vshrl.u32 2131351028, %v3476
    %v3483 = vor.u32 %v3481, %v3482
    %v3484 = vshll.u32 2131351028, %v3475
    %v3485 = vshrl.u32 2102212464, %v3476
    %v3486 = vor.u32 %v3484, %v3485
    %v3487 = vshll.u32 2102212464, %v3475
    %v3488 = vshrl.u32 920167782, %v3476
    %v3489 = vor.u32 %v3487, %v3488
    %v3490 = vshll.u32 920167782, %v3475
    %v3491 = vshrl.u32 1326507024, %v3476
    %v3492 = vor.u32 %v3490, %v3491
    %vm3493 = vcmp.lt.s32.totalorder %v3474, 1
    %vm3494 = vcmp.lt.s32.totalorder %v3474, 2
    %vm3495 = vcmp.lt.s32.totalorder %v3474, 3
    %vm3496 = vcmp.lt.s32.totalorder %v3474, 4
    %v3497 = vsel %vm3493, %v3477, %v3480
    %v3498 = vsel %vm3496, %v3486, 2102212464
    %v3499 = vsel %vm3495, %v3483, %v3498
    %v3500 = vsel %vm3494, %v3497, %v3499
    %v3501 = vsel %vm3493, %v3480, %v3483
    %v3502 = vsel %vm3496, %v3489, 920167782
    %v3503 = vsel %vm3495, %v3486, %v3502
    %v3504 = vsel %vm3494, %v3501, %v3503
    %v3505 = vsel %vm3493, %v3483, %v3486
    %v3506 = vsel %vm3496, %v3492, 1326507024
    %v3507 = vsel %vm3495, %v3489, %v3506
    %v3508 = vsel %vm3494, %v3505, %v3507
    %v3509 = vshll.u32 %v3469, 8
    %v3510 = vand.u32 %v3509, 65535
    %v3511 = vshrl.u32 %v3509, 16
    %v3512 = vand.u32 %v3508, 65535
    %v3513 = vshrl.u32 %v3508, 16
    %v3514 = vmul.u32 %v3510, %v3512
    %v3515 = vmul.u32 %v3510, %v3513
    %v3516 = vmul.u32 %v3511, %v3512
    %v3517 = vmul.u32 %v3511, %v3513
    %v3518 = vshll.u32 %v3515, 16
    %v3519 = vshrl.u32 %v3515, 16
    %v3520 = vshll.u32 %v3516, 16
    %v3521 = vshrl.u32 %v3516, 16
    %vm3522 = vc.u32 %v3514, %v3518
    %v3523 = vsel %vm3522, 1, 0
    %v3524 = vadd.s32 %v3514, %v3518
    %v3525 = vadd.s32 %v3517, %v3523
    %vm3526 = vc.u32 %v3524, %v3520
    %v3527 = vsel %vm3526, 1, 0
    %v3528 = vadd.s32 %v3524, %v3520
    %v3529 = vadd.s32 %v3525, %v3527
    %v3530 = vadd.s32 %v3529, %v3519
    %v3531 = vadd.s32 %v3530, %v3521
    %v3532 = vand.u32 %v3509, 65535
    %v3533 = vshrl.u32 %v3509, 16
    %v3534 = vand.u32 %v3504, 65535
    %v3535 = vshrl.u32 %v3504, 16
    %v3536 = vmul.u32 %v3532, %v3534
    %v3537 = vmul.u32 %v3532, %v3535
    %v3538 = vmul.u32 %v3533, %v3534
    %v3539 = vmul.u32 %v3533, %v3535
    %v3540 = vshll.u32 %v3537, 16
    %v3541 = vshrl.u32 %v3537, 16
    %v3542 = vshll.u32 %v3538, 16
    %v3543 = vshrl.u32 %v3538, 16
    %vm3544 = vc.u32 %v3536, %v3540
    %v3545 = vsel %vm3544, 1, 0
    %v3546 = vadd.s32 %v3536, %v3540
    %v3547 = vadd.s32 %v3539, %v3545
    %vm3548 = vc.u32 %v3546, %v3542
    %v3549 = vsel %vm3548, 1, 0
    %v3550 = vadd.s32 %v3546, %v3542
    %v3551 = vadd.s32 %v3547, %v3549
    %v3552 = vadd.s32 %v3551, %v3541
    %v3553 = vadd.s32 %v3552, %v3543
    %v3554 = vmul.u32 %v3509, %v3500
    %v3555 = vadd.s32 %v3531, %v3550
    %vm3556 = vc.u32 %v3531, %v3550
    %v3557 = vadd.s32 %v3553, 1
    %v3558 = vsel %vm3556, %v3557, %v3553
    %v3559 = vadd.s32 %v3554, %v3558
    %v3560 = vadd.s32 %v3559, 536870912
    %v3561 = vshrl.u32 %v3560, 30
    %v3562 = vshll.u32 %v3561, 30
    %v3563 = vsub.s32 %v3559, %v3562
    %vm3564 = vcmp.lt.s32.totalorder %v3563, 0
    %v3565 = vsub.s32 0, %v3563
    %v3566 = vsel %vm3564, %v3565, %v3563
    %v3567 = vclz %v3566
    %v3568 = vsub.s32 %v3567, 2
    %vm3569 = vcmp.gt.s32.totalorder 0, %v3568
    %v3570 = vsel %vm3569, 0, %v3568
    %v3571 = vsub.s32 32, %v3570
    %v3572 = vshll.u32 %v3563, %v3570
    %v3573 = vshrl.u32 %v3555, %v3571
    %v3574 = vor.u32 %v3572, %v3573
    %v3575 = vsub.s32 4294967266, %v3570
    %v3576 = vadd.s32 %v3575, 127
    %v3577 = vshll.u32 %v3576, 23
    %v3578 = vor.u32 4788187, %v3577
    %v3579 = vand.u32 2147483647, %v3578
    %v3581 = vcvt.s32.f32 %v3574
    %v3582 = vmul.f32 %v3581, %v3579
    %v3583 = vxor.u32 %v3582, 2147483648
    %v3584 = vsel %vm3463, %v3583, %v3582
    %v3585 = vsub.s32 4, %v3561
    %v3586 = vsel %vm3463, %v3585, %v3561
    %v3587 = vsel %vm3462, %v2684, %v3584
    %v3588 = vsel %vm3462, 0, %v3586
    %v3589 = vmul.f32 %v3587, %v3587
    %v3590 = vmul.f32 %v3589, -0.001358992
    %v3591 = vadd.f32 %v3590, 0.041655596
    %v3592 = vmul.f32 %v3589, %v3591
    %v3593 = vadd.f32 %v3592, -0.4999988
    %v3594 = vmul.f32 %v3589, %v3593
    %v3595 = vadd.f32 1.0, %v3594
    %v3596 = vmul.f32 %v3587, %v3587
    %v3597 = vmul.f32 %v3596, -0.00019511016
    %v3598 = vadd.f32 %v3597, 0.008332121
    %v3599 = vmul.f32 %v3596, %v3598
    %v3600 = vadd.f32 %v3599, -0.16666654
    %v3601 = vmul.f32 %v3596, %v3600
    %v3602 = vadd.f32 %v3601, 1.0
    %v3603 = vmul.f32 %v3602, %v3587
    %vm3604 = vweird.f32 %v2684
    %v3605 = vand.u32 %v3588, 3
    %vm3606 = vcmp.lt.s32.totalorder %v3605, 2
    %vm3607 = vcmp.eq.s32.totalorder %v3605, 0
    %v3608 = vxor.u32 %v3603, 2147483648
    %v3609 = vsel %vm3607, %v3595, %v3608
    %vm3610 = vcmp.eq.s32.totalorder %v3605, 2
    %v3611 = vxor.u32 %v3595, 2147483648
    %v3612 = vsel %vm3610, %v3611, %v3603
    %v3613 = vsel %vm3606, %v3609, %v3612
    %v3614 = vsel %vm3604, nan, %v3613
    %v3615 = vand.u32 2147483647, %v2685
    %vm3616 = vcmp.le.f32.partialorder %v3615, 0.7853982
    %vm3617 = vcmp.lt.s32.totalorder %v2685, 0
    %v3618 = vand.u32 %v2685, 2139095040
    %v3619 = vshrl.u32 %v3618, 23
    %v3620 = vsub.s32 %v3619, 127
    %v3621 = vand.u32 2147483647, %v2685
    %v3622 = vand.u32 %v3621, 8388607
    %v3623 = vor.u32 %v3622, 8388608
    %v3624 = vsub.s32 0, %v3623
    %v3625 = vadd.s32 %v3620, 1
    %vm3626 = vcmp.gt.s32.totalorder %v3625, 0
    %v3627 = vsel %vm3626, %v3625, 0
    %v3628 = vshrl.u32 %v3627, 5
    %v3629 = vand.u32 %v3627, 31
    %v3630 = vsub.s32 32, %v3629
    %v3631 = vshrl.u32 683565275, %v3630
    %v3632 = vshll.u32 683565275, %v3629
    %v3633 = vshrl.u32 2475754826, %v3630
    %v3634 = vor.u32 %v3632, %v3633
    %v3635 = vshll.u32 2475754826, %v3629
    %v3636 = vshrl.u32 2131351028, %v3630
    %v3637 = vor.u32 %v3635, %v3636
    %v3638 = vshll.u32 2131351028, %v3629
    %v3639 = vshrl.u32 2102212464, %v3630
    %v3640 = vor.u32 %v3638, %v3639
    %v3641 = vshll.u32 2102212464, %v3629
    %v3642 = vshrl.u32 920167782, %v3630
    %v3643 = vor.u32 %v3641, %v3642
    %v3644 = vshll.u32 920167782, %v3629
    %v3645 = vshrl.u32 1326507024, %v3630
    %v3646 = vor.u32 %v3644, %v3645
    %vm3647 = vcmp.lt.s32.totalorder %v3628, 1
    %vm3648 = vcmp.lt.s32.totalorder %v3628, 2
    %vm3649 = vcmp.lt.s32.totalorder %v3628, 3
    %vm3650 = vcmp.lt.s32.totalorder %v3628, 4
    %v3651 = vsel %vm3647, %v3631, %v3634
    %v3652 = vsel %vm3650, %v3640, 2102212464
    %v3653 = vsel %vm3649, %v3637, %v3652
    %v3654 = vsel %vm3648, %v3651, %v3653
    %v3655 = vsel %vm3647, %v3634, %v3637
    %v3656 = vsel %vm3650, %v3643, 920167782
    %v3657 = vsel %vm3649, %v3640, %v3656
    %v3658 = vsel %vm3648, %v3655, %v3657
    %v3659 = vsel %vm3647, %v3637, %v3640
    %v3660 = vsel %vm3650, %v3646, 1326507024
    %v3661 = vsel %vm3649, %v3643, %v3660
    %v3662 = vsel %vm3648, %v3659, %v3661
    %v3663 = vshll.u32 %v3623, 8
    %v3664 = vand.u32 %v3663, 65535
    %v3665 = vshrl.u32 %v3663, 16
    %v3666 = vand.u32 %v3662, 65535
    %v3667 = vshrl.u32 %v3662, 16
    %v3668 = vmul.u32 %v3664, %v3666
    %v3669 = vmul.u32 %v3664, %v3667
    %v3670 = vmul.u32 %v3665, %v3666
    %v3671 = vmul.u32 %v3665, %v3667
    %v3672 = vshll.u32 %v3669, 16
    %v3673 = vshrl.u32 %v3669, 16
    %v3674 = vshll.u32 %v3670, 16
    %v3675 = vshrl.u32 %v3670, 16
    %vm3676 = vc.u32 %v3668, %v3672
    %v3677 = vsel %vm3676, 1, 0
    %v3678 = vadd.s32 %v3668, %v3672
    %v3679 = vadd.s32 %v3671, %v3677
    %vm3680 = vc.u32 %v3678, %v3674
    %v3681 = vsel %vm3680, 1, 0
    %v3682 = vadd.s32 %v3678, %v3674
    %v3683 = vadd.s32 %v3679, %v3681
    %v3684 = vadd.s32 %v3683, %v3673
    %v3685 = vadd.s32 %v3684, %v3675
    %v3686 = vand.u32 %v3663, 65535
    %v3687 = vshrl.u32 %v3663, 16
    %v3688 = vand.u32 %v3658, 65535
    %v3689 = vshrl.u32 %v3658, 16
    %v3690 = vmul.u32 %v3686, %v3688
    %v3691 = vmul.u32 %v3686, %v3689
    %v3692 = vmul.u32 %v3687, %v3688
    %v3693 = vmul.u32 %v3687, %v3689
    %v3694 = vshll.u32 %v3691, 16
    %v3695 = vshrl.u32 %v3691, 16
    %v3696 = vshll.u32 %v3692, 16
    %v3697 = vshrl.u32 %v3692, 16
    %vm3698 = vc.u32 %v3690, %v3694
    %v3699 = vsel %vm3698, 1, 0
    %v3700 = vadd.s32 %v3690, %v3694
    %v3701 = vadd.s32 %v3693, %v3699
    %vm3702 = vc.u32 %v3700, %v3696
    %v3703 = vsel %vm3702, 1, 0
    %v3704 = vadd.s32 %v3700, %v3696
    %v3705 = vadd.s32 %v3701, %v3703
    %v3706 = vadd.s32 %v3705, %v3695
    %v3707 = vadd.s32 %v3706, %v3697
    %v3708 = vmul.u32 %v3663, %v3654
    %v3709 = vadd.s32 %v3685, %v3704
    %vm3710 = vc.u32 %v3685, %v3704
    %v3711 = vadd.s32 %v3707, 1
    %v3712 = vsel %vm3710, %v3711, %v3707
    %v3713 = vadd.s32 %v3708, %v3712
    %v3714 = vadd.s32 %v3713, 536870912
    %v3715 = vshrl.u32 %v3714, 30
    %v3716 = vshll.u32 %v3715, 30
    %v3717 = vsub.s32 %v3713, %v3716
    %vm3718 = vcmp.lt.s32.totalorder %v3717, 0
    %v3719 = vsub.s32 0, %v3717
    %v3720 = vsel %vm3718, %v3719, %v3717
    %v3721 = vclz %v3720
    %v3722 = vsub.s32 %v3721, 2
    %vm3723 = vcmp.gt.s32.totalorder 0, %v3722
    %v3724 = vsel %vm3723, 0, %v3722
    %v3725 = vsub.s32 32, %v3724
    %v3726 = vshll.u32 %v3717, %v3724
    %v3727 = vshrl.u32 %v3709, %v3725
    %v3728 = vor.u32 %v3726, %v3727
    %v3729 = vsub.s32 4294967266, %v3724
    %v3730 = vadd.s32 %v3729, 127
    %v3731 = vshll.u32 %v3730, 23
    %v3732 = vor.u32 4788187, %v3731
    %v3733 = vand.u32 2147483647, %v3732
    %v3735 = vcvt.s32.f32 %v3728
    %v3736 = vmul.f32 %v3735, %v3733
    %v3737 = vxor.u32 %v3736, 2147483648
    %v3738 = vsel %vm3617, %v3737, %v3736
    %v3739 = vsub.s32 4, %v3715
    %v3740 = vsel %vm3617, %v3739, %v3715
    %v3741 = vsel %vm3616, %v2685, %v3738
    %v3742 = vsel %vm3616, 0, %v3740
    %v3743 = vmul.f32 %v3741, %v3741
    %v3744 = vmul.f32 %v3743, -0.001358992
    %v3745 = vadd.f32 %v3744, 0.041655596
    %v3746 = vmul.f32 %v3743, %v3745
    %v3747 = vadd.f32 %v3746, -0.4999988
    %v3748 = vmul.f32 %v3743, %v3747
    %v3749 = vadd.f32 1.0, %v3748
    %v3750 = vmul.f32 %v3741, %v3741
    %v3751 = vmul.f32 %v3750, -0.00019511016
    %v3752 = vadd.f32 %v3751, 0.008332121
    %v3753 = vmul.f32 %v3750, %v3752
    %v3754 = vadd.f32 %v3753, -0.16666654
    %v3755 = vmul.f32 %v3750, %v3754
    %v3756 = vadd.f32 %v3755, 1.0
    %v3757 = vmul.f32 %v3756, %v3741
    %vm3758 = vweird.f32 %v2685
    %v3759 = vand.u32 %v3742, 3
    %vm3760 = vcmp.lt.s32.totalorder %v3759, 2
    %vm3761 = vcmp.eq.s32.totalorder %v3759, 0
    %v3762 = vxor.u32 %v3757, 2147483648
    %v3763 = vsel %vm3761, %v3749, %v3762
    %vm3764 = vcmp.eq.s32.totalorder %v3759, 2
    %v3765 = vxor.u32 %v3749, 2147483648
    %v3766 = vsel %vm3764, %v3765, %v3757
    %v3767 = vsel %vm3760, %v3763, %v3766
    %v3768 = vsel %vm3758, nan, %v3767
    %v3769 = vand.u32 2147483647, %v2686
    %vm3770 = vcmp.le.f32.partialorder %v3769, 0.7853982
    %vm3771 = vcmp.lt.s32.totalorder %v2686, 0
    %v3772 = vand.u32 %v2686, 2139095040
    %v3773 = vshrl.u32 %v3772, 23
    %v3774 = vsub.s32 %v3773, 127
    %v3775 = vand.u32 2147483647, %v2686
    %v3776 = vand.u32 %v3775, 8388607
    %v3777 = vor.u32 %v3776, 8388608
    %v3778 = vsub.s32 0, %v3777
    %v3779 = vadd.s32 %v3774, 1
    %vm3780 = vcmp.gt.s32.totalorder %v3779, 0
    %v3781 = vsel %vm3780, %v3779, 0
    %v3782 = vshrl.u32 %v3781, 5
    %v3783 = vand.u32 %v3781, 31
    %v3784 = vsub.s32 32, %v3783
    %v3785 = vshrl.u32 683565275, %v3784
    %v3786 = vshll.u32 683565275, %v3783
    %v3787 = vshrl.u32 2475754826, %v3784
    %v3788 = vor.u32 %v3786, %v3787
    %v3789 = vshll.u32 2475754826, %v3783
    %v3790 = vshrl.u32 2131351028, %v3784
    %v3791 = vor.u32 %v3789, %v3790
    %v3792 = vshll.u32 2131351028, %v3783
    %v3793 = vshrl.u32 2102212464, %v3784
    %v3794 = vor.u32 %v3792, %v3793
    %v3795 = vshll.u32 2102212464, %v3783
    %v3796 = vshrl.u32 920167782, %v3784
    %v3797 = vor.u32 %v3795, %v3796
    %v3798 = vshll.u32 920167782, %v3783
    %v3799 = vshrl.u32 1326507024, %v3784
    %v3800 = vor.u32 %v3798, %v3799
    %vm3801 = vcmp.lt.s32.totalorder %v3782, 1
    %vm3802 = vcmp.lt.s32.totalorder %v3782, 2
    %vm3803 = vcmp.lt.s32.totalorder %v3782, 3
    %vm3804 = vcmp.lt.s32.totalorder %v3782, 4
    %v3805 = vsel %vm3801, %v3785, %v3788
    %v3806 = vsel %vm3804, %v3794, 2102212464
    %v3807 = vsel %vm3803, %v3791, %v3806
    %v3808 = vsel %vm3802, %v3805, %v3807
    %v3809 = vsel %vm3801, %v3788, %v3791
    %v3810 = vsel %vm3804, %v3797, 920167782
    %v3811 = vsel %vm3803, %v3794, %v3810
    %v3812 = vsel %vm3802, %v3809, %v3811
    %v3813 = vsel %vm3801, %v3791, %v3794
    %v3814 = vsel %vm3804, %v3800, 1326507024
    %v3815 = vsel %vm3803, %v3797, %v3814
    %v3816 = vsel %vm3802, %v3813, %v3815
    %v3817 = vshll.u32 %v3777, 8
    %v3818 = vand.u32 %v3817, 65535
    %v3819 = vshrl.u32 %v3817, 16
    %v3820 = vand.u32 %v3816, 65535
    %v3821 = vshrl.u32 %v3816, 16
    %v3822 = vmul.u32 %v3818, %v3820
    %v3823 = vmul.u32 %v3818, %v3821
    %v3824 = vmul.u32 %v3819, %v3820
    %v3825 = vmul.u32 %v3819, %v3821
    %v3826 = vshll.u32 %v3823, 16
    %v3827 = vshrl.u32 %v3823, 16
    %v3828 = vshll.u32 %v3824, 16
    %v3829 = vshrl.u32 %v3824, 16
    %vm3830 = vc.u32 %v3822, %v3826
    %v3831 = vsel %vm3830, 1, 0
    %v3832 = vadd.s32 %v3822, %v3826
    %v3833 = vadd.s32 %v3825, %v3831
    %vm3834 = vc.u32 %v3832, %v3828
    %v3835 = vsel %vm3834, 1, 0
    %v3836 = vadd.s32 %v3832, %v3828
    %v3837 = vadd.s32 %v3833, %v3835
    %v3838 = vadd.s32 %v3837, %v3827
    %v3839 = vadd.s32 %v3838, %v3829
    %v3840 = vand.u32 %v3817, 65535
    %v3841 = vshrl.u32 %v3817, 16
    %v3842 = vand.u32 %v3812, 65535
    %v3843 = vshrl.u32 %v3812, 16
    %v3844 = vmul.u32 %v3840, %v3842
    %v3845 = vmul.u32 %v3840, %v3843
    %v3846 = vmul.u32 %v3841, %v3842
    %v3847 = vmul.u32 %v3841, %v3843
    %v3848 = vshll.u32 %v3845, 16
    %v3849 = vshrl.u32 %v3845, 16
    %v3850 = vshll.u32 %v3846, 16
    %v3851 = vshrl.u32 %v3846, 16
    %vm3852 = vc.u32 %v3844, %v3848
    %v3853 = vsel %vm3852, 1, 0
    %v3854 = vadd.s32 %v3844, %v3848
    %v3855 = vadd.s32 %v3847, %v3853
    %vm3856 = vc.u32 %v3854, %v3850
    %v3857 = vsel %vm3856, 1, 0
    %v3858 = vadd.s32 %v3854, %v3850
    %v3859 = vadd.s32 %v3855, %v3857
    %v3860 = vadd.s32 %v3859, %v3849
    %v3861 = vadd.s32 %v3860, %v3851
    %v3862 = vmul.u32 %v3817, %v3808
    %v3863 = vadd.s32 %v3839, %v3858
    %vm3864 = vc.u32 %v3839, %v3858
    %v3865 = vadd.s32 %v3861, 1
    %v3866 = vsel %vm3864, %v3865, %v3861
    %v3867 = vadd.s32 %v3862, %v3866
    %v3868 = vadd.s32 %v3867, 536870912
    %v3869 = vshrl.u32 %v3868, 30
    %v3870 = vshll.u32 %v3869, 30
    %v3871 = vsub.s32 %v3867, %v3870
    %vm3872 = vcmp.lt.s32.totalorder %v3871, 0
    %v3873 = vsub.s32 0, %v3871
    %v3874 = vsel %vm3872, %v3873, %v3871
    %v3875 = vclz %v3874
    %v3876 = vsub.s32 %v3875, 2
    %vm3877 = vcmp.gt.s32.totalorder 0, %v3876
    %v3878 = vsel %vm3877, 0, %v3876
    %v3879 = vsub.s32 32, %v3878
    %v3880 = vshll.u32 %v3871, %v3878
    %v3881 = vshrl.u32 %v3863, %v3879
    %v3882 = vor.u32 %v3880, %v3881
    %v3883 = vsub.s32 4294967266, %v3878
    %v3884 = vadd.s32 %v3883, 127
    %v3885 = vshll.u32 %v3884, 23
    %v3886 = vor.u32 4788187, %v3885
    %v3887 = vand.u32 2147483647, %v3886
    %v3889 = vcvt.s32.f32 %v3882
    %v3890 = vmul.f32 %v3889, %v3887
    %v3891 = vxor.u32 %v3890, 2147483648
    %v3892 = vsel %vm3771, %v3891, %v3890
    %v3893 = vsub.s32 4, %v3869
    %v3894 = vsel %vm3771, %v3893, %v3869
    %v3895 = vsel %vm3770, %v2686, %v3892
    %v3896 = vsel %vm3770, 0, %v3894
    %v3897 = vmul.f32 %v3895, %v3895
    %v3898 = vmul.f32 %v3897, -0.001358992
    %v3899 = vadd.f32 %v3898, 0.041655596
    %v3900 = vmul.f32 %v3897, %v3899
    %v3901 = vadd.f32 %v3900, -0.4999988
    %v3902 = vmul.f32 %v3897, %v3901
    %v3903 = vadd.f32 1.0, %v3902
    %v3904 = vmul.f32 %v3895, %v3895
    %v3905 = vmul.f32 %v3904, -0.00019511016
    %v3906 = vadd.f32 %v3905, 0.008332121
    %v3907 = vmul.f32 %v3904, %v3906
    %v3908 = vadd.f32 %v3907, -0.16666654
    %v3909 = vmul.f32 %v3904, %v3908
    %v3910 = vadd.f32 %v3909, 1.0
    %v3911 = vmul.f32 %v3910, %v3895
    %vm3912 = vweird.f32 %v2686
    %v3913 = vand.u32 %v3896, 3
    %vm3914 = vcmp.lt.s32.totalorder %v3913, 2
    %vm3915 = vcmp.eq.s32.totalorder %v3913, 0
    %v3916 = vxor.u32 %v3911, 2147483648
    %v3917 = vsel %vm3915, %v3903, %v3916
    %vm3918 = vcmp.eq.s32.totalorder %v3913, 2
    %v3919 = vxor.u32 %v3903, 2147483648
    %v3920 = vsel %vm3918, %v3919, %v3911
    %v3921 = vsel %vm3914, %v3917, %v3920
    %v3922 = vsel %vm3912, nan, %v3921
    %s3923 = scalar_lea.vmem [#allocation5], 544
    %3924 = vst [vmem:[%s3923] sm:$0xff] %v2841
    %3925 = vst [vmem:[%s3923 + $0x8] sm:$0xff] %v2996
    %3926 = vst [vmem:[%s3923 + $0x10] sm:$0xff] %v3151
    %3927 = vst [vmem:[%s3923 + $0x18] sm:$0xff] %v3306
    %s3928 = scalar_lea.vmem [#allocation5], 576
    %3929 = vst [vmem:[%s3928] sm:$0xff] %v3460
    %3930 = vst [vmem:[%s3928 + $0x8] sm:$0xff] %v3614
    %3931 = vst [vmem:[%s3928 + $0x10] sm:$0xff] %v3768
    %3932 = vst [vmem:[%s3928 + $0x18] sm:$0xff] %v3922
    %v3933 = vmul.f32 %v2841, 2.0
    %v3934 = vmul.f32 %v2996, 2.0
    %v3935 = vmul.f32 %v3151, 2.0
    %v3936 = vmul.f32 %v3306, 2.0
    %v3937 = vmul.f32 %v3933, %v3460
    %v3938 = vmul.f32 %v3934, %v3614
    %v3939 = vmul.f32 %v3935, %v3768
    %v3940 = vmul.f32 %v3936, %v3922
    %v3941 = vmul.f32 %v3933, %v2841
    %v3942 = vmul.f32 %v3934, %v2996
    %v3943 = vmul.f32 %v3935, %v3151
    %v3944 = vmul.f32 %v3936, %v3306
    %v3945 = vsub.f32 1.0, %v3941
    %v3946 = vsub.f32 1.0, %v3942
    %v3947 = vsub.f32 1.0, %v3943
    %v3948 = vsub.f32 1.0, %v3944
    %s3949 = scalar_lea.vmem [#allocation5], 608
    %3950 = vst [vmem:[%s3949] sm:$0xff] %v3937
    %3951 = vst [vmem:[%s3949 + $0x8] sm:$0xff] %v3938
    %3952 = vst [vmem:[%s3949 + $0x10] sm:$0xff] %v3939
    %3953 = vst [vmem:[%s3949 + $0x18] sm:$0xff] %v3940
    %s3954 = scalar_lea.vmem [#allocation5], 640
    %3955 = vst [vmem:[%s3954] sm:$0xff] %v3945
    %3956 = vst [vmem:[%s3954 + $0x8] sm:$0xff] %v3946
    %3957 = vst [vmem:[%s3954 + $0x10] sm:$0xff] %v3947
    %3958 = vst [vmem:[%s3954 + $0x18] sm:$0xff] %v3948
    // Predicated region
    $region10: #{tpu_custom_call.1} parent=1 // pred_check
      _
    $region11: #{tpu_custom_call.1} parent=1 // pred_check_branch
      %3960 = sbr.rel (0) target = $region13
    $region12: #{tpu_custom_call.1} parent=1 // pred_region
      %3962 = vsyncadd [#allocation4], 0
      %s3963 = sshll.u32 [#allocation5], 4
      %s3964 = int_to_ptr.vmem [resolvable:$true] %s3963
      %s3965 = sshll.u32 %s1, 4
      %s3966 = int_to_ptr.hbm [resolvable:$true] %s3965
      %3971 = dma.vmem_to_hbm [thread:$0]  %s3964, 10752, %s3966, [#allocation4], 512, 512, 32
    $region13: #{tpu_custom_call.1} parent=1 // pred_fallthru
      _
    // Predicated region
    $region14: #{tpu_custom_call.1} parent=1 // pred_check
      _
    $region15: #{tpu_custom_call.1} parent=1 // pred_check_branch
      %3973 = sbr.rel (0) target = $region17
    $region16: #{tpu_custom_call.1} parent=1 // pred_region
      %3975 = dma.done [#allocation4], 10752
    $region17: #{tpu_custom_call.1} parent=1 // pred_fallthru
      _
    %3976 = vsyncpa [#allocation3], 1
    %3977 = vsyncpa [#allocation4], 1

</llo_original>
